<compile_context>
chip_gen: v7x
topology: tpu7x:2x2x1
jax: 0.10.0
libtpu: 0.0.40
codegen_flags: <defaults>
</compile_context>

<pallas_src>
import jax
import jax.numpy as jnp
import numpy as np
from jax.experimental import pallas as pl
from jax.experimental.pallas import tpu as pltpu


# ----------------------------- in-kernel math helpers -----------------------------

def _gelu(x):
    # tanh-approximate GELU (EUP tanh); matches exact GELU to ~3e-3 abs.
    c = 0.7978845608028654
    return 0.5 * x * (1.0 + jnp.tanh(c * (x + 0.044715 * x * x * x)))


def _l2norm_rows(x):
    # torch.nn.functional.normalize(p=2, dim=-1, eps=1e-12)
    n = jnp.sqrt(jnp.sum(x * x, axis=-1, keepdims=True))
    return x / jnp.maximum(n, 1e-12)


# ----------------------------------- kernel ---------------------------------------

def _make_kernel(H, W, C, B_BLK):
    N = H * W
    M = B_BLK * N
    scale = float(C) ** -0.5  # token_dim ** -0.5, token_dim == dim

    def kernel(xpad_ref,
               dw_w_ref, dw_b_ref, bn1s_ref, bn1b_ref,
               pw1w_ref, pw1b_ref, pw2w_ref, pw2b_ref, lsl_ref,
               wqk_ref, bqk_ref, wg_ref,
               wp_ref, bp_ref, wf_ref, bf_ref, ls1_ref,
               bn2s_ref, bn2b_ref, fc1w_ref, fc1b_ref,
               fc2w_ref, fc2b_ref, ls2_ref,
               out_ref):

        def mm(a, w_ref):
            # bf16 MXU matmul, f32 accumulation
            return jnp.dot(a.astype(jnp.bfloat16), w_ref[...],
                           preferred_element_type=jnp.float32)

        # ---- SwiftFormerLocalRepresentation: depthwise 3x3 conv ----
        # Ref-level tap loads (no padded register copy, no 9x value slicing).
        def tap(kh, kw):
            return xpad_ref[:, kh:kh + H, kw:kw + W, :].reshape(M, C)

        dw = dw_w_ref[...]                      # [9, C] f32
        acc = tap(0, 0) * dw[0:1, :]            # seed with first tap (no zero-fill)
        for idx in range(1, 9):
            kh, kw = divmod(idx, 3)
            acc = acc + tap(kh, kw) * dw[idx:idx + 1, :]

        x_in = tap(1, 1)                        # interior pixels = residual input

        # folded BatchNorm2d (inference) + pointwise convs + GELU
        y = acc + dw_b_ref[...]
        y = y * bn1s_ref[...] + bn1b_ref[...]
        y = _gelu(mm(y, pw1w_ref) + pw1b_ref[...])
        y = mm(y, pw2w_ref) + pw2b_ref[...]
        x_loc = x_in + lsl_ref[...] * y         # [M, C]

        # ---- EfficientAdditiveAttention (per-image reductions over N tokens) ----
        qk = mm(x_loc, wqk_ref) + bqk_ref[...]  # fused q|k projection, [M, 2C]
        q = _l2norm_rows(qk[:, :C])
        k = _l2norm_rows(qk[:, C:])

        qw = jnp.sum(q * wg_ref[...], axis=-1, keepdims=True) * scale    # [M, 1]
        qwb = jnp.broadcast_to(qw, (M, C)).reshape(B_BLK, N, C)
        q3 = q.reshape(B_BLK, N, C)
        nrm = jnp.sqrt(jnp.sum(qwb * qwb, axis=1, keepdims=True))        # [B_BLK,1,C]
        A3 = qwb / jnp.maximum(nrm, 1e-12)      # normalize over tokens (dim=1)
        G3 = jnp.sum(A3 * q3, axis=1, keepdims=True)                     # [B_BLK,1,C]
        Gk = jnp.broadcast_to(G3, (B_BLK, N, C)).reshape(M, C) * k

        o = mm(Gk, wp_ref) + bp_ref[...] + q
        o = mm(o, wf_ref) + bf_ref[...]
        x_att = x_loc + ls1_ref[...] * o

        # ---- Mlp: folded BN + 1x1 conv -> GELU -> 1x1 conv ----
        m = x_att * bn2s_ref[...] + bn2b_ref[...]
        m = _gelu(mm(m, fc1w_ref) + fc1b_ref[...])
        m = mm(m, fc2w_ref) + fc2b_ref[...]
        x_out = x_att + ls2_ref[...] * m

        out_ref[...] = x_out.reshape(B_BLK, N, C).astype(out_ref.dtype)

    return kernel


# ------------------------------------ wrapper --------------------------------------

def swiftformer_encoder(x_nchw, params, *, batch_block=2):
    """x_nchw: [B, C, H, W] float32 -> [B, C, H, W] float32."""
    B, C, H, W = x_nchw.shape
    N = H * W
    assert B % batch_block == 0, "batch must be divisible by batch_block"

    x = jnp.transpose(x_nchw, (0, 2, 3, 1))                  # NHWC
    xpad = jnp.pad(x, ((0, 0), (1, 1), (1, 1), (0, 0)))      # halo for 3x3 dwconv

    bf16 = jnp.bfloat16
    wqk = jnp.concatenate([params["wq"], params["wk"]], axis=1).astype(bf16)
    bqk = jnp.concatenate([params["bq"], params["bk"]], axis=1)
    weights = [
        params["dw_w"], params["dw_b"], params["bn1_s"], params["bn1_b"],
        params["pw1_w"].astype(bf16), params["pw1_b"],
        params["pw2_w"].astype(bf16), params["pw2_b"], params["ls_local"],
        wqk, bqk, params["w_g"],
        params["wp"].astype(bf16), params["bp"],
        params["wf"].astype(bf16), params["bf"], params["ls1"],
        params["bn2_s"], params["bn2_b"],
        params["fc1_w"].astype(bf16), params["fc1_b"],
        params["fc2_w"].astype(bf16), params["fc2_b"], params["ls2"],
    ]

    kernel = _make_kernel(H, W, C, batch_block)

    def wspec(a):
        nd = a.ndim
        return pl.BlockSpec(a.shape, lambda g, _nd=nd: (0,) * _nd)

    in_specs = [pl.BlockSpec((batch_block, H + 2, W + 2, C), lambda g: (g, 0, 0, 0))]
    in_specs += [wspec(w) for w in weights]

    out = pl.pallas_call(
        kernel,
        out_shape=jax.ShapeDtypeStruct((B, N, C), x.dtype),
        grid=(B // batch_block,),
        in_specs=in_specs,
        out_specs=pl.BlockSpec((batch_block, N, C), lambda g: (g, 0, 0)),
        compiler_params=pltpu.CompilerParams(dimension_semantics=("parallel",)),
    )(xpad, *weights)

    out = out.reshape(B, H, W, C)
    return jnp.transpose(out, (0, 3, 1, 2))                  # back to NCHW


# -------------------------- deterministic parameter init --------------------------

def init_params(key, dim, mlp_ratio=4.0):
    hidden = int(dim * mlp_ratio)
    keys = iter(jax.random.split(key, 40))   # 27 draws needed; headroom avoids StopIteration

    def nrm(shape, std=0.05):
        return (std * jax.random.normal(next(keys), shape)).astype(jnp.float32)

    def fold_bn(c):
        gamma = 1.0 + 0.1 * jax.random.normal(next(keys), (c,))
        beta = 0.1 * jax.random.normal(next(keys), (c,))
        mean = 0.1 * jax.random.normal(next(keys), (c,))
        var = 1.0 + 0.1 * jnp.abs(jax.random.normal(next(keys), (c,)))
        s = gamma / jnp.sqrt(var + 1e-5)
        t = beta - mean * s
        return s.reshape(1, c).astype(jnp.float32), t.reshape(1, c).astype(jnp.float32)

    p = {}
    p["dw_w"] = nrm((9, dim), 0.1)             # depthwise 3x3 weight, [kh*kw, C]
    p["dw_b"] = nrm((1, dim), 0.02)
    p["bn1_s"], p["bn1_b"] = fold_bn(dim)
    p["pw1_w"] = nrm((dim, dim));  p["pw1_b"] = nrm((1, dim), 0.02)
    p["pw2_w"] = nrm((dim, dim));  p["pw2_b"] = nrm((1, dim), 0.02)
    p["ls_local"] = jnp.ones((1, dim), jnp.float32)          # module default: ones
    p["wq"] = nrm((dim, dim));  p["bq"] = nrm((1, dim), 0.02)
    p["wk"] = nrm((dim, dim));  p["bk"] = nrm((1, dim), 0.02)
    p["w_g"] = nrm((1, dim), 1.0)                            # torch.randn(dim, 1)
    p["wp"] = nrm((dim, dim));  p["bp"] = nrm((1, dim), 0.02)
    p["wf"] = nrm((dim, dim));  p["bf"] = nrm((1, dim), 0.02)
    # layer scales: nontrivial deterministic values to exercise both residual branches
    p["ls1"] = jnp.full((1, dim), 0.1, jnp.float32)
    p["ls2"] = jnp.full((1, dim), 0.1, jnp.float32)
    p["bn2_s"], p["bn2_b"] = fold_bn(dim)
    p["fc1_w"] = nrm((dim, hidden)); p["fc1_b"] = nrm((1, hidden), 0.02)
    p["fc2_w"] = nrm((hidden, dim)); p["fc2_b"] = nrm((1, dim), 0.02)
    return p


# --------------------------------- plain-JAX reference ----------------------------

def reference(x_nchw, params):
    x = jnp.transpose(x_nchw, (0, 2, 3, 1))
    B, H, W, C = x.shape
    N = H * W
    xpad = jnp.pad(x, ((0, 0), (1, 1), (1, 1), (0, 0)))
    dw = params["dw_w"].reshape(3, 3, C)
    acc = jnp.zeros_like(x)
    for kh in range(3):
        for kw in range(3):
            acc = acc + xpad[:, kh:kh + H, kw:kw + W, :] * dw[kh, kw]
    xin = x.reshape(B, N, C)
    y = acc.reshape(B, N, C) + params["dw_b"]
    y = y * params["bn1_s"] + params["bn1_b"]
    y = jax.nn.gelu(y @ params["pw1_w"] + params["pw1_b"], approximate=False)
    y = y @ params["pw2_w"] + params["pw2_b"]
    xloc = xin + params["ls_local"] * y
    q = xloc @ params["wq"] + params["bq"]
    k = xloc @ params["wk"] + params["bk"]
    q = q / jnp.maximum(jnp.linalg.norm(q, axis=-1, keepdims=True), 1e-12)
    k = k / jnp.maximum(jnp.linalg.norm(k, axis=-1, keepdims=True), 1e-12)
    qw = jnp.sum(q * params["w_g"], -1, keepdims=True) * (C ** -0.5)
    A = qw / jnp.maximum(jnp.linalg.norm(qw, axis=1, keepdims=True), 1e-12)
    G = jnp.sum(A * q, axis=1, keepdims=True)
    o = (G * k) @ params["wp"] + params["bp"] + q
    o = o @ params["wf"] + params["bf"]
    xatt = xloc + params["ls1"] * o
    m = xatt * params["bn2_s"] + params["bn2_b"]
    m = jax.nn.gelu(m @ params["fc1_w"] + params["fc1_b"], approximate=False)
    m = m @ params["fc2_w"] + params["fc2_b"]
    xout = xatt + params["ls2"] * m
    return jnp.transpose(xout.reshape(B, H, W, C), (0, 3, 1, 2))


# --------------------------------------- main --------------------------------------

if __name__ == "__main__":
    key = jax.random.PRNGKey(0)
    # C=128 -> lane-dense; B=4 with batch_block=2 -> 2 parallel grid steps, M=128 rows.
    B, dim, H, W = 4, 128, 8, 8
    kx, kp = jax.random.split(key)
    x = jax.random.normal(kx, (B, dim, H, W), jnp.float32)   # NCHW, like the torch module
    params = init_params(kp, dim, mlp_ratio=4.0)

    out = swiftformer_encoder(x, params, batch_block=2)
    out = jax.block_until_ready(out)
    assert out.shape == (B, dim, H, W)

    ref = reference(x, params)
    # tolerance accounts for bf16 MXU operands + tanh-approx GELU in the kernel
    np.testing.assert_allclose(np.asarray(out), np.asarray(ref), atol=2e-2, rtol=2e-2)
    print("KERNEL_OK")
</pallas_src>

<mosaic_0001>
module attributes {stable_mosaic.version = 11 : i64} {
  func.func @kernel(%arg0: i32, %arg1: memref<2x10x10x128xf32, #tpu.memory_space<vmem>>, %arg2: memref<9x128xf32, #tpu.memory_space<vmem>>, %arg3: memref<1x128xf32, #tpu.memory_space<vmem>>, %arg4: memref<1x128xf32, #tpu.memory_space<vmem>>, %arg5: memref<1x128xf32, #tpu.memory_space<vmem>>, %arg6: memref<128x128xbf16, #tpu.memory_space<vmem>>, %arg7: memref<1x128xf32, #tpu.memory_space<vmem>>, %arg8: memref<128x128xbf16, #tpu.memory_space<vmem>>, %arg9: memref<1x128xf32, #tpu.memory_space<vmem>>, %arg10: memref<1x128xf32, #tpu.memory_space<vmem>>, %arg11: memref<128x256xbf16, #tpu.memory_space<vmem>>, %arg12: memref<1x256xf32, #tpu.memory_space<vmem>>, %arg13: memref<1x128xf32, #tpu.memory_space<vmem>>, %arg14: memref<128x128xbf16, #tpu.memory_space<vmem>>, %arg15: memref<1x128xf32, #tpu.memory_space<vmem>>, %arg16: memref<128x128xbf16, #tpu.memory_space<vmem>>, %arg17: memref<1x128xf32, #tpu.memory_space<vmem>>, %arg18: memref<1x128xf32, #tpu.memory_space<vmem>>, %arg19: memref<1x128xf32, #tpu.memory_space<vmem>>, %arg20: memref<1x128xf32, #tpu.memory_space<vmem>>, %arg21: memref<128x512xbf16, #tpu.memory_space<vmem>>, %arg22: memref<1x512xf32, #tpu.memory_space<vmem>>, %arg23: memref<512x128xbf16, #tpu.memory_space<vmem>>, %arg24: memref<1x128xf32, #tpu.memory_space<vmem>>, %arg25: memref<1x128xf32, #tpu.memory_space<vmem>>, %arg26: memref<2x64x128xf32, #tpu.memory_space<vmem>>) attributes {dimension_semantics = [#tpu.dimension_semantics<parallel>], iteration_bounds = array<i64: 2>, scalar_prefetch = 0 : i64, scratch_operands = 0 : i64, tpu.core_type = #tpu.core_type<tc>, window_params = [{transform_indices = @transform_0, window_bounds = array<i64: 2, 10, 10, 128>}, {pipeline_mode = #tpu.pipeline_mode<synchronous>, transform_indices = @transform_1, window_bounds = array<i64: 9, 128>}, {pipeline_mode = #tpu.pipeline_mode<synchronous>, transform_indices = @transform_2, window_bounds = array<i64: 1, 128>}, {pipeline_mode = #tpu.pipeline_mode<synchronous>, transform_indices = @transform_3, window_bounds = array<i64: 1, 128>}, {pipeline_mode = #tpu.pipeline_mode<synchronous>, transform_indices = @transform_4, window_bounds = array<i64: 1, 128>}, {pipeline_mode = #tpu.pipeline_mode<synchronous>, transform_indices = @transform_5, window_bounds = array<i64: 128, 128>}, {pipeline_mode = #tpu.pipeline_mode<synchronous>, transform_indices = @transform_6, window_bounds = array<i64: 1, 128>}, {pipeline_mode = #tpu.pipeline_mode<synchronous>, transform_indices = @transform_7, window_bounds = array<i64: 128, 128>}, {pipeline_mode = #tpu.pipeline_mode<synchronous>, transform_indices = @transform_8, window_bounds = array<i64: 1, 128>}, {pipeline_mode = #tpu.pipeline_mode<synchronous>, transform_indices = @transform_9, window_bounds = array<i64: 1, 128>}, {pipeline_mode = #tpu.pipeline_mode<synchronous>, transform_indices = @transform_10, window_bounds = array<i64: 128, 256>}, {pipeline_mode = #tpu.pipeline_mode<synchronous>, transform_indices = @transform_11, window_bounds = array<i64: 1, 256>}, {pipeline_mode = #tpu.pipeline_mode<synchronous>, transform_indices = @transform_12, window_bounds = array<i64: 1, 128>}, {pipeline_mode = #tpu.pipeline_mode<synchronous>, transform_indices = @transform_13, window_bounds = array<i64: 128, 128>}, {pipeline_mode = #tpu.pipeline_mode<synchronous>, transform_indices = @transform_14, window_bounds = array<i64: 1, 128>}, {pipeline_mode = #tpu.pipeline_mode<synchronous>, transform_indices = @transform_15, window_bounds = array<i64: 128, 128>}, {pipeline_mode = #tpu.pipeline_mode<synchronous>, transform_indices = @transform_16, window_bounds = array<i64: 1, 128>}, {pipeline_mode = #tpu.pipeline_mode<synchronous>, transform_indices = @transform_17, window_bounds = array<i64: 1, 128>}, {pipeline_mode = #tpu.pipeline_mode<synchronous>, transform_indices = @transform_18, window_bounds = array<i64: 1, 128>}, {pipeline_mode = #tpu.pipeline_mode<synchronous>, transform_indices = @transform_19, window_bounds = array<i64: 1, 128>}, {pipeline_mode = #tpu.pipeline_mode<synchronous>, transform_indices = @transform_20, window_bounds = array<i64: 128, 512>}, {pipeline_mode = #tpu.pipeline_mode<synchronous>, transform_indices = @transform_21, window_bounds = array<i64: 1, 512>}, {pipeline_mode = #tpu.pipeline_mode<synchronous>, transform_indices = @transform_22, window_bounds = array<i64: 512, 128>}, {pipeline_mode = #tpu.pipeline_mode<synchronous>, transform_indices = @transform_23, window_bounds = array<i64: 1, 128>}, {pipeline_mode = #tpu.pipeline_mode<synchronous>, transform_indices = @transform_24, window_bounds = array<i64: 1, 128>}, {transform_indices = @transform_25, window_bounds = array<i64: 2, 64, 128>}]} {
    %c0 = arith.constant 0 : index
    %c0_0 = arith.constant 0 : index
    %0 = vector.load %arg2[%c0, %c0_0] : memref<9x128xf32, #tpu.memory_space<vmem>>, vector<9x128xf32>
    %c0_1 = arith.constant 0 : index
    %c0_2 = arith.constant 0 : index
    %c0_3 = arith.constant 0 : index
    %c0_4 = arith.constant 0 : index
    %1 = vector.load %arg1[%c0_1, %c0_2, %c0_3, %c0_4] : memref<2x10x10x128xf32, #tpu.memory_space<vmem>>, vector<2x8x8x128xf32>
    %2 = vector.shape_cast %1 : vector<2x8x8x128xf32> to vector<128x128xf32>
    %3 = vector.extract_strided_slice %0 {offsets = [0, 0], sizes = [1, 128], strides = [1, 1]} : vector<9x128xf32> to vector<1x128xf32>
    %4 = vector.broadcast %3 : vector<1x128xf32> to vector<128x128xf32>
    %5 = arith.mulf %2, %4 : vector<128x128xf32>
    %c0_5 = arith.constant 0 : index
    %c0_6 = arith.constant 0 : index
    %c1 = arith.constant 1 : index
    %c0_7 = arith.constant 0 : index
    %6 = vector.load %arg1[%c0_5, %c0_6, %c1, %c0_7] : memref<2x10x10x128xf32, #tpu.memory_space<vmem>>, vector<2x8x8x128xf32>
    %7 = vector.shape_cast %6 : vector<2x8x8x128xf32> to vector<128x128xf32>
    %8 = vector.extract_strided_slice %0 {offsets = [1, 0], sizes = [1, 128], strides = [1, 1]} : vector<9x128xf32> to vector<1x128xf32>
    %9 = vector.broadcast %8 : vector<1x128xf32> to vector<128x128xf32>
    %10 = arith.mulf %7, %9 : vector<128x128xf32>
    %11 = arith.addf %5, %10 : vector<128x128xf32>
    %c0_8 = arith.constant 0 : index
    %c0_9 = arith.constant 0 : index
    %c2 = arith.constant 2 : index
    %c0_10 = arith.constant 0 : index
    %12 = vector.load %arg1[%c0_8, %c0_9, %c2, %c0_10] : memref<2x10x10x128xf32, #tpu.memory_space<vmem>>, vector<2x8x8x128xf32>
    %13 = vector.shape_cast %12 : vector<2x8x8x128xf32> to vector<128x128xf32>
    %14 = vector.extract_strided_slice %0 {offsets = [2, 0], sizes = [1, 128], strides = [1, 1]} : vector<9x128xf32> to vector<1x128xf32>
    %15 = vector.broadcast %14 : vector<1x128xf32> to vector<128x128xf32>
    %16 = arith.mulf %13, %15 : vector<128x128xf32>
    %17 = arith.addf %11, %16 : vector<128x128xf32>
    %c0_11 = arith.constant 0 : index
    %c1_12 = arith.constant 1 : index
    %c0_13 = arith.constant 0 : index
    %c0_14 = arith.constant 0 : index
    %18 = vector.load %arg1[%c0_11, %c1_12, %c0_13, %c0_14] : memref<2x10x10x128xf32, #tpu.memory_space<vmem>>, vector<2x8x8x128xf32>
    %19 = vector.shape_cast %18 : vector<2x8x8x128xf32> to vector<128x128xf32>
    %20 = vector.extract_strided_slice %0 {offsets = [3, 0], sizes = [1, 128], strides = [1, 1]} : vector<9x128xf32> to vector<1x128xf32>
    %21 = vector.broadcast %20 : vector<1x128xf32> to vector<128x128xf32>
    %22 = arith.mulf %19, %21 : vector<128x128xf32>
    %23 = arith.addf %17, %22 : vector<128x128xf32>
    %c0_15 = arith.constant 0 : index
    %c1_16 = arith.constant 1 : index
    %c1_17 = arith.constant 1 : index
    %c0_18 = arith.constant 0 : index
    %24 = vector.load %arg1[%c0_15, %c1_16, %c1_17, %c0_18] : memref<2x10x10x128xf32, #tpu.memory_space<vmem>>, vector<2x8x8x128xf32>
    %25 = vector.shape_cast %24 : vector<2x8x8x128xf32> to vector<128x128xf32>
    %26 = vector.extract_strided_slice %0 {offsets = [4, 0], sizes = [1, 128], strides = [1, 1]} : vector<9x128xf32> to vector<1x128xf32>
    %27 = vector.broadcast %26 : vector<1x128xf32> to vector<128x128xf32>
    %28 = arith.mulf %25, %27 : vector<128x128xf32>
    %29 = arith.addf %23, %28 : vector<128x128xf32>
    %c0_19 = arith.constant 0 : index
    %c1_20 = arith.constant 1 : index
    %c2_21 = arith.constant 2 : index
    %c0_22 = arith.constant 0 : index
    %30 = vector.load %arg1[%c0_19, %c1_20, %c2_21, %c0_22] : memref<2x10x10x128xf32, #tpu.memory_space<vmem>>, vector<2x8x8x128xf32>
    %31 = vector.shape_cast %30 : vector<2x8x8x128xf32> to vector<128x128xf32>
    %32 = vector.extract_strided_slice %0 {offsets = [5, 0], sizes = [1, 128], strides = [1, 1]} : vector<9x128xf32> to vector<1x128xf32>
    %33 = vector.broadcast %32 : vector<1x128xf32> to vector<128x128xf32>
    %34 = arith.mulf %31, %33 : vector<128x128xf32>
    %35 = arith.addf %29, %34 : vector<128x128xf32>
    %c0_23 = arith.constant 0 : index
    %c2_24 = arith.constant 2 : index
    %c0_25 = arith.constant 0 : index
    %c0_26 = arith.constant 0 : index
    %36 = vector.load %arg1[%c0_23, %c2_24, %c0_25, %c0_26] : memref<2x10x10x128xf32, #tpu.memory_space<vmem>>, vector<2x8x8x128xf32>
    %37 = vector.shape_cast %36 : vector<2x8x8x128xf32> to vector<128x128xf32>
    %38 = vector.extract_strided_slice %0 {offsets = [6, 0], sizes = [1, 128], strides = [1, 1]} : vector<9x128xf32> to vector<1x128xf32>
    %39 = vector.broadcast %38 : vector<1x128xf32> to vector<128x128xf32>
    %40 = arith.mulf %37, %39 : vector<128x128xf32>
    %41 = arith.addf %35, %40 : vector<128x128xf32>
    %c0_27 = arith.constant 0 : index
    %c2_28 = arith.constant 2 : index
    %c1_29 = arith.constant 1 : index
    %c0_30 = arith.constant 0 : index
    %42 = vector.load %arg1[%c0_27, %c2_28, %c1_29, %c0_30] : memref<2x10x10x128xf32, #tpu.memory_space<vmem>>, vector<2x8x8x128xf32>
    %43 = vector.shape_cast %42 : vector<2x8x8x128xf32> to vector<128x128xf32>
    %44 = vector.extract_strided_slice %0 {offsets = [7, 0], sizes = [1, 128], strides = [1, 1]} : vector<9x128xf32> to vector<1x128xf32>
    %45 = vector.broadcast %44 : vector<1x128xf32> to vector<128x128xf32>
    %46 = arith.mulf %43, %45 : vector<128x128xf32>
    %47 = arith.addf %41, %46 : vector<128x128xf32>
    %c0_31 = arith.constant 0 : index
    %c2_32 = arith.constant 2 : index
    %c2_33 = arith.constant 2 : index
    %c0_34 = arith.constant 0 : index
    %48 = vector.load %arg1[%c0_31, %c2_32, %c2_33, %c0_34] : memref<2x10x10x128xf32, #tpu.memory_space<vmem>>, vector<2x8x8x128xf32>
    %49 = vector.shape_cast %48 : vector<2x8x8x128xf32> to vector<128x128xf32>
    %50 = vector.extract_strided_slice %0 {offsets = [8, 0], sizes = [1, 128], strides = [1, 1]} : vector<9x128xf32> to vector<1x128xf32>
    %51 = vector.broadcast %50 : vector<1x128xf32> to vector<128x128xf32>
    %52 = arith.mulf %49, %51 : vector<128x128xf32>
    %53 = arith.addf %47, %52 : vector<128x128xf32>
    %c0_35 = arith.constant 0 : index
    %c1_36 = arith.constant 1 : index
    %c1_37 = arith.constant 1 : index
    %c0_38 = arith.constant 0 : index
    %54 = vector.load %arg1[%c0_35, %c1_36, %c1_37, %c0_38] : memref<2x10x10x128xf32, #tpu.memory_space<vmem>>, vector<2x8x8x128xf32>
    %55 = vector.shape_cast %54 : vector<2x8x8x128xf32> to vector<128x128xf32>
    %c0_39 = arith.constant 0 : index
    %c0_40 = arith.constant 0 : index
    %56 = vector.load %arg3[%c0_39, %c0_40] : memref<1x128xf32, #tpu.memory_space<vmem>>, vector<1x128xf32>
    %57 = vector.broadcast %56 : vector<1x128xf32> to vector<128x128xf32>
    %58 = arith.addf %53, %57 : vector<128x128xf32>
    %c0_41 = arith.constant 0 : index
    %c0_42 = arith.constant 0 : index
    %59 = vector.load %arg4[%c0_41, %c0_42] : memref<1x128xf32, #tpu.memory_space<vmem>>, vector<1x128xf32>
    %60 = vector.broadcast %59 : vector<1x128xf32> to vector<128x128xf32>
    %61 = arith.mulf %58, %60 : vector<128x128xf32>
    %c0_43 = arith.constant 0 : index
    %c0_44 = arith.constant 0 : index
    %62 = vector.load %arg5[%c0_43, %c0_44] : memref<1x128xf32, #tpu.memory_space<vmem>>, vector<1x128xf32>
    %63 = vector.broadcast %62 : vector<1x128xf32> to vector<128x128xf32>
    %64 = arith.addf %61, %63 : vector<128x128xf32>
    %65 = arith.truncf %64 : vector<128x128xf32> to vector<128x128xbf16>
    %c0_45 = arith.constant 0 : index
    %c0_46 = arith.constant 0 : index
    %66 = vector.load %arg6[%c0_45, %c0_46] : memref<128x128xbf16, #tpu.memory_space<vmem>>, vector<128x128xbf16>
    %cst = arith.constant dense<0.000000e+00> : vector<128x128xf32>
    %67 = tpu.matmul %65, %66, %cst {dimension_numbers = #tpu.dot_dimension_numbers<[1], [0], [0], [1], [0, 0, 1, 1], [], []>} : vector<128x128xbf16>, vector<128x128xbf16>, vector<128x128xf32> -> vector<128x128xf32>
    %c0_47 = arith.constant 0 : index
    %c0_48 = arith.constant 0 : index
    %68 = vector.load %arg7[%c0_47, %c0_48] : memref<1x128xf32, #tpu.memory_space<vmem>>, vector<1x128xf32>
    %69 = vector.broadcast %68 : vector<1x128xf32> to vector<128x128xf32>
    %70 = arith.addf %67, %69 : vector<128x128xf32>
    %cst_49 = arith.constant 5.000000e-01 : f32
    %71 = vector.broadcast %cst_49 : f32 to vector<128x128xf32>
    %72 = arith.mulf %71, %70 : vector<128x128xf32>
    %cst_50 = arith.constant 4.471500e-02 : f32
    %73 = vector.broadcast %cst_50 : f32 to vector<128x128xf32>
    %74 = arith.mulf %73, %70 : vector<128x128xf32>
    %75 = arith.mulf %74, %70 : vector<128x128xf32>
    %76 = arith.mulf %75, %70 : vector<128x128xf32>
    %77 = arith.addf %70, %76 : vector<128x128xf32>
    %cst_51 = arith.constant 0.797884583 : f32
    %78 = vector.broadcast %cst_51 : f32 to vector<128x128xf32>
    %79 = arith.mulf %78, %77 : vector<128x128xf32>
    %80 = math.tanh %79 : vector<128x128xf32>
    %cst_52 = arith.constant 1.000000e+00 : f32
    %81 = vector.broadcast %cst_52 : f32 to vector<128x128xf32>
    %82 = arith.addf %81, %80 : vector<128x128xf32>
    %83 = arith.mulf %72, %82 : vector<128x128xf32>
    %84 = arith.truncf %83 : vector<128x128xf32> to vector<128x128xbf16>
    %c0_53 = arith.constant 0 : index
    %c0_54 = arith.constant 0 : index
    %85 = vector.load %arg8[%c0_53, %c0_54] : memref<128x128xbf16, #tpu.memory_space<vmem>>, vector<128x128xbf16>
    %cst_55 = arith.constant dense<0.000000e+00> : vector<128x128xf32>
    %86 = tpu.matmul %84, %85, %cst_55 {dimension_numbers = #tpu.dot_dimension_numbers<[1], [0], [0], [1], [0, 0, 1, 1], [], []>} : vector<128x128xbf16>, vector<128x128xbf16>, vector<128x128xf32> -> vector<128x128xf32>
    %c0_56 = arith.constant 0 : index
    %c0_57 = arith.constant 0 : index
    %87 = vector.load %arg9[%c0_56, %c0_57] : memref<1x128xf32, #tpu.memory_space<vmem>>, vector<1x128xf32>
    %88 = vector.broadcast %87 : vector<1x128xf32> to vector<128x128xf32>
    %89 = arith.addf %86, %88 : vector<128x128xf32>
    %c0_58 = arith.constant 0 : index
    %c0_59 = arith.constant 0 : index
    %90 = vector.load %arg10[%c0_58, %c0_59] : memref<1x128xf32, #tpu.memory_space<vmem>>, vector<1x128xf32>
    %91 = vector.broadcast %90 : vector<1x128xf32> to vector<128x128xf32>
    %92 = arith.mulf %91, %89 : vector<128x128xf32>
    %93 = arith.addf %55, %92 : vector<128x128xf32>
    %94 = arith.truncf %93 : vector<128x128xf32> to vector<128x128xbf16>
    %c0_60 = arith.constant 0 : index
    %c0_61 = arith.constant 0 : index
    %95 = vector.load %arg11[%c0_60, %c0_61] : memref<128x256xbf16, #tpu.memory_space<vmem>>, vector<128x256xbf16>
    %cst_62 = arith.constant dense<0.000000e+00> : vector<128x256xf32>
    %96 = tpu.matmul %94, %95, %cst_62 {dimension_numbers = #tpu.dot_dimension_numbers<[1], [0], [0], [1], [0, 0, 1, 1], [], []>} : vector<128x128xbf16>, vector<128x256xbf16>, vector<128x256xf32> -> vector<128x256xf32>
    %c0_63 = arith.constant 0 : index
    %c0_64 = arith.constant 0 : index
    %97 = vector.load %arg12[%c0_63, %c0_64] : memref<1x256xf32, #tpu.memory_space<vmem>>, vector<1x256xf32>
    %98 = vector.broadcast %97 : vector<1x256xf32> to vector<128x256xf32>
    %99 = arith.addf %96, %98 : vector<128x256xf32>
    %100 = vector.extract_strided_slice %99 {offsets = [0, 0], sizes = [128, 128], strides = [1, 1]} : vector<128x256xf32> to vector<128x128xf32>
    %101 = arith.mulf %100, %100 : vector<128x128xf32>
    %cst_65 = arith.constant dense<0.000000e+00> : vector<128xf32>
    %102 = vector.multi_reduction <add>, %101, %cst_65 [1] : vector<128x128xf32> to vector<128xf32>
    %103 = vector.shape_cast %102 : vector<128xf32> to vector<128x1xf32>
    %104 = math.sqrt %103 : vector<128x1xf32>
    %cst_66 = arith.constant 9.99999996E-13 : f32
    %105 = vector.broadcast %cst_66 : f32 to vector<128x1xf32>
    %106 = arith.maximumf %104, %105 : vector<128x1xf32>
    %107 = vector.broadcast %106 : vector<128x1xf32> to vector<128x128xf32>
    %108 = arith.divf %100, %107 : vector<128x128xf32>
    %109 = vector.extract_strided_slice %99 {offsets = [0, 128], sizes = [128, 128], strides = [1, 1]} : vector<128x256xf32> to vector<128x128xf32>
    %110 = arith.mulf %109, %109 : vector<128x128xf32>
    %cst_67 = arith.constant dense<0.000000e+00> : vector<128xf32>
    %111 = vector.multi_reduction <add>, %110, %cst_67 [1] : vector<128x128xf32> to vector<128xf32>
    %112 = vector.shape_cast %111 : vector<128xf32> to vector<128x1xf32>
    %113 = math.sqrt %112 : vector<128x1xf32>
    %cst_68 = arith.constant 9.99999996E-13 : f32
    %114 = vector.broadcast %cst_68 : f32 to vector<128x1xf32>
    %115 = arith.maximumf %113, %114 : vector<128x1xf32>
    %116 = vector.broadcast %115 : vector<128x1xf32> to vector<128x128xf32>
    %117 = arith.divf %109, %116 : vector<128x128xf32>
    %c0_69 = arith.constant 0 : index
    %c0_70 = arith.constant 0 : index
    %118 = vector.load %arg13[%c0_69, %c0_70] : memref<1x128xf32, #tpu.memory_space<vmem>>, vector<1x128xf32>
    %119 = vector.broadcast %118 : vector<1x128xf32> to vector<128x128xf32>
    %120 = arith.mulf %108, %119 : vector<128x128xf32>
    %cst_71 = arith.constant dense<0.000000e+00> : vector<128xf32>
    %121 = vector.multi_reduction <add>, %120, %cst_71 [1] : vector<128x128xf32> to vector<128xf32>
    %122 = vector.shape_cast %121 : vector<128xf32> to vector<128x1xf32>
    %cst_72 = arith.constant 0.0883883461 : f32
    %123 = vector.broadcast %cst_72 : f32 to vector<128x1xf32>
    %124 = arith.mulf %122, %123 : vector<128x1xf32>
    %125 = vector.shape_cast %124 : vector<128x1xf32> to vector<128x1xf32>
    %126 = vector.broadcast %125 : vector<128x1xf32> to vector<128x128xf32>
    %127 = vector.shape_cast %126 : vector<128x128xf32> to vector<2x64x128xf32>
    %128 = vector.shape_cast %108 : vector<128x128xf32> to vector<2x64x128xf32>
    %129 = arith.mulf %127, %127 : vector<2x64x128xf32>
    %cst_73 = arith.constant dense<0.000000e+00> : vector<2x128xf32>
    %130 = vector.multi_reduction <add>, %129, %cst_73 [1] : vector<2x64x128xf32> to vector<2x128xf32>
    %131 = vector.shape_cast %130 : vector<2x128xf32> to vector<2x1x128xf32>
    %132 = math.sqrt %131 : vector<2x1x128xf32>
    %cst_74 = arith.constant 9.99999996E-13 : f32
    %133 = vector.broadcast %cst_74 : f32 to vector<2x1x128xf32>
    %134 = arith.maximumf %132, %133 : vector<2x1x128xf32>
    %135 = vector.broadcast %134 : vector<2x1x128xf32> to vector<2x64x128xf32>
    %136 = arith.divf %127, %135 : vector<2x64x128xf32>
    %137 = arith.mulf %136, %128 : vector<2x64x128xf32>
    %cst_75 = arith.constant dense<0.000000e+00> : vector<2x128xf32>
    %138 = vector.multi_reduction <add>, %137, %cst_75 [1] : vector<2x64x128xf32> to vector<2x128xf32>
    %139 = vector.shape_cast %138 : vector<2x128xf32> to vector<2x1x128xf32>
    %140 = vector.shape_cast %139 : vector<2x1x128xf32> to vector<2x1x128xf32>
    %141 = vector.broadcast %140 : vector<2x1x128xf32> to vector<2x64x128xf32>
    %142 = vector.shape_cast %141 : vector<2x64x128xf32> to vector<128x128xf32>
    %143 = arith.mulf %142, %117 : vector<128x128xf32>
    %144 = arith.truncf %143 : vector<128x128xf32> to vector<128x128xbf16>
    %c0_76 = arith.constant 0 : index
    %c0_77 = arith.constant 0 : index
    %145 = vector.load %arg14[%c0_76, %c0_77] : memref<128x128xbf16, #tpu.memory_space<vmem>>, vector<128x128xbf16>
    %cst_78 = arith.constant dense<0.000000e+00> : vector<128x128xf32>
    %146 = tpu.matmul %144, %145, %cst_78 {dimension_numbers = #tpu.dot_dimension_numbers<[1], [0], [0], [1], [0, 0, 1, 1], [], []>} : vector<128x128xbf16>, vector<128x128xbf16>, vector<128x128xf32> -> vector<128x128xf32>
    %c0_79 = arith.constant 0 : index
    %c0_80 = arith.constant 0 : index
    %147 = vector.load %arg15[%c0_79, %c0_80] : memref<1x128xf32, #tpu.memory_space<vmem>>, vector<1x128xf32>
    %148 = vector.broadcast %147 : vector<1x128xf32> to vector<128x128xf32>
    %149 = arith.addf %146, %148 : vector<128x128xf32>
    %150 = arith.addf %149, %108 : vector<128x128xf32>
    %151 = arith.truncf %150 : vector<128x128xf32> to vector<128x128xbf16>
    %c0_81 = arith.constant 0 : index
    %c0_82 = arith.constant 0 : index
    %152 = vector.load %arg16[%c0_81, %c0_82] : memref<128x128xbf16, #tpu.memory_space<vmem>>, vector<128x128xbf16>
    %cst_83 = arith.constant dense<0.000000e+00> : vector<128x128xf32>
    %153 = tpu.matmul %151, %152, %cst_83 {dimension_numbers = #tpu.dot_dimension_numbers<[1], [0], [0], [1], [0, 0, 1, 1], [], []>} : vector<128x128xbf16>, vector<128x128xbf16>, vector<128x128xf32> -> vector<128x128xf32>
    %c0_84 = arith.constant 0 : index
    %c0_85 = arith.constant 0 : index
    %154 = vector.load %arg17[%c0_84, %c0_85] : memref<1x128xf32, #tpu.memory_space<vmem>>, vector<1x128xf32>
    %155 = vector.broadcast %154 : vector<1x128xf32> to vector<128x128xf32>
    %156 = arith.addf %153, %155 : vector<128x128xf32>
    %c0_86 = arith.constant 0 : index
    %c0_87 = arith.constant 0 : index
    %157 = vector.load %arg18[%c0_86, %c0_87] : memref<1x128xf32, #tpu.memory_space<vmem>>, vector<1x128xf32>
    %158 = vector.broadcast %157 : vector<1x128xf32> to vector<128x128xf32>
    %159 = arith.mulf %158, %156 : vector<128x128xf32>
    %160 = arith.addf %93, %159 : vector<128x128xf32>
    %c0_88 = arith.constant 0 : index
    %c0_89 = arith.constant 0 : index
    %161 = vector.load %arg19[%c0_88, %c0_89] : memref<1x128xf32, #tpu.memory_space<vmem>>, vector<1x128xf32>
    %162 = vector.broadcast %161 : vector<1x128xf32> to vector<128x128xf32>
    %163 = arith.mulf %160, %162 : vector<128x128xf32>
    %c0_90 = arith.constant 0 : index
    %c0_91 = arith.constant 0 : index
    %164 = vector.load %arg20[%c0_90, %c0_91] : memref<1x128xf32, #tpu.memory_space<vmem>>, vector<1x128xf32>
    %165 = vector.broadcast %164 : vector<1x128xf32> to vector<128x128xf32>
    %166 = arith.addf %163, %165 : vector<128x128xf32>
    %167 = arith.truncf %166 : vector<128x128xf32> to vector<128x128xbf16>
    %c0_92 = arith.constant 0 : index
    %c0_93 = arith.constant 0 : index
    %168 = vector.load %arg21[%c0_92, %c0_93] : memref<128x512xbf16, #tpu.memory_space<vmem>>, vector<128x512xbf16>
    %cst_94 = arith.constant dense<0.000000e+00> : vector<128x512xf32>
    %169 = tpu.matmul %167, %168, %cst_94 {dimension_numbers = #tpu.dot_dimension_numbers<[1], [0], [0], [1], [0, 0, 1, 1], [], []>} : vector<128x128xbf16>, vector<128x512xbf16>, vector<128x512xf32> -> vector<128x512xf32>
    %c0_95 = arith.constant 0 : index
    %c0_96 = arith.constant 0 : index
    %170 = vector.load %arg22[%c0_95, %c0_96] : memref<1x512xf32, #tpu.memory_space<vmem>>, vector<1x512xf32>
    %171 = vector.broadcast %170 : vector<1x512xf32> to vector<128x512xf32>
    %172 = arith.addf %169, %171 : vector<128x512xf32>
    %cst_97 = arith.constant 5.000000e-01 : f32
    %173 = vector.broadcast %cst_97 : f32 to vector<128x512xf32>
    %174 = arith.mulf %173, %172 : vector<128x512xf32>
    %cst_98 = arith.constant 4.471500e-02 : f32
    %175 = vector.broadcast %cst_98 : f32 to vector<128x512xf32>
    %176 = arith.mulf %175, %172 : vector<128x512xf32>
    %177 = arith.mulf %176, %172 : vector<128x512xf32>
    %178 = arith.mulf %177, %172 : vector<128x512xf32>
    %179 = arith.addf %172, %178 : vector<128x512xf32>
    %cst_99 = arith.constant 0.797884583 : f32
    %180 = vector.broadcast %cst_99 : f32 to vector<128x512xf32>
    %181 = arith.mulf %180, %179 : vector<128x512xf32>
    %182 = math.tanh %181 : vector<128x512xf32>
    %cst_100 = arith.constant 1.000000e+00 : f32
    %183 = vector.broadcast %cst_100 : f32 to vector<128x512xf32>
    %184 = arith.addf %183, %182 : vector<128x512xf32>
    %185 = arith.mulf %174, %184 : vector<128x512xf32>
    %186 = arith.truncf %185 : vector<128x512xf32> to vector<128x512xbf16>
    %c0_101 = arith.constant 0 : index
    %c0_102 = arith.constant 0 : index
    %187 = vector.load %arg23[%c0_101, %c0_102] : memref<512x128xbf16, #tpu.memory_space<vmem>>, vector<512x128xbf16>
    %cst_103 = arith.constant dense<0.000000e+00> : vector<128x128xf32>
    %188 = tpu.matmul %186, %187, %cst_103 {dimension_numbers = #tpu.dot_dimension_numbers<[1], [0], [0], [1], [0, 0, 1, 1], [], []>} : vector<128x512xbf16>, vector<512x128xbf16>, vector<128x128xf32> -> vector<128x128xf32>
    %c0_104 = arith.constant 0 : index
    %c0_105 = arith.constant 0 : index
    %189 = vector.load %arg24[%c0_104, %c0_105] : memref<1x128xf32, #tpu.memory_space<vmem>>, vector<1x128xf32>
    %190 = vector.broadcast %189 : vector<1x128xf32> to vector<128x128xf32>
    %191 = arith.addf %188, %190 : vector<128x128xf32>
    %c0_106 = arith.constant 0 : index
    %c0_107 = arith.constant 0 : index
    %192 = vector.load %arg25[%c0_106, %c0_107] : memref<1x128xf32, #tpu.memory_space<vmem>>, vector<1x128xf32>
    %193 = vector.broadcast %192 : vector<1x128xf32> to vector<128x128xf32>
    %194 = arith.mulf %193, %191 : vector<128x128xf32>
    %195 = arith.addf %160, %194 : vector<128x128xf32>
    %196 = vector.shape_cast %195 : vector<128x128xf32> to vector<2x64x128xf32>
    %c0_108 = arith.constant 0 : index
    %c0_109 = arith.constant 0 : index
    %c0_110 = arith.constant 0 : index
    %197 = vector.load %arg26[%c0_108, %c0_109, %c0_110] : memref<2x64x128xf32, #tpu.memory_space<vmem>>, vector<2x64x128xf32>
    tpu.vector_store %arg26[%c0_108, %c0_109, %c0_110], %196 {strides = array<i32>} : memref<2x64x128xf32, #tpu.memory_space<vmem>>, vector<2x64x128xf32>,
    return
  }
  func.func @transform_0(%arg0: i32) -> (i32, i32, i32, i32) {
    %c0_i32 = arith.constant 0 : i32
    %c0_i32_0 = arith.constant 0 : i32
    %c0_i32_1 = arith.constant 0 : i32
    %c0_i32_2 = arith.constant 0 : i32
    return %arg0, %c0_i32, %c0_i32_0, %c0_i32_1 : i32, i32, i32, i32
  }
  func.func @transform_1(%arg0: i32) -> (i32, i32) {
    %c0_i32 = arith.constant 0 : i32
    %c0_i32_0 = arith.constant 0 : i32
    %c0_i32_1 = arith.constant 0 : i32
    return %c0_i32, %c0_i32_0 : i32, i32
  }
  func.func @transform_2(%arg0: i32) -> (i32, i32) {
    %c0_i32 = arith.constant 0 : i32
    %c0_i32_0 = arith.constant 0 : i32
    %c0_i32_1 = arith.constant 0 : i32
    return %c0_i32, %c0_i32_0 : i32, i32
  }
  func.func @transform_3(%arg0: i32) -> (i32, i32) {
    %c0_i32 = arith.constant 0 : i32
    %c0_i32_0 = arith.constant 0 : i32
    %c0_i32_1 = arith.constant 0 : i32
    return %c0_i32, %c0_i32_0 : i32, i32
  }
  func.func @transform_4(%arg0: i32) -> (i32, i32) {
    %c0_i32 = arith.constant 0 : i32
    %c0_i32_0 = arith.constant 0 : i32
    %c0_i32_1 = arith.constant 0 : i32
    return %c0_i32, %c0_i32_0 : i32, i32
  }
  func.func @transform_5(%arg0: i32) -> (i32, i32) {
    %c0_i32 = arith.constant 0 : i32
    %c0_i32_0 = arith.constant 0 : i32
    %c0_i32_1 = arith.constant 0 : i32
    return %c0_i32, %c0_i32_0 : i32, i32
  }
  func.func @transform_6(%arg0: i32) -> (i32, i32) {
    %c0_i32 = arith.constant 0 : i32
    %c0_i32_0 = arith.constant 0 : i32
    %c0_i32_1 = arith.constant 0 : i32
    return %c0_i32, %c0_i32_0 : i32, i32
  }
  func.func @transform_7(%arg0: i32) -> (i32, i32) {
    %c0_i32 = arith.constant 0 : i32
    %c0_i32_0 = arith.constant 0 : i32
    %c0_i32_1 = arith.constant 0 : i32
    return %c0_i32, %c0_i32_0 : i32, i32
  }
  func.func @transform_8(%arg0: i32) -> (i32, i32) {
    %c0_i32 = arith.constant 0 : i32
    %c0_i32_0 = arith.constant 0 : i32
    %c0_i32_1 = arith.constant 0 : i32
    return %c0_i32, %c0_i32_0 : i32, i32
  }
  func.func @transform_9(%arg0: i32) -> (i32, i32) {
    %c0_i32 = arith.constant 0 : i32
    %c0_i32_0 = arith.constant 0 : i32
    %c0_i32_1 = arith.constant 0 : i32
    return %c0_i32, %c0_i32_0 : i32, i32
  }
  func.func @transform_10(%arg0: i32) -> (i32, i32) {
    %c0_i32 = arith.constant 0 : i32
    %c0_i32_0 = arith.constant 0 : i32
    %c0_i32_1 = arith.constant 0 : i32
    return %c0_i32, %c0_i32_0 : i32, i32
  }
  func.func @transform_11(%arg0: i32) -> (i32, i32) {
    %c0_i32 = arith.constant 0 : i32
    %c0_i32_0 = arith.constant 0 : i32
    %c0_i32_1 = arith.constant 0 : i32
    return %c0_i32, %c0_i32_0 : i32, i32
  }
  func.func @transform_12(%arg0: i32) -> (i32, i32) {
    %c0_i32 = arith.constant 0 : i32
    %c0_i32_0 = arith.constant 0 : i32
    %c0_i32_1 = arith.constant 0 : i32
    return %c0_i32, %c0_i32_0 : i32, i32
  }
  func.func @transform_13(%arg0: i32) -> (i32, i32) {
    %c0_i32 = arith.constant 0 : i32
    %c0_i32_0 = arith.constant 0 : i32
    %c0_i32_1 = arith.constant 0 : i32
    return %c0_i32, %c0_i32_0 : i32, i32
  }
  func.func @transform_14(%arg0: i32) -> (i32, i32) {
    %c0_i32 = arith.constant 0 : i32
    %c0_i32_0 = arith.constant 0 : i32
    %c0_i32_1 = arith.constant 0 : i32
    return %c0_i32, %c0_i32_0 : i32, i32
  }
  func.func @transform_15(%arg0: i32) -> (i32, i32) {
    %c0_i32 = arith.constant 0 : i32
    %c0_i32_0 = arith.constant 0 : i32
    %c0_i32_1 = arith.constant 0 : i32
    return %c0_i32, %c0_i32_0 : i32, i32
  }
  func.func @transform_16(%arg0: i32) -> (i32, i32) {
    %c0_i32 = arith.constant 0 : i32
    %c0_i32_0 = arith.constant 0 : i32
    %c0_i32_1 = arith.constant 0 : i32
    return %c0_i32, %c0_i32_0 : i32, i32
  }
  func.func @transform_17(%arg0: i32) -> (i32, i32) {
    %c0_i32 = arith.constant 0 : i32
    %c0_i32_0 = arith.constant 0 : i32
    %c0_i32_1 = arith.constant 0 : i32
    return %c0_i32, %c0_i32_0 : i32, i32
  }
  func.func @transform_18(%arg0: i32) -> (i32, i32) {
    %c0_i32 = arith.constant 0 : i32
    %c0_i32_0 = arith.constant 0 : i32
    %c0_i32_1 = arith.constant 0 : i32
    return %c0_i32, %c0_i32_0 : i32, i32
  }
  func.func @transform_19(%arg0: i32) -> (i32, i32) {
    %c0_i32 = arith.constant 0 : i32
    %c0_i32_0 = arith.constant 0 : i32
    %c0_i32_1 = arith.constant 0 : i32
    return %c0_i32, %c0_i32_0 : i32, i32
  }
  func.func @transform_20(%arg0: i32) -> (i32, i32) {
    %c0_i32 = arith.constant 0 : i32
    %c0_i32_0 = arith.constant 0 : i32
    %c0_i32_1 = arith.constant 0 : i32
    return %c0_i32, %c0_i32_0 : i32, i32
  }
  func.func @transform_21(%arg0: i32) -> (i32, i32) {
    %c0_i32 = arith.constant 0 : i32
    %c0_i32_0 = arith.constant 0 : i32
    %c0_i32_1 = arith.constant 0 : i32
    return %c0_i32, %c0_i32_0 : i32, i32
  }
  func.func @transform_22(%arg0: i32) -> (i32, i32) {
    %c0_i32 = arith.constant 0 : i32
    %c0_i32_0 = arith.constant 0 : i32
    %c0_i32_1 = arith.constant 0 : i32
    return %c0_i32, %c0_i32_0 : i32, i32
  }
  func.func @transform_23(%arg0: i32) -> (i32, i32) {
    %c0_i32 = arith.constant 0 : i32
    %c0_i32_0 = arith.constant 0 : i32
    %c0_i32_1 = arith.constant 0 : i32
    return %c0_i32, %c0_i32_0 : i32, i32
  }
  func.func @transform_24(%arg0: i32) -> (i32, i32) {
    %c0_i32 = arith.constant 0 : i32
    %c0_i32_0 = arith.constant 0 : i32
    %c0_i32_1 = arith.constant 0 : i32
    return %c0_i32, %c0_i32_0 : i32, i32
  }
  func.func @transform_25(%arg0: i32) -> (i32, i32, i32) {
    %c0_i32 = arith.constant 0 : i32
    %c0_i32_0 = arith.constant 0 : i32
    %c0_i32_1 = arith.constant 0 : i32
    return %arg0, %c0_i32, %c0_i32_0 : i32, i32, i32
  }
}

</mosaic_0001>

<llo_original>
// kernel: tpu_custom_call.1
$region0: #{tpu_custom_call.1}
  #allocation0 [shape = 'u32[]', space=smem, size = 0x4, offset = 0x4, fixed_abs, tag = 'smem constant byte address 0x4 - core index']
  #allocation1 [shape = 'u32[144,128]{1,0:T(1,128)}', space=vmem, size = 0x12000, scoped, tag = 'internal scratch']
  %s0 = inlined_call_operand.vmem [shape: f32[4,10,10,128], index: 0, kind: input, shape index: {}]
  %s1 = inlined_call_operand.vmem [shape: f32[9,128], index: 1, kind: input, shape index: {}]
  %s2 = inlined_call_operand.vmem [shape: f32[1,128], index: 2, kind: input, shape index: {}]
  %s3 = inlined_call_operand.vmem [shape: f32[1,128], index: 3, kind: input, shape index: {}]
  %s4 = inlined_call_operand.vmem [shape: f32[1,128], index: 4, kind: input, shape index: {}]
  %s5 = inlined_call_operand.vmem [shape: bf16[128,128], index: 5, kind: input, shape index: {}]
  %s6 = inlined_call_operand.vmem [shape: f32[1,128], index: 6, kind: input, shape index: {}]
  %s7 = inlined_call_operand.vmem [shape: bf16[128,128], index: 7, kind: input, shape index: {}]
  %s8 = inlined_call_operand.vmem [shape: f32[1,128], index: 8, kind: input, shape index: {}]
  %s9 = inlined_call_operand.vmem [shape: f32[1,128], index: 9, kind: input, shape index: {}]
  %s10 = inlined_call_operand.vmem [shape: bf16[128,256], index: 10, kind: input, shape index: {}]
  %s11 = inlined_call_operand.vmem [shape: f32[1,256], index: 11, kind: input, shape index: {}]
  %s12 = inlined_call_operand.vmem [shape: f32[1,128], index: 12, kind: input, shape index: {}]
  %s13 = inlined_call_operand.vmem [shape: bf16[128,128], index: 13, kind: input, shape index: {}]
  %s14 = inlined_call_operand.vmem [shape: f32[1,128], index: 14, kind: input, shape index: {}]
  %s15 = inlined_call_operand.vmem [shape: bf16[128,128], index: 15, kind: input, shape index: {}]
  %s16 = inlined_call_operand.vmem [shape: f32[1,128], index: 16, kind: input, shape index: {}]
  %s17 = inlined_call_operand.vmem [shape: f32[1,128], index: 17, kind: input, shape index: {}]
  %s18 = inlined_call_operand.vmem [shape: f32[1,128], index: 18, kind: input, shape index: {}]
  %s19 = inlined_call_operand.vmem [shape: f32[1,128], index: 19, kind: input, shape index: {}]
  %s20 = inlined_call_operand.vmem [shape: bf16[128,512], index: 20, kind: input, shape index: {}]
  %s21 = inlined_call_operand.vmem [shape: f32[1,512], index: 21, kind: input, shape index: {}]
  %s22 = inlined_call_operand.vmem [shape: bf16[512,128], index: 22, kind: input, shape index: {}]
  %s23 = inlined_call_operand.vmem [shape: f32[1,128], index: 23, kind: input, shape index: {}]
  %s24 = inlined_call_operand.vmem [shape: f32[1,128], index: 24, kind: input, shape index: {}]
  %s25 = inlined_call_operand.hbm [shape: f32[4,64,128], index: 25, kind: output, shape index: {}]
  %s26 = sld [smem:[#allocation0]]
  $region133: #{tpu_custom_call.1} parent=0
    _
  %s28 = ssub.s32 1, %s26
  %s29 = scalar_select 0, %s28, %s26
  $region1: #{tpu_custom_call.1} parent=0
    #allocation2 [shape = 'u8[131072]{0}', space=vmem, size = 0x20000, scoped, tag = 'output window, operand 0']
    #allocation3 [shape = 's32[2]{0}', space=sflag, size = 0x8, scoped, tag = 'scoped memory for tpu_custom_call.1']
    %30 = vsyncpa [#allocation3], 0
    %s31 = scalar_lea.sflag [#allocation3], 1
    %32 = vsyncpa %s31, 0
    loop: start=0, step=1, limit=4
    $region2: #{tpu_custom_call.1} parent=1 // loop_pre_header
      _
    $region3: #{tpu_custom_call.1} parent=1 // loop_header
      %s34 = sphi 0, %s38
      %p35 = scmp.ge.s32.totalorder %s34, 4
      %s44 = sphi 0, %s46
      %s47 = sphi 0, %s44
      %s48 = sphi 0, %s47
      %s64 = sphi 0, %s48
      %s68 = sphi 0, %s68
      %s70 = sphi 0, %s68
      %s71 = sphi 0, %s70
      %s85 = sphi 0, %s71
      %s89 = sphi 0, %s89
      %s91 = sphi 0, %s89
      %s92 = sphi 0, %s91
      %s106 = sphi 0, %s92
      %s110 = sphi 0, %s110
      %s112 = sphi 0, %s110
      %s113 = sphi 0, %s112
      %s127 = sphi 0, %s113
      %s131 = sphi 0, %s131
      %s133 = sphi 0, %s131
      %s134 = sphi 0, %s133
      %s148 = sphi 0, %s134
      %s152 = sphi 0, %s152
      %s154 = sphi 0, %s152
      %s155 = sphi 0, %s154
      %s169 = sphi 0, %s155
      %s173 = sphi 0, %s173
      %s175 = sphi 0, %s173
      %s176 = sphi 0, %s175
      %s190 = sphi 0, %s176
      %s194 = sphi 0, %s194
      %s196 = sphi 0, %s194
      %s197 = sphi 0, %s196
      %s211 = sphi 0, %s197
      %s215 = sphi 0, %s215
      %s217 = sphi 0, %s215
      %s218 = sphi 0, %s217
      %s232 = sphi 0, %s218
      %s236 = sphi 0, %s236
      %s238 = sphi 0, %s236
      %s239 = sphi 0, %s238
      %s253 = sphi 0, %s239
      %s257 = sphi 0, %s257
      %s259 = sphi 0, %s257
      %s260 = sphi 0, %s259
      %s274 = sphi 0, %s260
      %s278 = sphi 0, %s278
      %s280 = sphi 0, %s278
      %s281 = sphi 0, %s280
      %s295 = sphi 0, %s281
      %s299 = sphi 0, %s299
      %s301 = sphi 0, %s299
      %s302 = sphi 0, %s301
      %s316 = sphi 0, %s302
      %s320 = sphi 0, %s320
      %s322 = sphi 0, %s320
      %s323 = sphi 0, %s322
      %s337 = sphi 0, %s323
      %s341 = sphi 0, %s341
      %s343 = sphi 0, %s341
      %s344 = sphi 0, %s343
      %s358 = sphi 0, %s344
      %s362 = sphi 0, %s362
      %s364 = sphi 0, %s362
      %s365 = sphi 0, %s364
      %s379 = sphi 0, %s365
      %s383 = sphi 0, %s383
      %s385 = sphi 0, %s383
      %s386 = sphi 0, %s385
      %s400 = sphi 0, %s386
      %s404 = sphi 0, %s404
      %s406 = sphi 0, %s404
      %s407 = sphi 0, %s406
      %s421 = sphi 0, %s407
      %s425 = sphi 0, %s425
      %s427 = sphi 0, %s425
      %s428 = sphi 0, %s427
      %s442 = sphi 0, %s428
      %s446 = sphi 0, %s446
      %s448 = sphi 0, %s446
      %s449 = sphi 0, %s448
      %s463 = sphi 0, %s449
      %s467 = sphi 0, %s467
      %s469 = sphi 0, %s467
      %s470 = sphi 0, %s469
      %s484 = sphi 0, %s470
      %s488 = sphi 0, %s488
      %s490 = sphi 0, %s488
      %s491 = sphi 0, %s490
      %s505 = sphi 0, %s491
      %s509 = sphi 0, %s509
      %s511 = sphi 0, %s509
      %s512 = sphi 0, %s511
      %s526 = sphi 0, %s512
      %s530 = sphi 0, %s530
      %s532 = sphi 0, %s530
      %s533 = sphi 0, %s532
      %s547 = sphi 0, %s533
      %s551 = sphi 0, %s551
      %s553 = sphi 0, %s551
      %s554 = sphi 0, %s553
      %s568 = sphi 0, %s554
      %s574 = sphi 0, %s576
      %s577 = sphi 0, %s574
      %s578 = sphi 0, %s577
      %s594 = sphi 0, %s578
    $region4: #{tpu_custom_call.1} parent=1 // loop_header_branch
      %37 = sbr.rel (%p35) target = $region8
    $region5: #{tpu_custom_call.1} parent=1 // loop_body
      %s39 = ssub.s32 %s34, 1
      %s40 = ssub.s32 %s34, 2
      %s41 = sadd.s32 %s34, 1
      %s42 = ssub.s32 %s34, %s41
      %p43 = scmp.eq.s32.totalorder %s42, 0
      %s45 = sadd.s32 %s44, 1
      %s46 = scalar_select %p43, %s44, %s45
      %p49 = pneg %p43
      %p50 = scmp.eq.s32.totalorder %s34, 1
      %p51 = por %p49, %p50
      %p52 = scmp.ne.s32.totalorder %s44, %s47
      %p53 = scmp.eq.s32.totalorder %s34, 0
      %p54 = por %p52, %p53
      %p55 = scmp.ne.s32.totalorder %s44, %s47
      %p56 = scmp.eq.s32.totalorder %s39, 1
      %p57 = por %p55, %p56
      %p58 = scmp.ne.s32.totalorder %s47, %s48
      %p59 = scmp.eq.s32.totalorder %s39, 0
      %p60 = por %p58, %p59
      %p61 = scmp.ne.s32.totalorder %s47, %s48
      %p62 = scmp.eq.s32.totalorder %s40, 1
      %p63 = por %p61, %p62
      %p65 = scmp.ne.s32.totalorder %s48, %s64
      %p66 = scmp.eq.s32.totalorder %s40, 0
      %p67 = por %p65, %p66
      %s69 = sadd.s32 %s68, 1
      %p72 = scmp.eq.s32.totalorder %s34, 1
      %p73 = scmp.ne.s32.totalorder %s68, %s70
      %p74 = scmp.eq.s32.totalorder %s34, 0
      %p75 = por %p73, %p74
      %p76 = scmp.ne.s32.totalorder %s68, %s70
      %p77 = scmp.eq.s32.totalorder %s39, 1
      %p78 = por %p76, %p77
      %p79 = scmp.ne.s32.totalorder %s70, %s71
      %p80 = scmp.eq.s32.totalorder %s39, 0
      %p81 = por %p79, %p80
      %p82 = scmp.ne.s32.totalorder %s70, %s71
      %p83 = scmp.eq.s32.totalorder %s40, 1
      %p84 = por %p82, %p83
      %p86 = scmp.ne.s32.totalorder %s71, %s85
      %p87 = scmp.eq.s32.totalorder %s40, 0
      %p88 = por %p86, %p87
      %s90 = sadd.s32 %s89, 1
      %p93 = scmp.eq.s32.totalorder %s34, 1
      %p94 = scmp.ne.s32.totalorder %s89, %s91
      %p95 = scmp.eq.s32.totalorder %s34, 0
      %p96 = por %p94, %p95
      %p97 = scmp.ne.s32.totalorder %s89, %s91
      %p98 = scmp.eq.s32.totalorder %s39, 1
      %p99 = por %p97, %p98
      %p100 = scmp.ne.s32.totalorder %s91, %s92
      %p101 = scmp.eq.s32.totalorder %s39, 0
      %p102 = por %p100, %p101
      %p103 = scmp.ne.s32.totalorder %s91, %s92
      %p104 = scmp.eq.s32.totalorder %s40, 1
      %p105 = por %p103, %p104
      %p107 = scmp.ne.s32.totalorder %s92, %s106
      %p108 = scmp.eq.s32.totalorder %s40, 0
      %p109 = por %p107, %p108
      %s111 = sadd.s32 %s110, 1
      %p114 = scmp.eq.s32.totalorder %s34, 1
      %p115 = scmp.ne.s32.totalorder %s110, %s112
      %p116 = scmp.eq.s32.totalorder %s34, 0
      %p117 = por %p115, %p116
      %p118 = scmp.ne.s32.totalorder %s110, %s112
      %p119 = scmp.eq.s32.totalorder %s39, 1
      %p120 = por %p118, %p119
      %p121 = scmp.ne.s32.totalorder %s112, %s113
      %p122 = scmp.eq.s32.totalorder %s39, 0
      %p123 = por %p121, %p122
      %p124 = scmp.ne.s32.totalorder %s112, %s113
      %p125 = scmp.eq.s32.totalorder %s40, 1
      %p126 = por %p124, %p125
      %p128 = scmp.ne.s32.totalorder %s113, %s127
      %p129 = scmp.eq.s32.totalorder %s40, 0
      %p130 = por %p128, %p129
      %s132 = sadd.s32 %s131, 1
      %p135 = scmp.eq.s32.totalorder %s34, 1
      %p136 = scmp.ne.s32.totalorder %s131, %s133
      %p137 = scmp.eq.s32.totalorder %s34, 0
      %p138 = por %p136, %p137
      %p139 = scmp.ne.s32.totalorder %s131, %s133
      %p140 = scmp.eq.s32.totalorder %s39, 1
      %p141 = por %p139, %p140
      %p142 = scmp.ne.s32.totalorder %s133, %s134
      %p143 = scmp.eq.s32.totalorder %s39, 0
      %p144 = por %p142, %p143
      %p145 = scmp.ne.s32.totalorder %s133, %s134
      %p146 = scmp.eq.s32.totalorder %s40, 1
      %p147 = por %p145, %p146
      %p149 = scmp.ne.s32.totalorder %s134, %s148
      %p150 = scmp.eq.s32.totalorder %s40, 0
      %p151 = por %p149, %p150
      %s153 = sadd.s32 %s152, 1
      %p156 = scmp.eq.s32.totalorder %s34, 1
      %p157 = scmp.ne.s32.totalorder %s152, %s154
      %p158 = scmp.eq.s32.totalorder %s34, 0
      %p159 = por %p157, %p158
      %p160 = scmp.ne.s32.totalorder %s152, %s154
      %p161 = scmp.eq.s32.totalorder %s39, 1
      %p162 = por %p160, %p161
      %p163 = scmp.ne.s32.totalorder %s154, %s155
      %p164 = scmp.eq.s32.totalorder %s39, 0
      %p165 = por %p163, %p164
      %p166 = scmp.ne.s32.totalorder %s154, %s155
      %p167 = scmp.eq.s32.totalorder %s40, 1
      %p168 = por %p166, %p167
      %p170 = scmp.ne.s32.totalorder %s155, %s169
      %p171 = scmp.eq.s32.totalorder %s40, 0
      %p172 = por %p170, %p171
      %s174 = sadd.s32 %s173, 1
      %p177 = scmp.eq.s32.totalorder %s34, 1
      %p178 = scmp.ne.s32.totalorder %s173, %s175
      %p179 = scmp.eq.s32.totalorder %s34, 0
      %p180 = por %p178, %p179
      %p181 = scmp.ne.s32.totalorder %s173, %s175
      %p182 = scmp.eq.s32.totalorder %s39, 1
      %p183 = por %p181, %p182
      %p184 = scmp.ne.s32.totalorder %s175, %s176
      %p185 = scmp.eq.s32.totalorder %s39, 0
      %p186 = por %p184, %p185
      %p187 = scmp.ne.s32.totalorder %s175, %s176
      %p188 = scmp.eq.s32.totalorder %s40, 1
      %p189 = por %p187, %p188
      %p191 = scmp.ne.s32.totalorder %s176, %s190
      %p192 = scmp.eq.s32.totalorder %s40, 0
      %p193 = por %p191, %p192
      %s195 = sadd.s32 %s194, 1
      %p198 = scmp.eq.s32.totalorder %s34, 1
      %p199 = scmp.ne.s32.totalorder %s194, %s196
      %p200 = scmp.eq.s32.totalorder %s34, 0
      %p201 = por %p199, %p200
      %p202 = scmp.ne.s32.totalorder %s194, %s196
      %p203 = scmp.eq.s32.totalorder %s39, 1
      %p204 = por %p202, %p203
      %p205 = scmp.ne.s32.totalorder %s196, %s197
      %p206 = scmp.eq.s32.totalorder %s39, 0
      %p207 = por %p205, %p206
      %p208 = scmp.ne.s32.totalorder %s196, %s197
      %p209 = scmp.eq.s32.totalorder %s40, 1
      %p210 = por %p208, %p209
      %p212 = scmp.ne.s32.totalorder %s197, %s211
      %p213 = scmp.eq.s32.totalorder %s40, 0
      %p214 = por %p212, %p213
      %s216 = sadd.s32 %s215, 1
      %p219 = scmp.eq.s32.totalorder %s34, 1
      %p220 = scmp.ne.s32.totalorder %s215, %s217
      %p221 = scmp.eq.s32.totalorder %s34, 0
      %p222 = por %p220, %p221
      %p223 = scmp.ne.s32.totalorder %s215, %s217
      %p224 = scmp.eq.s32.totalorder %s39, 1
      %p225 = por %p223, %p224
      %p226 = scmp.ne.s32.totalorder %s217, %s218
      %p227 = scmp.eq.s32.totalorder %s39, 0
      %p228 = por %p226, %p227
      %p229 = scmp.ne.s32.totalorder %s217, %s218
      %p230 = scmp.eq.s32.totalorder %s40, 1
      %p231 = por %p229, %p230
      %p233 = scmp.ne.s32.totalorder %s218, %s232
      %p234 = scmp.eq.s32.totalorder %s40, 0
      %p235 = por %p233, %p234
      %s237 = sadd.s32 %s236, 1
      %p240 = scmp.eq.s32.totalorder %s34, 1
      %p241 = scmp.ne.s32.totalorder %s236, %s238
      %p242 = scmp.eq.s32.totalorder %s34, 0
      %p243 = por %p241, %p242
      %p244 = scmp.ne.s32.totalorder %s236, %s238
      %p245 = scmp.eq.s32.totalorder %s39, 1
      %p246 = por %p244, %p245
      %p247 = scmp.ne.s32.totalorder %s238, %s239
      %p248 = scmp.eq.s32.totalorder %s39, 0
      %p249 = por %p247, %p248
      %p250 = scmp.ne.s32.totalorder %s238, %s239
      %p251 = scmp.eq.s32.totalorder %s40, 1
      %p252 = por %p250, %p251
      %p254 = scmp.ne.s32.totalorder %s239, %s253
      %p255 = scmp.eq.s32.totalorder %s40, 0
      %p256 = por %p254, %p255
      %s258 = sadd.s32 %s257, 1
      %p261 = scmp.eq.s32.totalorder %s34, 1
      %p262 = scmp.ne.s32.totalorder %s257, %s259
      %p263 = scmp.eq.s32.totalorder %s34, 0
      %p264 = por %p262, %p263
      %p265 = scmp.ne.s32.totalorder %s257, %s259
      %p266 = scmp.eq.s32.totalorder %s39, 1
      %p267 = por %p265, %p266
      %p268 = scmp.ne.s32.totalorder %s259, %s260
      %p269 = scmp.eq.s32.totalorder %s39, 0
      %p270 = por %p268, %p269
      %p271 = scmp.ne.s32.totalorder %s259, %s260
      %p272 = scmp.eq.s32.totalorder %s40, 1
      %p273 = por %p271, %p272
      %p275 = scmp.ne.s32.totalorder %s260, %s274
      %p276 = scmp.eq.s32.totalorder %s40, 0
      %p277 = por %p275, %p276
      %s279 = sadd.s32 %s278, 1
      %p282 = scmp.eq.s32.totalorder %s34, 1
      %p283 = scmp.ne.s32.totalorder %s278, %s280
      %p284 = scmp.eq.s32.totalorder %s34, 0
      %p285 = por %p283, %p284
      %p286 = scmp.ne.s32.totalorder %s278, %s280
      %p287 = scmp.eq.s32.totalorder %s39, 1
      %p288 = por %p286, %p287
      %p289 = scmp.ne.s32.totalorder %s280, %s281
      %p290 = scmp.eq.s32.totalorder %s39, 0
      %p291 = por %p289, %p290
      %p292 = scmp.ne.s32.totalorder %s280, %s281
      %p293 = scmp.eq.s32.totalorder %s40, 1
      %p294 = por %p292, %p293
      %p296 = scmp.ne.s32.totalorder %s281, %s295
      %p297 = scmp.eq.s32.totalorder %s40, 0
      %p298 = por %p296, %p297
      %s300 = sadd.s32 %s299, 1
      %p303 = scmp.eq.s32.totalorder %s34, 1
      %p304 = scmp.ne.s32.totalorder %s299, %s301
      %p305 = scmp.eq.s32.totalorder %s34, 0
      %p306 = por %p304, %p305
      %p307 = scmp.ne.s32.totalorder %s299, %s301
      %p308 = scmp.eq.s32.totalorder %s39, 1
      %p309 = por %p307, %p308
      %p310 = scmp.ne.s32.totalorder %s301, %s302
      %p311 = scmp.eq.s32.totalorder %s39, 0
      %p312 = por %p310, %p311
      %p313 = scmp.ne.s32.totalorder %s301, %s302
      %p314 = scmp.eq.s32.totalorder %s40, 1
      %p315 = por %p313, %p314
      %p317 = scmp.ne.s32.totalorder %s302, %s316
      %p318 = scmp.eq.s32.totalorder %s40, 0
      %p319 = por %p317, %p318
      %s321 = sadd.s32 %s320, 1
      %p324 = scmp.eq.s32.totalorder %s34, 1
      %p325 = scmp.ne.s32.totalorder %s320, %s322
      %p326 = scmp.eq.s32.totalorder %s34, 0
      %p327 = por %p325, %p326
      %p328 = scmp.ne.s32.totalorder %s320, %s322
      %p329 = scmp.eq.s32.totalorder %s39, 1
      %p330 = por %p328, %p329
      %p331 = scmp.ne.s32.totalorder %s322, %s323
      %p332 = scmp.eq.s32.totalorder %s39, 0
      %p333 = por %p331, %p332
      %p334 = scmp.ne.s32.totalorder %s322, %s323
      %p335 = scmp.eq.s32.totalorder %s40, 1
      %p336 = por %p334, %p335
      %p338 = scmp.ne.s32.totalorder %s323, %s337
      %p339 = scmp.eq.s32.totalorder %s40, 0
      %p340 = por %p338, %p339
      %s342 = sadd.s32 %s341, 1
      %p345 = scmp.eq.s32.totalorder %s34, 1
      %p346 = scmp.ne.s32.totalorder %s341, %s343
      %p347 = scmp.eq.s32.totalorder %s34, 0
      %p348 = por %p346, %p347
      %p349 = scmp.ne.s32.totalorder %s341, %s343
      %p350 = scmp.eq.s32.totalorder %s39, 1
      %p351 = por %p349, %p350
      %p352 = scmp.ne.s32.totalorder %s343, %s344
      %p353 = scmp.eq.s32.totalorder %s39, 0
      %p354 = por %p352, %p353
      %p355 = scmp.ne.s32.totalorder %s343, %s344
      %p356 = scmp.eq.s32.totalorder %s40, 1
      %p357 = por %p355, %p356
      %p359 = scmp.ne.s32.totalorder %s344, %s358
      %p360 = scmp.eq.s32.totalorder %s40, 0
      %p361 = por %p359, %p360
      %s363 = sadd.s32 %s362, 1
      %p366 = scmp.eq.s32.totalorder %s34, 1
      %p367 = scmp.ne.s32.totalorder %s362, %s364
      %p368 = scmp.eq.s32.totalorder %s34, 0
      %p369 = por %p367, %p368
      %p370 = scmp.ne.s32.totalorder %s362, %s364
      %p371 = scmp.eq.s32.totalorder %s39, 1
      %p372 = por %p370, %p371
      %p373 = scmp.ne.s32.totalorder %s364, %s365
      %p374 = scmp.eq.s32.totalorder %s39, 0
      %p375 = por %p373, %p374
      %p376 = scmp.ne.s32.totalorder %s364, %s365
      %p377 = scmp.eq.s32.totalorder %s40, 1
      %p378 = por %p376, %p377
      %p380 = scmp.ne.s32.totalorder %s365, %s379
      %p381 = scmp.eq.s32.totalorder %s40, 0
      %p382 = por %p380, %p381
      %s384 = sadd.s32 %s383, 1
      %p387 = scmp.eq.s32.totalorder %s34, 1
      %p388 = scmp.ne.s32.totalorder %s383, %s385
      %p389 = scmp.eq.s32.totalorder %s34, 0
      %p390 = por %p388, %p389
      %p391 = scmp.ne.s32.totalorder %s383, %s385
      %p392 = scmp.eq.s32.totalorder %s39, 1
      %p393 = por %p391, %p392
      %p394 = scmp.ne.s32.totalorder %s385, %s386
      %p395 = scmp.eq.s32.totalorder %s39, 0
      %p396 = por %p394, %p395
      %p397 = scmp.ne.s32.totalorder %s385, %s386
      %p398 = scmp.eq.s32.totalorder %s40, 1
      %p399 = por %p397, %p398
      %p401 = scmp.ne.s32.totalorder %s386, %s400
      %p402 = scmp.eq.s32.totalorder %s40, 0
      %p403 = por %p401, %p402
      %s405 = sadd.s32 %s404, 1
      %p408 = scmp.eq.s32.totalorder %s34, 1
      %p409 = scmp.ne.s32.totalorder %s404, %s406
      %p410 = scmp.eq.s32.totalorder %s34, 0
      %p411 = por %p409, %p410
      %p412 = scmp.ne.s32.totalorder %s404, %s406
      %p413 = scmp.eq.s32.totalorder %s39, 1
      %p414 = por %p412, %p413
      %p415 = scmp.ne.s32.totalorder %s406, %s407
      %p416 = scmp.eq.s32.totalorder %s39, 0
      %p417 = por %p415, %p416
      %p418 = scmp.ne.s32.totalorder %s406, %s407
      %p419 = scmp.eq.s32.totalorder %s40, 1
      %p420 = por %p418, %p419
      %p422 = scmp.ne.s32.totalorder %s407, %s421
      %p423 = scmp.eq.s32.totalorder %s40, 0
      %p424 = por %p422, %p423
      %s426 = sadd.s32 %s425, 1
      %p429 = scmp.eq.s32.totalorder %s34, 1
      %p430 = scmp.ne.s32.totalorder %s425, %s427
      %p431 = scmp.eq.s32.totalorder %s34, 0
      %p432 = por %p430, %p431
      %p433 = scmp.ne.s32.totalorder %s425, %s427
      %p434 = scmp.eq.s32.totalorder %s39, 1
      %p435 = por %p433, %p434
      %p436 = scmp.ne.s32.totalorder %s427, %s428
      %p437 = scmp.eq.s32.totalorder %s39, 0
      %p438 = por %p436, %p437
      %p439 = scmp.ne.s32.totalorder %s427, %s428
      %p440 = scmp.eq.s32.totalorder %s40, 1
      %p441 = por %p439, %p440
      %p443 = scmp.ne.s32.totalorder %s428, %s442
      %p444 = scmp.eq.s32.totalorder %s40, 0
      %p445 = por %p443, %p444
      %s447 = sadd.s32 %s446, 1
      %p450 = scmp.eq.s32.totalorder %s34, 1
      %p451 = scmp.ne.s32.totalorder %s446, %s448
      %p452 = scmp.eq.s32.totalorder %s34, 0
      %p453 = por %p451, %p452
      %p454 = scmp.ne.s32.totalorder %s446, %s448
      %p455 = scmp.eq.s32.totalorder %s39, 1
      %p456 = por %p454, %p455
      %p457 = scmp.ne.s32.totalorder %s448, %s449
      %p458 = scmp.eq.s32.totalorder %s39, 0
      %p459 = por %p457, %p458
      %p460 = scmp.ne.s32.totalorder %s448, %s449
      %p461 = scmp.eq.s32.totalorder %s40, 1
      %p462 = por %p460, %p461
      %p464 = scmp.ne.s32.totalorder %s449, %s463
      %p465 = scmp.eq.s32.totalorder %s40, 0
      %p466 = por %p464, %p465
      %s468 = sadd.s32 %s467, 1
      %p471 = scmp.eq.s32.totalorder %s34, 1
      %p472 = scmp.ne.s32.totalorder %s467, %s469
      %p473 = scmp.eq.s32.totalorder %s34, 0
      %p474 = por %p472, %p473
      %p475 = scmp.ne.s32.totalorder %s467, %s469
      %p476 = scmp.eq.s32.totalorder %s39, 1
      %p477 = por %p475, %p476
      %p478 = scmp.ne.s32.totalorder %s469, %s470
      %p479 = scmp.eq.s32.totalorder %s39, 0
      %p480 = por %p478, %p479
      %p481 = scmp.ne.s32.totalorder %s469, %s470
      %p482 = scmp.eq.s32.totalorder %s40, 1
      %p483 = por %p481, %p482
      %p485 = scmp.ne.s32.totalorder %s470, %s484
      %p486 = scmp.eq.s32.totalorder %s40, 0
      %p487 = por %p485, %p486
      %s489 = sadd.s32 %s488, 1
      %p492 = scmp.eq.s32.totalorder %s34, 1
      %p493 = scmp.ne.s32.totalorder %s488, %s490
      %p494 = scmp.eq.s32.totalorder %s34, 0
      %p495 = por %p493, %p494
      %p496 = scmp.ne.s32.totalorder %s488, %s490
      %p497 = scmp.eq.s32.totalorder %s39, 1
      %p498 = por %p496, %p497
      %p499 = scmp.ne.s32.totalorder %s490, %s491
      %p500 = scmp.eq.s32.totalorder %s39, 0
      %p501 = por %p499, %p500
      %p502 = scmp.ne.s32.totalorder %s490, %s491
      %p503 = scmp.eq.s32.totalorder %s40, 1
      %p504 = por %p502, %p503
      %p506 = scmp.ne.s32.totalorder %s491, %s505
      %p507 = scmp.eq.s32.totalorder %s40, 0
      %p508 = por %p506, %p507
      %s510 = sadd.s32 %s509, 1
      %p513 = scmp.eq.s32.totalorder %s34, 1
      %p514 = scmp.ne.s32.totalorder %s509, %s511
      %p515 = scmp.eq.s32.totalorder %s34, 0
      %p516 = por %p514, %p515
      %p517 = scmp.ne.s32.totalorder %s509, %s511
      %p518 = scmp.eq.s32.totalorder %s39, 1
      %p519 = por %p517, %p518
      %p520 = scmp.ne.s32.totalorder %s511, %s512
      %p521 = scmp.eq.s32.totalorder %s39, 0
      %p522 = por %p520, %p521
      %p523 = scmp.ne.s32.totalorder %s511, %s512
      %p524 = scmp.eq.s32.totalorder %s40, 1
      %p525 = por %p523, %p524
      %p527 = scmp.ne.s32.totalorder %s512, %s526
      %p528 = scmp.eq.s32.totalorder %s40, 0
      %p529 = por %p527, %p528
      %s531 = sadd.s32 %s530, 1
      %p534 = scmp.eq.s32.totalorder %s34, 1
      %p535 = scmp.ne.s32.totalorder %s530, %s532
      %p536 = scmp.eq.s32.totalorder %s34, 0
      %p537 = por %p535, %p536
      %p538 = scmp.ne.s32.totalorder %s530, %s532
      %p539 = scmp.eq.s32.totalorder %s39, 1
      %p540 = por %p538, %p539
      %p541 = scmp.ne.s32.totalorder %s532, %s533
      %p542 = scmp.eq.s32.totalorder %s39, 0
      %p543 = por %p541, %p542
      %p544 = scmp.ne.s32.totalorder %s532, %s533
      %p545 = scmp.eq.s32.totalorder %s40, 1
      %p546 = por %p544, %p545
      %p548 = scmp.ne.s32.totalorder %s533, %s547
      %p549 = scmp.eq.s32.totalorder %s40, 0
      %p550 = por %p548, %p549
      %s552 = sadd.s32 %s551, 1
      %p555 = scmp.eq.s32.totalorder %s34, 1
      %p556 = scmp.ne.s32.totalorder %s551, %s553
      %p557 = scmp.eq.s32.totalorder %s34, 0
      %p558 = por %p556, %p557
      %p559 = scmp.ne.s32.totalorder %s551, %s553
      %p560 = scmp.eq.s32.totalorder %s39, 1
      %p561 = por %p559, %p560
      %p562 = scmp.ne.s32.totalorder %s553, %s554
      %p563 = scmp.eq.s32.totalorder %s39, 0
      %p564 = por %p562, %p563
      %p565 = scmp.ne.s32.totalorder %s553, %s554
      %p566 = scmp.eq.s32.totalorder %s40, 1
      %p567 = por %p565, %p566
      %p569 = scmp.ne.s32.totalorder %s554, %s568
      %p570 = scmp.eq.s32.totalorder %s40, 0
      %p571 = por %p569, %p570
      %s572 = ssub.s32 %s34, %s41
      %p573 = scmp.eq.s32.totalorder %s572, 0
      %s575 = sadd.s32 %s574, 1
      %s576 = scalar_select %p573, %s574, %s575
      %p579 = pneg %p573
      %p580 = scmp.eq.s32.totalorder %s34, 1
      %p581 = por %p579, %p580
      %p582 = scmp.ne.s32.totalorder %s574, %s577
      %p583 = scmp.eq.s32.totalorder %s34, 0
      %p584 = por %p582, %p583
      %p585 = scmp.ne.s32.totalorder %s574, %s577
      %p586 = scmp.eq.s32.totalorder %s39, 1
      %p587 = por %p585, %p586
      %p588 = scmp.ne.s32.totalorder %s577, %s578
      %p589 = scmp.eq.s32.totalorder %s39, 0
      %p590 = por %p588, %p589
      %p591 = scmp.ne.s32.totalorder %s577, %s578
      %p592 = scmp.eq.s32.totalorder %s40, 1
      %p593 = por %p591, %p592
      %p595 = scmp.ne.s32.totalorder %s578, %s594
      %p596 = scmp.eq.s32.totalorder %s40, 0
      %p597 = por %p595, %p596
      %p598 = scmp.le.s32.totalorder 1, %s34
      %p599 = scmp.lt.s32.totalorder %s34, 3
      %p600 = pnand %p598, %p599
      %p601 = pneg %p600
      // Predicated region
      $region9: #{tpu_custom_call.1} parent=5 // pred_check
        _
      $region10: #{tpu_custom_call.1} parent=5 // pred_check_branch
        %603 = sbr.rel (%p600) target = $region12
      $region11: #{tpu_custom_call.1} parent=5 // pred_region
        %s604 = ssub.s32 %s34, 1
        // Predicated region
        $region13: #{tpu_custom_call.1} parent=11 // pred_check
          %p605 = pneg %p81
        $region14: #{tpu_custom_call.1} parent=11 // pred_check_branch
          %607 = sbr.rel (%p605) target = $region16
        $region15: #{tpu_custom_call.1} parent=11 // pred_region
          _
        $region16: #{tpu_custom_call.1} parent=11 // pred_fallthru
          _
        // Predicated region
        $region17: #{tpu_custom_call.1} parent=11 // pred_check
          %p608 = pneg %p102
        $region18: #{tpu_custom_call.1} parent=11 // pred_check_branch
          %610 = sbr.rel (%p608) target = $region20
        $region19: #{tpu_custom_call.1} parent=11 // pred_region
          _
        $region20: #{tpu_custom_call.1} parent=11 // pred_fallthru
          _
        // Predicated region
        $region21: #{tpu_custom_call.1} parent=11 // pred_check
          %p611 = pneg %p123
        $region22: #{tpu_custom_call.1} parent=11 // pred_check_branch
          %613 = sbr.rel (%p611) target = $region24
        $region23: #{tpu_custom_call.1} parent=11 // pred_region
          _
        $region24: #{tpu_custom_call.1} parent=11 // pred_fallthru
          _
        // Predicated region
        $region25: #{tpu_custom_call.1} parent=11 // pred_check
          %p614 = pneg %p144
        $region26: #{tpu_custom_call.1} parent=11 // pred_check_branch
          %616 = sbr.rel (%p614) target = $region28
        $region27: #{tpu_custom_call.1} parent=11 // pred_region
          _
        $region28: #{tpu_custom_call.1} parent=11 // pred_fallthru
          _
        // Predicated region
        $region29: #{tpu_custom_call.1} parent=11 // pred_check
          %p617 = pneg %p165
        $region30: #{tpu_custom_call.1} parent=11 // pred_check_branch
          %619 = sbr.rel (%p617) target = $region32
        $region31: #{tpu_custom_call.1} parent=11 // pred_region
          _
        $region32: #{tpu_custom_call.1} parent=11 // pred_fallthru
          _
        // Predicated region
        $region33: #{tpu_custom_call.1} parent=11 // pred_check
          %p620 = pneg %p186
        $region34: #{tpu_custom_call.1} parent=11 // pred_check_branch
          %622 = sbr.rel (%p620) target = $region36
        $region35: #{tpu_custom_call.1} parent=11 // pred_region
          _
        $region36: #{tpu_custom_call.1} parent=11 // pred_fallthru
          _
        // Predicated region
        $region37: #{tpu_custom_call.1} parent=11 // pred_check
          %p623 = pneg %p207
        $region38: #{tpu_custom_call.1} parent=11 // pred_check_branch
          %625 = sbr.rel (%p623) target = $region40
        $region39: #{tpu_custom_call.1} parent=11 // pred_region
          _
        $region40: #{tpu_custom_call.1} parent=11 // pred_fallthru
          _
        // Predicated region
        $region41: #{tpu_custom_call.1} parent=11 // pred_check
          %p626 = pneg %p228
        $region42: #{tpu_custom_call.1} parent=11 // pred_check_branch
          %628 = sbr.rel (%p626) target = $region44
        $region43: #{tpu_custom_call.1} parent=11 // pred_region
          _
        $region44: #{tpu_custom_call.1} parent=11 // pred_fallthru
          _
        // Predicated region
        $region45: #{tpu_custom_call.1} parent=11 // pred_check
          %p629 = pneg %p249
        $region46: #{tpu_custom_call.1} parent=11 // pred_check_branch
          %631 = sbr.rel (%p629) target = $region48
        $region47: #{tpu_custom_call.1} parent=11 // pred_region
          _
        $region48: #{tpu_custom_call.1} parent=11 // pred_fallthru
          _
        // Predicated region
        $region49: #{tpu_custom_call.1} parent=11 // pred_check
          %p632 = pneg %p270
        $region50: #{tpu_custom_call.1} parent=11 // pred_check_branch
          %634 = sbr.rel (%p632) target = $region52
        $region51: #{tpu_custom_call.1} parent=11 // pred_region
          _
        $region52: #{tpu_custom_call.1} parent=11 // pred_fallthru
          _
        // Predicated region
        $region53: #{tpu_custom_call.1} parent=11 // pred_check
          %p635 = pneg %p291
        $region54: #{tpu_custom_call.1} parent=11 // pred_check_branch
          %637 = sbr.rel (%p635) target = $region56
        $region55: #{tpu_custom_call.1} parent=11 // pred_region
          _
        $region56: #{tpu_custom_call.1} parent=11 // pred_fallthru
          _
        // Predicated region
        $region57: #{tpu_custom_call.1} parent=11 // pred_check
          %p638 = pneg %p312
        $region58: #{tpu_custom_call.1} parent=11 // pred_check_branch
          %640 = sbr.rel (%p638) target = $region60
        $region59: #{tpu_custom_call.1} parent=11 // pred_region
          _
        $region60: #{tpu_custom_call.1} parent=11 // pred_fallthru
          _
        // Predicated region
        $region61: #{tpu_custom_call.1} parent=11 // pred_check
          %p641 = pneg %p333
        $region62: #{tpu_custom_call.1} parent=11 // pred_check_branch
          %643 = sbr.rel (%p641) target = $region64
        $region63: #{tpu_custom_call.1} parent=11 // pred_region
          _
        $region64: #{tpu_custom_call.1} parent=11 // pred_fallthru
          _
        // Predicated region
        $region65: #{tpu_custom_call.1} parent=11 // pred_check
          %p644 = pneg %p354
        $region66: #{tpu_custom_call.1} parent=11 // pred_check_branch
          %646 = sbr.rel (%p644) target = $region68
        $region67: #{tpu_custom_call.1} parent=11 // pred_region
          _
        $region68: #{tpu_custom_call.1} parent=11 // pred_fallthru
          _
        // Predicated region
        $region69: #{tpu_custom_call.1} parent=11 // pred_check
          %p647 = pneg %p375
        $region70: #{tpu_custom_call.1} parent=11 // pred_check_branch
          %649 = sbr.rel (%p647) target = $region72
        $region71: #{tpu_custom_call.1} parent=11 // pred_region
          _
        $region72: #{tpu_custom_call.1} parent=11 // pred_fallthru
          _
        // Predicated region
        $region73: #{tpu_custom_call.1} parent=11 // pred_check
          %p650 = pneg %p396
        $region74: #{tpu_custom_call.1} parent=11 // pred_check_branch
          %652 = sbr.rel (%p650) target = $region76
        $region75: #{tpu_custom_call.1} parent=11 // pred_region
          _
        $region76: #{tpu_custom_call.1} parent=11 // pred_fallthru
          _
        // Predicated region
        $region77: #{tpu_custom_call.1} parent=11 // pred_check
          %p653 = pneg %p417
        $region78: #{tpu_custom_call.1} parent=11 // pred_check_branch
          %655 = sbr.rel (%p653) target = $region80
        $region79: #{tpu_custom_call.1} parent=11 // pred_region
          _
        $region80: #{tpu_custom_call.1} parent=11 // pred_fallthru
          _
        // Predicated region
        $region81: #{tpu_custom_call.1} parent=11 // pred_check
          %p656 = pneg %p438
        $region82: #{tpu_custom_call.1} parent=11 // pred_check_branch
          %658 = sbr.rel (%p656) target = $region84
        $region83: #{tpu_custom_call.1} parent=11 // pred_region
          _
        $region84: #{tpu_custom_call.1} parent=11 // pred_fallthru
          _
        // Predicated region
        $region85: #{tpu_custom_call.1} parent=11 // pred_check
          %p659 = pneg %p459
        $region86: #{tpu_custom_call.1} parent=11 // pred_check_branch
          %661 = sbr.rel (%p659) target = $region88
        $region87: #{tpu_custom_call.1} parent=11 // pred_region
          _
        $region88: #{tpu_custom_call.1} parent=11 // pred_fallthru
          _
        // Predicated region
        $region89: #{tpu_custom_call.1} parent=11 // pred_check
          %p662 = pneg %p480
        $region90: #{tpu_custom_call.1} parent=11 // pred_check_branch
          %664 = sbr.rel (%p662) target = $region92
        $region91: #{tpu_custom_call.1} parent=11 // pred_region
          _
        $region92: #{tpu_custom_call.1} parent=11 // pred_fallthru
          _
        // Predicated region
        $region93: #{tpu_custom_call.1} parent=11 // pred_check
          %p665 = pneg %p501
        $region94: #{tpu_custom_call.1} parent=11 // pred_check_branch
          %667 = sbr.rel (%p665) target = $region96
        $region95: #{tpu_custom_call.1} parent=11 // pred_region
          _
        $region96: #{tpu_custom_call.1} parent=11 // pred_fallthru
          _
        // Predicated region
        $region97: #{tpu_custom_call.1} parent=11 // pred_check
          %p668 = pneg %p522
        $region98: #{tpu_custom_call.1} parent=11 // pred_check_branch
          %670 = sbr.rel (%p668) target = $region100
        $region99: #{tpu_custom_call.1} parent=11 // pred_region
          _
        $region100: #{tpu_custom_call.1} parent=11 // pred_fallthru
          _
        // Predicated region
        $region101: #{tpu_custom_call.1} parent=11 // pred_check
          %p671 = pneg %p543
        $region102: #{tpu_custom_call.1} parent=11 // pred_check_branch
          %673 = sbr.rel (%p671) target = $region104
        $region103: #{tpu_custom_call.1} parent=11 // pred_region
          _
        $region104: #{tpu_custom_call.1} parent=11 // pred_fallthru
          _
        // Predicated region
        $region105: #{tpu_custom_call.1} parent=11 // pred_check
          %p674 = pneg %p564
        $region106: #{tpu_custom_call.1} parent=11 // pred_check_branch
          %676 = sbr.rel (%p674) target = $region108
        $region107: #{tpu_custom_call.1} parent=11 // pred_region
          _
        $region108: #{tpu_custom_call.1} parent=11 // pred_fallthru
          _
      $region12: #{tpu_custom_call.1} parent=5 // pred_fallthru
        _
      %p677 = scmp.lt.s32.totalorder %s34, 2
      // Predicated region
      $region109: #{tpu_custom_call.1} parent=5 // pred_check
        %p678 = pneg %p677
      $region110: #{tpu_custom_call.1} parent=5 // pred_check_branch
        %680 = sbr.rel (%p678) target = $region112
      $region111: #{tpu_custom_call.1} parent=5 // pred_region
        // Predicated region
        $region113: #{tpu_custom_call.1} parent=111 // pred_check
          %p681 = pneg %p54
        $region114: #{tpu_custom_call.1} parent=111 // pred_check_branch
          %683 = sbr.rel (%p681) target = $region116
        $region115: #{tpu_custom_call.1} parent=111 // pred_region
          %s684 = smul.u32 2, %s34
          %p685 = scmp.lt.s32.totalorder %s684, 3
          %s686 = scalar_select %p685, %s684, 3
          %s687 = smul.addr %s686, 20
          %s688 = smul.addr %s687, 8
          %s689 = scalar_lea.vmem %s0, %s688
          %s690 = smul.u32 2, %s34
        $region116: #{tpu_custom_call.1} parent=111 // pred_fallthru
          _
      $region112: #{tpu_custom_call.1} parent=5 // pred_fallthru
        _
      %p691 = scmp.le.s32.totalorder 1, %s34
      %p692 = scmp.lt.s32.totalorder %s34, 3
      %p693 = pnand %p691, %p692
      %p694 = pneg %p693
      // Predicated region
      $region117: #{tpu_custom_call.1} parent=5 // pred_check
        _
      $region118: #{tpu_custom_call.1} parent=5 // pred_check_branch
        %696 = sbr.rel (%p693) target = $region120
      $region119: #{tpu_custom_call.1} parent=5 // pred_region
        %s697 = ssub.s32 %s34, 1
        %s698 = smul.u32 2, %s39
        %p699 = scmp.lt.s32.totalorder %s698, 3
        %s700 = scalar_select %p699, %s698, 3
        %s701 = smul.addr %s700, 20
        %s702 = smul.addr %s701, 8
        %s703 = scalar_lea.vmem %s0, %s702
        %p704 = pneg %p60
        %p705 = pneg %p57
        %p706 = pneg %p81
        %p707 = pneg %p78
        %p708 = pneg %p102
        %p709 = pneg %p99
        %p710 = pneg %p123
        %p711 = pneg %p120
        %p712 = pneg %p144
        %p713 = pneg %p141
        %p714 = pneg %p165
        %p715 = pneg %p162
        %p716 = pneg %p186
        %p717 = pneg %p183
        %p718 = pneg %p207
        %p719 = pneg %p204
        %p720 = pneg %p228
        %p721 = pneg %p225
        %p722 = pneg %p249
        %p723 = pneg %p246
        %p724 = pneg %p270
        %p725 = pneg %p267
        %p726 = pneg %p291
        %p727 = pneg %p288
        %p728 = pneg %p312
        %p729 = pneg %p309
        %p730 = pneg %p333
        %p731 = pneg %p330
        %p732 = pneg %p354
        %p733 = pneg %p351
        %p734 = pneg %p375
        %p735 = pneg %p372
        %p736 = pneg %p396
        %p737 = pneg %p393
        %p738 = pneg %p417
        %p739 = pneg %p414
        %p740 = pneg %p438
        %p741 = pneg %p435
        %p742 = pneg %p459
        %p743 = pneg %p456
        %p744 = pneg %p480
        %p745 = pneg %p477
        %p746 = pneg %p501
        %p747 = pneg %p498
        %p748 = pneg %p522
        %p749 = pneg %p519
        %p750 = pneg %p543
        %p751 = pneg %p540
        %p752 = pneg %p564
        %p753 = pneg %p561
        %p754 = pneg %p590
        %p755 = pneg %p587
        %s756 = sand.u32 %s577, 1
        %s757 = scalar_lea.sflag [#allocation3], %s756
        %s758 = sand.u32 %s577, 1
        %s759 = smul.addr %s758, 128
        %s760 = scalar_lea.vmem [#allocation2], %s759
        %s761 = smul.u32 2, %s39
        %p762 = scmp.lt.s32.totalorder %s761, 3
        %s763 = scalar_select %p762, %s761, 3
        %s764 = smul.addr %s763, 20
        %s765 = smul.addr %s764, 8
        %s766 = scalar_lea.vmem %s0, %s765
        %s767 = smul.u32 2, %s39
        %s768 = smul.u32 2, %s39
        %v770 = vld [vmem:[%s1] sm:$0xff]
        %v771 = vld [vmem:[%s1 + $0x8] sm:$0x1]
        %v772 = vld [vmem:[%s766] sm:$0xff]
        %v773 = vld [vmem:[%s766 + $0x10] sm:$0xff]
        %v774 = vld [vmem:[%s766 + $0x20] sm:$0xff]
        %v775 = vld [vmem:[%s766 + $0x30] sm:$0xff]
        %v776 = vld [vmem:[%s766 + $0x40] sm:$0xff]
        %v777 = vld [vmem:[%s766 + $0x50] sm:$0xff]
        %v778 = vld [vmem:[%s766 + $0x60] sm:$0xff]
        %v779 = vld [vmem:[%s766 + $0x70] sm:$0xff]
        %v780 = vld [vmem:[%s766 + $0xa0] sm:$0xff]
        %v781 = vld [vmem:[%s766 + $0xb0] sm:$0xff]
        %v782 = vld [vmem:[%s766 + $0xc0] sm:$0xff]
        %v783 = vld [vmem:[%s766 + $0xd0] sm:$0xff]
        %v784 = vld [vmem:[%s766 + $0xe0] sm:$0xff]
        %v785 = vld [vmem:[%s766 + $0xf0] sm:$0xff]
        %v786 = vld [vmem:[%s766 + $0x100] sm:$0xff]
        %v787 = vld [vmem:[%s766 + $0x110] sm:$0xff]
        %v788 = vlaneseq
        %v789 = vshrl.u32 %v788, 7
        %v790 = vsub.s32 0, %v789
        %v791 = vrot.slane %v770, %v790
        %v792 = vmul.f32 %v772, %v791
        %v793 = vmul.f32 %v773, %v791
        %v794 = vmul.f32 %v774, %v791
        %v795 = vmul.f32 %v775, %v791
        %v796 = vmul.f32 %v776, %v791
        %v797 = vmul.f32 %v777, %v791
        %v798 = vmul.f32 %v778, %v791
        %v799 = vmul.f32 %v779, %v791
        %v800 = vmul.f32 %v780, %v791
        %v801 = vmul.f32 %v781, %v791
        %v802 = vmul.f32 %v782, %v791
        %v803 = vmul.f32 %v783, %v791
        %v804 = vmul.f32 %v784, %v791
        %v805 = vmul.f32 %v785, %v791
        %v806 = vmul.f32 %v786, %v791
        %v807 = vmul.f32 %v787, %v791
        %v808 = vld [vmem:[%s766 + $0x1] sm:$0xff]
        %v809 = vld [vmem:[%s766 + $0x11] sm:$0xff]
        %v810 = vld [vmem:[%s766 + $0x21] sm:$0xff]
        %v811 = vld [vmem:[%s766 + $0x31] sm:$0xff]
        %v812 = vld [vmem:[%s766 + $0x41] sm:$0xff]
        %v813 = vld [vmem:[%s766 + $0x51] sm:$0xff]
        %v814 = vld [vmem:[%s766 + $0x61] sm:$0xff]
        %v815 = vld [vmem:[%s766 + $0x71] sm:$0xff]
        %v816 = vld [vmem:[%s766 + $0xa1] sm:$0xff]
        %v817 = vld [vmem:[%s766 + $0xb1] sm:$0xff]
        %v818 = vld [vmem:[%s766 + $0xc1] sm:$0xff]
        %v819 = vld [vmem:[%s766 + $0xd1] sm:$0xff]
        %v820 = vld [vmem:[%s766 + $0xe1] sm:$0xff]
        %v821 = vld [vmem:[%s766 + $0xf1] sm:$0xff]
        %v822 = vld [vmem:[%s766 + $0x101] sm:$0xff]
        %v823 = vld [vmem:[%s766 + $0x111] sm:$0xff]
        %v824 = vlaneseq
        %v825 = vshrl.u32 %v824, 7
        %v826 = vsub.s32 1, %v825
        %v827 = vrot.slane %v770, %v826
        %v828 = vmul.f32 %v808, %v827
        %v829 = vmul.f32 %v809, %v827
        %v830 = vmul.f32 %v810, %v827
        %v831 = vmul.f32 %v811, %v827
        %v832 = vmul.f32 %v812, %v827
        %v833 = vmul.f32 %v813, %v827
        %v834 = vmul.f32 %v814, %v827
        %v835 = vmul.f32 %v815, %v827
        %v836 = vmul.f32 %v816, %v827
        %v837 = vmul.f32 %v817, %v827
        %v838 = vmul.f32 %v818, %v827
        %v839 = vmul.f32 %v819, %v827
        %v840 = vmul.f32 %v820, %v827
        %v841 = vmul.f32 %v821, %v827
        %v842 = vmul.f32 %v822, %v827
        %v843 = vmul.f32 %v823, %v827
        %v844 = vadd.f32 %v792, %v828
        %v845 = vadd.f32 %v793, %v829
        %v846 = vadd.f32 %v794, %v830
        %v847 = vadd.f32 %v795, %v831
        %v848 = vadd.f32 %v796, %v832
        %v849 = vadd.f32 %v797, %v833
        %v850 = vadd.f32 %v798, %v834
        %v851 = vadd.f32 %v799, %v835
        %v852 = vadd.f32 %v800, %v836
        %v853 = vadd.f32 %v801, %v837
        %v854 = vadd.f32 %v802, %v838
        %v855 = vadd.f32 %v803, %v839
        %v856 = vadd.f32 %v804, %v840
        %v857 = vadd.f32 %v805, %v841
        %v858 = vadd.f32 %v806, %v842
        %v859 = vadd.f32 %v807, %v843
        %v860 = vld [vmem:[%s766 + $0x2] sm:$0xff]
        %v861 = vld [vmem:[%s766 + $0x12] sm:$0xff]
        %v862 = vld [vmem:[%s766 + $0x22] sm:$0xff]
        %v863 = vld [vmem:[%s766 + $0x32] sm:$0xff]
        %v864 = vld [vmem:[%s766 + $0x42] sm:$0xff]
        %v865 = vld [vmem:[%s766 + $0x52] sm:$0xff]
        %v866 = vld [vmem:[%s766 + $0x62] sm:$0xff]
        %v867 = vld [vmem:[%s766 + $0x72] sm:$0xff]
        %v868 = vld [vmem:[%s766 + $0xa2] sm:$0xff]
        %v869 = vld [vmem:[%s766 + $0xb2] sm:$0xff]
        %v870 = vld [vmem:[%s766 + $0xc2] sm:$0xff]
        %v871 = vld [vmem:[%s766 + $0xd2] sm:$0xff]
        %v872 = vld [vmem:[%s766 + $0xe2] sm:$0xff]
        %v873 = vld [vmem:[%s766 + $0xf2] sm:$0xff]
        %v874 = vld [vmem:[%s766 + $0x102] sm:$0xff]
        %v875 = vld [vmem:[%s766 + $0x112] sm:$0xff]
        %v876 = vlaneseq
        %v877 = vshrl.u32 %v876, 7
        %v878 = vsub.s32 2, %v877
        %v879 = vrot.slane %v770, %v878
        %v880 = vmul.f32 %v860, %v879
        %v881 = vmul.f32 %v861, %v879
        %v882 = vmul.f32 %v862, %v879
        %v883 = vmul.f32 %v863, %v879
        %v884 = vmul.f32 %v864, %v879
        %v885 = vmul.f32 %v865, %v879
        %v886 = vmul.f32 %v866, %v879
        %v887 = vmul.f32 %v867, %v879
        %v888 = vmul.f32 %v868, %v879
        %v889 = vmul.f32 %v869, %v879
        %v890 = vmul.f32 %v870, %v879
        %v891 = vmul.f32 %v871, %v879
        %v892 = vmul.f32 %v872, %v879
        %v893 = vmul.f32 %v873, %v879
        %v894 = vmul.f32 %v874, %v879
        %v895 = vmul.f32 %v875, %v879
        %v896 = vadd.f32 %v844, %v880
        %v897 = vadd.f32 %v845, %v881
        %v898 = vadd.f32 %v846, %v882
        %v899 = vadd.f32 %v847, %v883
        %v900 = vadd.f32 %v848, %v884
        %v901 = vadd.f32 %v849, %v885
        %v902 = vadd.f32 %v850, %v886
        %v903 = vadd.f32 %v851, %v887
        %v904 = vadd.f32 %v852, %v888
        %v905 = vadd.f32 %v853, %v889
        %v906 = vadd.f32 %v854, %v890
        %v907 = vadd.f32 %v855, %v891
        %v908 = vadd.f32 %v856, %v892
        %v909 = vadd.f32 %v857, %v893
        %v910 = vadd.f32 %v858, %v894
        %v911 = vadd.f32 %v859, %v895
        %s912 = scalar_lea.vmem %s766, 16
        %v913 = vld [vmem:[%s912] sm:$0xff]
        %v914 = vld [vmem:[%s912 + $0x10] sm:$0xff]
        %v915 = vld [vmem:[%s912 + $0x20] sm:$0xff]
        %v916 = vld [vmem:[%s912 + $0x30] sm:$0xff]
        %v917 = vld [vmem:[%s912 + $0x40] sm:$0xff]
        %v918 = vld [vmem:[%s912 + $0x50] sm:$0xff]
        %v919 = vld [vmem:[%s912 + $0x60] sm:$0xff]
        %v920 = vld [vmem:[%s912 + $0x70] sm:$0xff]
        %v921 = vld [vmem:[%s912 + $0xa0] sm:$0xff]
        %v922 = vld [vmem:[%s912 + $0xb0] sm:$0xff]
        %v923 = vld [vmem:[%s912 + $0xc0] sm:$0xff]
        %v924 = vld [vmem:[%s912 + $0xd0] sm:$0xff]
        %v925 = vld [vmem:[%s912 + $0xe0] sm:$0xff]
        %v926 = vld [vmem:[%s912 + $0xf0] sm:$0xff]
        %v927 = vld [vmem:[%s912 + $0x100] sm:$0xff]
        %v928 = vld [vmem:[%s912 + $0x110] sm:$0xff]
        %v929 = vlaneseq
        %v930 = vshrl.u32 %v929, 7
        %v931 = vsub.s32 3, %v930
        %v932 = vrot.slane %v770, %v931
        %v933 = vmul.f32 %v913, %v932
        %v934 = vmul.f32 %v914, %v932
        %v935 = vmul.f32 %v915, %v932
        %v936 = vmul.f32 %v916, %v932
        %v937 = vmul.f32 %v917, %v932
        %v938 = vmul.f32 %v918, %v932
        %v939 = vmul.f32 %v919, %v932
        %v940 = vmul.f32 %v920, %v932
        %v941 = vmul.f32 %v921, %v932
        %v942 = vmul.f32 %v922, %v932
        %v943 = vmul.f32 %v923, %v932
        %v944 = vmul.f32 %v924, %v932
        %v945 = vmul.f32 %v925, %v932
        %v946 = vmul.f32 %v926, %v932
        %v947 = vmul.f32 %v927, %v932
        %v948 = vmul.f32 %v928, %v932
        %v949 = vadd.f32 %v896, %v933
        %v950 = vadd.f32 %v897, %v934
        %v951 = vadd.f32 %v898, %v935
        %v952 = vadd.f32 %v899, %v936
        %v953 = vadd.f32 %v900, %v937
        %v954 = vadd.f32 %v901, %v938
        %v955 = vadd.f32 %v902, %v939
        %v956 = vadd.f32 %v903, %v940
        %v957 = vadd.f32 %v904, %v941
        %v958 = vadd.f32 %v905, %v942
        %v959 = vadd.f32 %v906, %v943
        %v960 = vadd.f32 %v907, %v944
        %v961 = vadd.f32 %v908, %v945
        %v962 = vadd.f32 %v909, %v946
        %v963 = vadd.f32 %v910, %v947
        %v964 = vadd.f32 %v911, %v948
        %v965 = vld [vmem:[%s912 + $0x1] sm:$0xff]
        %v966 = vld [vmem:[%s912 + $0x11] sm:$0xff]
        %v967 = vld [vmem:[%s912 + $0x21] sm:$0xff]
        %v968 = vld [vmem:[%s912 + $0x31] sm:$0xff]
        %v969 = vld [vmem:[%s912 + $0x41] sm:$0xff]
        %v970 = vld [vmem:[%s912 + $0x51] sm:$0xff]
        %v971 = vld [vmem:[%s912 + $0x61] sm:$0xff]
        %v972 = vld [vmem:[%s912 + $0x71] sm:$0xff]
        %v973 = vld [vmem:[%s912 + $0xa1] sm:$0xff]
        %v974 = vld [vmem:[%s912 + $0xb1] sm:$0xff]
        %v975 = vld [vmem:[%s912 + $0xc1] sm:$0xff]
        %v976 = vld [vmem:[%s912 + $0xd1] sm:$0xff]
        %v977 = vld [vmem:[%s912 + $0xe1] sm:$0xff]
        %v978 = vld [vmem:[%s912 + $0xf1] sm:$0xff]
        %v979 = vld [vmem:[%s912 + $0x101] sm:$0xff]
        %v980 = vld [vmem:[%s912 + $0x111] sm:$0xff]
        %v981 = vlaneseq
        %v982 = vshrl.u32 %v981, 7
        %v983 = vsub.s32 4, %v982
        %v984 = vrot.slane %v770, %v983
        %v985 = vmul.f32 %v965, %v984
        %v986 = vmul.f32 %v966, %v984
        %v987 = vmul.f32 %v967, %v984
        %v988 = vmul.f32 %v968, %v984
        %v989 = vmul.f32 %v969, %v984
        %v990 = vmul.f32 %v970, %v984
        %v991 = vmul.f32 %v971, %v984
        %v992 = vmul.f32 %v972, %v984
        %v993 = vmul.f32 %v973, %v984
        %v994 = vmul.f32 %v974, %v984
        %v995 = vmul.f32 %v975, %v984
        %v996 = vmul.f32 %v976, %v984
        %v997 = vmul.f32 %v977, %v984
        %v998 = vmul.f32 %v978, %v984
        %v999 = vmul.f32 %v979, %v984
        %v1000 = vmul.f32 %v980, %v984
        %v1001 = vadd.f32 %v949, %v985
        %v1002 = vadd.f32 %v950, %v986
        %v1003 = vadd.f32 %v951, %v987
        %v1004 = vadd.f32 %v952, %v988
        %v1005 = vadd.f32 %v953, %v989
        %v1006 = vadd.f32 %v954, %v990
        %v1007 = vadd.f32 %v955, %v991
        %v1008 = vadd.f32 %v956, %v992
        %v1009 = vadd.f32 %v957, %v993
        %v1010 = vadd.f32 %v958, %v994
        %v1011 = vadd.f32 %v959, %v995
        %v1012 = vadd.f32 %v960, %v996
        %v1013 = vadd.f32 %v961, %v997
        %v1014 = vadd.f32 %v962, %v998
        %v1015 = vadd.f32 %v963, %v999
        %v1016 = vadd.f32 %v964, %v1000
        %v1017 = vld [vmem:[%s912 + $0x2] sm:$0xff]
        %v1018 = vld [vmem:[%s912 + $0x12] sm:$0xff]
        %v1019 = vld [vmem:[%s912 + $0x22] sm:$0xff]
        %v1020 = vld [vmem:[%s912 + $0x32] sm:$0xff]
        %v1021 = vld [vmem:[%s912 + $0x42] sm:$0xff]
        %v1022 = vld [vmem:[%s912 + $0x52] sm:$0xff]
        %v1023 = vld [vmem:[%s912 + $0x62] sm:$0xff]
        %v1024 = vld [vmem:[%s912 + $0x72] sm:$0xff]
        %v1025 = vld [vmem:[%s912 + $0xa2] sm:$0xff]
        %v1026 = vld [vmem:[%s912 + $0xb2] sm:$0xff]
        %v1027 = vld [vmem:[%s912 + $0xc2] sm:$0xff]
        %v1028 = vld [vmem:[%s912 + $0xd2] sm:$0xff]
        %v1029 = vld [vmem:[%s912 + $0xe2] sm:$0xff]
        %v1030 = vld [vmem:[%s912 + $0xf2] sm:$0xff]
        %v1031 = vld [vmem:[%s912 + $0x102] sm:$0xff]
        %v1032 = vld [vmem:[%s912 + $0x112] sm:$0xff]
        %v1033 = vlaneseq
        %v1034 = vshrl.u32 %v1033, 7
        %v1035 = vsub.s32 5, %v1034
        %v1036 = vrot.slane %v770, %v1035
        %v1037 = vmul.f32 %v1017, %v1036
        %v1038 = vmul.f32 %v1018, %v1036
        %v1039 = vmul.f32 %v1019, %v1036
        %v1040 = vmul.f32 %v1020, %v1036
        %v1041 = vmul.f32 %v1021, %v1036
        %v1042 = vmul.f32 %v1022, %v1036
        %v1043 = vmul.f32 %v1023, %v1036
        %v1044 = vmul.f32 %v1024, %v1036
        %v1045 = vmul.f32 %v1025, %v1036
        %v1046 = vmul.f32 %v1026, %v1036
        %v1047 = vmul.f32 %v1027, %v1036
        %v1048 = vmul.f32 %v1028, %v1036
        %v1049 = vmul.f32 %v1029, %v1036
        %v1050 = vmul.f32 %v1030, %v1036
        %v1051 = vmul.f32 %v1031, %v1036
        %v1052 = vmul.f32 %v1032, %v1036
        %v1053 = vadd.f32 %v1001, %v1037
        %v1054 = vadd.f32 %v1002, %v1038
        %v1055 = vadd.f32 %v1003, %v1039
        %v1056 = vadd.f32 %v1004, %v1040
        %v1057 = vadd.f32 %v1005, %v1041
        %v1058 = vadd.f32 %v1006, %v1042
        %v1059 = vadd.f32 %v1007, %v1043
        %v1060 = vadd.f32 %v1008, %v1044
        %v1061 = vadd.f32 %v1009, %v1045
        %v1062 = vadd.f32 %v1010, %v1046
        %v1063 = vadd.f32 %v1011, %v1047
        %v1064 = vadd.f32 %v1012, %v1048
        %v1065 = vadd.f32 %v1013, %v1049
        %v1066 = vadd.f32 %v1014, %v1050
        %v1067 = vadd.f32 %v1015, %v1051
        %v1068 = vadd.f32 %v1016, %v1052
        %s1069 = scalar_lea.vmem %s766, 32
        %v1070 = vld [vmem:[%s1069] sm:$0xff]
        %v1071 = vld [vmem:[%s1069 + $0x10] sm:$0xff]
        %v1072 = vld [vmem:[%s1069 + $0x20] sm:$0xff]
        %v1073 = vld [vmem:[%s1069 + $0x30] sm:$0xff]
        %v1074 = vld [vmem:[%s1069 + $0x40] sm:$0xff]
        %v1075 = vld [vmem:[%s1069 + $0x50] sm:$0xff]
        %v1076 = vld [vmem:[%s1069 + $0x60] sm:$0xff]
        %v1077 = vld [vmem:[%s1069 + $0x70] sm:$0xff]
        %v1078 = vld [vmem:[%s1069 + $0xa0] sm:$0xff]
        %v1079 = vld [vmem:[%s1069 + $0xb0] sm:$0xff]
        %v1080 = vld [vmem:[%s1069 + $0xc0] sm:$0xff]
        %v1081 = vld [vmem:[%s1069 + $0xd0] sm:$0xff]
        %v1082 = vld [vmem:[%s1069 + $0xe0] sm:$0xff]
        %v1083 = vld [vmem:[%s1069 + $0xf0] sm:$0xff]
        %v1084 = vld [vmem:[%s1069 + $0x100] sm:$0xff]
        %v1085 = vld [vmem:[%s1069 + $0x110] sm:$0xff]
        %v1086 = vlaneseq
        %v1087 = vshrl.u32 %v1086, 7
        %v1088 = vsub.s32 6, %v1087
        %v1089 = vrot.slane %v770, %v1088
        %v1090 = vmul.f32 %v1070, %v1089
        %v1091 = vmul.f32 %v1071, %v1089
        %v1092 = vmul.f32 %v1072, %v1089
        %v1093 = vmul.f32 %v1073, %v1089
        %v1094 = vmul.f32 %v1074, %v1089
        %v1095 = vmul.f32 %v1075, %v1089
        %v1096 = vmul.f32 %v1076, %v1089
        %v1097 = vmul.f32 %v1077, %v1089
        %v1098 = vmul.f32 %v1078, %v1089
        %v1099 = vmul.f32 %v1079, %v1089
        %v1100 = vmul.f32 %v1080, %v1089
        %v1101 = vmul.f32 %v1081, %v1089
        %v1102 = vmul.f32 %v1082, %v1089
        %v1103 = vmul.f32 %v1083, %v1089
        %v1104 = vmul.f32 %v1084, %v1089
        %v1105 = vmul.f32 %v1085, %v1089
        %v1106 = vadd.f32 %v1053, %v1090
        %v1107 = vadd.f32 %v1054, %v1091
        %v1108 = vadd.f32 %v1055, %v1092
        %v1109 = vadd.f32 %v1056, %v1093
        %v1110 = vadd.f32 %v1057, %v1094
        %v1111 = vadd.f32 %v1058, %v1095
        %v1112 = vadd.f32 %v1059, %v1096
        %v1113 = vadd.f32 %v1060, %v1097
        %v1114 = vadd.f32 %v1061, %v1098
        %v1115 = vadd.f32 %v1062, %v1099
        %v1116 = vadd.f32 %v1063, %v1100
        %v1117 = vadd.f32 %v1064, %v1101
        %v1118 = vadd.f32 %v1065, %v1102
        %v1119 = vadd.f32 %v1066, %v1103
        %v1120 = vadd.f32 %v1067, %v1104
        %v1121 = vadd.f32 %v1068, %v1105
        %v1122 = vld [vmem:[%s1069 + $0x1] sm:$0xff]
        %v1123 = vld [vmem:[%s1069 + $0x11] sm:$0xff]
        %v1124 = vld [vmem:[%s1069 + $0x21] sm:$0xff]
        %v1125 = vld [vmem:[%s1069 + $0x31] sm:$0xff]
        %v1126 = vld [vmem:[%s1069 + $0x41] sm:$0xff]
        %v1127 = vld [vmem:[%s1069 + $0x51] sm:$0xff]
        %v1128 = vld [vmem:[%s1069 + $0x61] sm:$0xff]
        %v1129 = vld [vmem:[%s1069 + $0x71] sm:$0xff]
        %v1130 = vld [vmem:[%s1069 + $0xa1] sm:$0xff]
        %v1131 = vld [vmem:[%s1069 + $0xb1] sm:$0xff]
        %v1132 = vld [vmem:[%s1069 + $0xc1] sm:$0xff]
        %v1133 = vld [vmem:[%s1069 + $0xd1] sm:$0xff]
        %v1134 = vld [vmem:[%s1069 + $0xe1] sm:$0xff]
        %v1135 = vld [vmem:[%s1069 + $0xf1] sm:$0xff]
        %v1136 = vld [vmem:[%s1069 + $0x101] sm:$0xff]
        %v1137 = vld [vmem:[%s1069 + $0x111] sm:$0xff]
        %v1138 = vlaneseq
        %v1139 = vshrl.u32 %v1138, 7
        %v1140 = vsub.s32 7, %v1139
        %v1141 = vrot.slane %v770, %v1140
        %v1142 = vmul.f32 %v1122, %v1141
        %v1143 = vmul.f32 %v1123, %v1141
        %v1144 = vmul.f32 %v1124, %v1141
        %v1145 = vmul.f32 %v1125, %v1141
        %v1146 = vmul.f32 %v1126, %v1141
        %v1147 = vmul.f32 %v1127, %v1141
        %v1148 = vmul.f32 %v1128, %v1141
        %v1149 = vmul.f32 %v1129, %v1141
        %v1150 = vmul.f32 %v1130, %v1141
        %v1151 = vmul.f32 %v1131, %v1141
        %v1152 = vmul.f32 %v1132, %v1141
        %v1153 = vmul.f32 %v1133, %v1141
        %v1154 = vmul.f32 %v1134, %v1141
        %v1155 = vmul.f32 %v1135, %v1141
        %v1156 = vmul.f32 %v1136, %v1141
        %v1157 = vmul.f32 %v1137, %v1141
        %v1158 = vadd.f32 %v1106, %v1142
        %v1159 = vadd.f32 %v1107, %v1143
        %v1160 = vadd.f32 %v1108, %v1144
        %v1161 = vadd.f32 %v1109, %v1145
        %v1162 = vadd.f32 %v1110, %v1146
        %v1163 = vadd.f32 %v1111, %v1147
        %v1164 = vadd.f32 %v1112, %v1148
        %v1165 = vadd.f32 %v1113, %v1149
        %v1166 = vadd.f32 %v1114, %v1150
        %v1167 = vadd.f32 %v1115, %v1151
        %v1168 = vadd.f32 %v1116, %v1152
        %v1169 = vadd.f32 %v1117, %v1153
        %v1170 = vadd.f32 %v1118, %v1154
        %v1171 = vadd.f32 %v1119, %v1155
        %v1172 = vadd.f32 %v1120, %v1156
        %v1173 = vadd.f32 %v1121, %v1157
        %v1174 = vld [vmem:[%s1069 + $0x2] sm:$0xff]
        %v1175 = vld [vmem:[%s1069 + $0x12] sm:$0xff]
        %v1176 = vld [vmem:[%s1069 + $0x22] sm:$0xff]
        %v1177 = vld [vmem:[%s1069 + $0x32] sm:$0xff]
        %v1178 = vld [vmem:[%s1069 + $0x42] sm:$0xff]
        %v1179 = vld [vmem:[%s1069 + $0x52] sm:$0xff]
        %v1180 = vld [vmem:[%s1069 + $0x62] sm:$0xff]
        %v1181 = vld [vmem:[%s1069 + $0x72] sm:$0xff]
        %v1182 = vld [vmem:[%s1069 + $0xa2] sm:$0xff]
        %v1183 = vld [vmem:[%s1069 + $0xb2] sm:$0xff]
        %v1184 = vld [vmem:[%s1069 + $0xc2] sm:$0xff]
        %v1185 = vld [vmem:[%s1069 + $0xd2] sm:$0xff]
        %v1186 = vld [vmem:[%s1069 + $0xe2] sm:$0xff]
        %v1187 = vld [vmem:[%s1069 + $0xf2] sm:$0xff]
        %v1188 = vld [vmem:[%s1069 + $0x102] sm:$0xff]
        %v1189 = vld [vmem:[%s1069 + $0x112] sm:$0xff]
        %v1190 = vlaneseq
        %v1191 = vshrl.u32 %v1190, 7
        %v1192 = vsub.s32 0, %v1191
        %v1193 = vrot.slane %v771, %v1192
        %v1194 = vmul.f32 %v1174, %v1193
        %v1195 = vmul.f32 %v1175, %v1193
        %v1196 = vmul.f32 %v1176, %v1193
        %v1197 = vmul.f32 %v1177, %v1193
        %v1198 = vmul.f32 %v1178, %v1193
        %v1199 = vmul.f32 %v1179, %v1193
        %v1200 = vmul.f32 %v1180, %v1193
        %v1201 = vmul.f32 %v1181, %v1193
        %v1202 = vmul.f32 %v1182, %v1193
        %v1203 = vmul.f32 %v1183, %v1193
        %v1204 = vmul.f32 %v1184, %v1193
        %v1205 = vmul.f32 %v1185, %v1193
        %v1206 = vmul.f32 %v1186, %v1193
        %v1207 = vmul.f32 %v1187, %v1193
        %v1208 = vmul.f32 %v1188, %v1193
        %v1209 = vmul.f32 %v1189, %v1193
        %v1210 = vadd.f32 %v1158, %v1194
        %v1211 = vadd.f32 %v1159, %v1195
        %v1212 = vadd.f32 %v1160, %v1196
        %v1213 = vadd.f32 %v1161, %v1197
        %v1214 = vadd.f32 %v1162, %v1198
        %v1215 = vadd.f32 %v1163, %v1199
        %v1216 = vadd.f32 %v1164, %v1200
        %v1217 = vadd.f32 %v1165, %v1201
        %v1218 = vadd.f32 %v1166, %v1202
        %v1219 = vadd.f32 %v1167, %v1203
        %v1220 = vadd.f32 %v1168, %v1204
        %v1221 = vadd.f32 %v1169, %v1205
        %v1222 = vadd.f32 %v1170, %v1206
        %v1223 = vadd.f32 %v1171, %v1207
        %v1224 = vadd.f32 %v1172, %v1208
        %v1225 = vadd.f32 %v1173, %v1209
        %v1226 = vld [vmem:[%s2] sm:$0x1]
        %v1228 = vlaneseq
        %v1229 = vshrl.u32 %v1228, 7
        %v1230 = vsub.s32 0, %v1229
        %v1231 = vrot.slane %v1226, %v1230
        %v1233 = vadd.f32 %v1210, %v1231
        %v1234 = vadd.f32 %v1211, %v1231
        %v1235 = vadd.f32 %v1212, %v1231
        %v1236 = vadd.f32 %v1213, %v1231
        %v1237 = vadd.f32 %v1214, %v1231
        %v1238 = vadd.f32 %v1215, %v1231
        %v1239 = vadd.f32 %v1216, %v1231
        %v1240 = vadd.f32 %v1217, %v1231
        %v1241 = vadd.f32 %v1218, %v1231
        %v1242 = vadd.f32 %v1219, %v1231
        %v1243 = vadd.f32 %v1220, %v1231
        %v1244 = vadd.f32 %v1221, %v1231
        %v1245 = vadd.f32 %v1222, %v1231
        %v1246 = vadd.f32 %v1223, %v1231
        %v1247 = vadd.f32 %v1224, %v1231
        %v1248 = vadd.f32 %v1225, %v1231
        %v1249 = vld [vmem:[%s3] sm:$0x1]
        %v1251 = vlaneseq
        %v1252 = vshrl.u32 %v1251, 7
        %v1253 = vsub.s32 0, %v1252
        %v1254 = vrot.slane %v1249, %v1253
        %v1256 = vmul.f32 %v1233, %v1254
        %v1257 = vmul.f32 %v1234, %v1254
        %v1258 = vmul.f32 %v1235, %v1254
        %v1259 = vmul.f32 %v1236, %v1254
        %v1260 = vmul.f32 %v1237, %v1254
        %v1261 = vmul.f32 %v1238, %v1254
        %v1262 = vmul.f32 %v1239, %v1254
        %v1263 = vmul.f32 %v1240, %v1254
        %v1264 = vmul.f32 %v1241, %v1254
        %v1265 = vmul.f32 %v1242, %v1254
        %v1266 = vmul.f32 %v1243, %v1254
        %v1267 = vmul.f32 %v1244, %v1254
        %v1268 = vmul.f32 %v1245, %v1254
        %v1269 = vmul.f32 %v1246, %v1254
        %v1270 = vmul.f32 %v1247, %v1254
        %v1271 = vmul.f32 %v1248, %v1254
        %v1272 = vld [vmem:[%s4] sm:$0x1]
        %v1274 = vlaneseq
        %v1275 = vshrl.u32 %v1274, 7
        %v1276 = vsub.s32 0, %v1275
        %v1277 = vrot.slane %v1272, %v1276
        %v1279 = vadd.f32 %v1256, %v1277
        %v1280 = vadd.f32 %v1257, %v1277
        %v1281 = vadd.f32 %v1258, %v1277
        %v1282 = vadd.f32 %v1259, %v1277
        %v1283 = vadd.f32 %v1260, %v1277
        %v1284 = vadd.f32 %v1261, %v1277
        %v1285 = vadd.f32 %v1262, %v1277
        %v1286 = vadd.f32 %v1263, %v1277
        %v1287 = vadd.f32 %v1264, %v1277
        %v1288 = vadd.f32 %v1265, %v1277
        %v1289 = vadd.f32 %v1266, %v1277
        %v1290 = vadd.f32 %v1267, %v1277
        %v1291 = vadd.f32 %v1268, %v1277
        %v1292 = vadd.f32 %v1269, %v1277
        %v1293 = vadd.f32 %v1270, %v1277
        %v1294 = vadd.f32 %v1271, %v1277
        %v1295 = vpack.c.bf16 %v1280, %v1279
        %v1296 = vpack.c.bf16 %v1282, %v1281
        %v1297 = vpack.c.bf16 %v1284, %v1283
        %v1298 = vpack.c.bf16 %v1286, %v1285
        %v1299 = vpack.c.bf16 %v1288, %v1287
        %v1300 = vpack.c.bf16 %v1290, %v1289
        %v1301 = vpack.c.bf16 %v1292, %v1291
        %v1302 = vpack.c.bf16 %v1294, %v1293
        %v1303 = vld [vmem:[%s5] sm:$0xf]
        %v1304 = vld [vmem:[%s5 + $0x4] sm:$0xf]
        %v1305 = vld [vmem:[%s5 + $0x8] sm:$0xf]
        %v1306 = vld [vmem:[%s5 + $0xc] sm:$0xf]
        %v1307 = vld [vmem:[%s5 + $0x10] sm:$0xf]
        %v1308 = vld [vmem:[%s5 + $0x14] sm:$0xf]
        %v1309 = vld [vmem:[%s5 + $0x18] sm:$0xf]
        %v1310 = vld [vmem:[%s5 + $0x1c] sm:$0xf]
        %v1311 = vld [vmem:[%s5 + $0x20] sm:$0xf]
        %v1312 = vld [vmem:[%s5 + $0x24] sm:$0xf]
        %v1313 = vld [vmem:[%s5 + $0x28] sm:$0xf]
        %v1314 = vld [vmem:[%s5 + $0x2c] sm:$0xf]
        %v1315 = vld [vmem:[%s5 + $0x30] sm:$0xf]
        %v1316 = vld [vmem:[%s5 + $0x34] sm:$0xf]
        %v1317 = vld [vmem:[%s5 + $0x38] sm:$0xf]
        %v1318 = vld [vmem:[%s5 + $0x3c] sm:$0xf]
        %v1319 = vld [vmem:[%s6] sm:$0x1]
        %v1321 = vlaneseq
        %v1322 = vshrl.u32 %v1321, 7
        %v1323 = vsub.s32 0, %v1322
        %v1324 = vrot.slane %v1319, %v1323
        %v1342 = vunpack.c.l.b16 %v1303
        %v1343 = vunpack.c.l.b16 %v1304
        %v1344 = vunpack.c.l.b16 %v1305
        %v1345 = vunpack.c.l.b16 %v1306
        %v1346 = vunpack.c.l.b16 %v1307
        %v1347 = vunpack.c.l.b16 %v1308
        %v1348 = vunpack.c.l.b16 %v1309
        %v1349 = vunpack.c.l.b16 %v1310
        %v1350 = vunpack.c.l.b16 %v1311
        %v1351 = vunpack.c.l.b16 %v1312
        %v1352 = vunpack.c.l.b16 %v1313
        %v1353 = vunpack.c.l.b16 %v1314
        %v1354 = vunpack.c.l.b16 %v1315
        %v1355 = vunpack.c.l.b16 %v1316
        %v1356 = vunpack.c.l.b16 %v1317
        %v1357 = vunpack.c.l.b16 %v1318
        %v1358 = vpack.c.b16 %v1343, %v1342
        %v1359 = vpack.c.b16 %v1345, %v1344
        %v1360 = vpack.c.b16 %v1347, %v1346
        %v1361 = vpack.c.b16 %v1349, %v1348
        %v1362 = vpack.c.b16 %v1351, %v1350
        %v1363 = vpack.c.b16 %v1353, %v1352
        %v1364 = vpack.c.b16 %v1355, %v1354
        %v1365 = vpack.c.b16 %v1357, %v1356
        %1374 = vmatprep.subr.bf16.mxu0 0
        %1375 = vmatpush1.bf16.msra.mxu0 %v1358
        %1376 = vmatprep.subr.bf16.mxu0 0
        %1377 = vmatpush1.bf16.msra.mxu0 %v1359
        %1378 = vmatprep.subr.bf16.mxu0 0
        %1379 = vmatpush1.bf16.msra.mxu0 %v1360
        %1380 = vmatprep.subr.bf16.mxu0 0
        %1381 = vmatpush1.bf16.msra.mxu0 %v1361
        %1382 = vmatprep.subr.bf16.mxu0 0
        %1383 = vmatpush1.bf16.msra.mxu0 %v1362
        %1384 = vmatprep.subr.bf16.mxu0 0
        %1385 = vmatpush1.bf16.msra.mxu0 %v1363
        %1386 = vmatprep.subr.bf16.mxu0 0
        %1387 = vmatpush1.bf16.msra.mxu0 %v1364
        %1388 = vmatprep.subr.bf16.mxu0 0
        %1389 = vmatpush1.bf16.msra.mxu0 %v1365
        %1390 = vmatprep.subr.bf16.mxu0 0
        %1391 = vmatpush1.bf16.msra.mxu0 0
        %1392 = vmatprep.subr.bf16.mxu0 0
        %1393 = vmatpush1.bf16.msra.mxu0 0
        %1394 = vmatprep.subr.bf16.mxu0 0
        %1395 = vmatpush1.bf16.msra.mxu0 0
        %1396 = vmatprep.subr.bf16.mxu0 0
        %1397 = vmatpush1.bf16.msra.mxu0 0
        %1398 = vmatprep.subr.bf16.mxu0 0
        %1399 = vmatpush1.bf16.msra.mxu0 0
        %1400 = vmatprep.subr.bf16.mxu0 0
        %1401 = vmatpush1.bf16.msra.mxu0 0
        %1402 = vmatprep.subr.bf16.mxu0 0
        %1403 = vmatpush1.bf16.msra.mxu0 0
        %1404 = vmatprep.subr.bf16.mxu0 0
        %1405 = vmatpush1.bf16.msra.mxu0 0
        %1406 = vmatprep.mubr.bf16.mxu0 0
        %1407 = vmatmul.mubr.bf16.gmra.mrb[0].mxu0 %v1295
        %v1408 = vpop.f32.mrb[0].mxu0
        %v1409 = vadd.f32 %v1324, %v1408
        %v1410 = vpop.f32.mrb[0].mxu0
        %v1411 = vpop.f32.mrb[0].mxu0
        %v1412 = vadd.f32 %v1324, %v1411
        %v1413 = vpop.f32.mrb[0].mxu0
        %1414 = vmatprep.mubr.bf16.mxu0 0
        %1415 = vmatmul.mubr.bf16.gmra.mrb[0].mxu0 %v1296
        %v1416 = vpop.f32.mrb[0].mxu0
        %v1417 = vadd.f32 %v1324, %v1416
        %v1418 = vpop.f32.mrb[0].mxu0
        %v1419 = vpop.f32.mrb[0].mxu0
        %v1420 = vadd.f32 %v1324, %v1419
        %v1421 = vpop.f32.mrb[0].mxu0
        %1422 = vmatprep.mubr.bf16.mxu0 0
        %1423 = vmatmul.mubr.bf16.gmra.mrb[0].mxu0 %v1297
        %v1424 = vpop.f32.mrb[0].mxu0
        %v1425 = vadd.f32 %v1324, %v1424
        %v1426 = vpop.f32.mrb[0].mxu0
        %v1427 = vpop.f32.mrb[0].mxu0
        %v1428 = vadd.f32 %v1324, %v1427
        %v1429 = vpop.f32.mrb[0].mxu0
        %1430 = vmatprep.mubr.bf16.mxu0 0
        %1431 = vmatmul.mubr.bf16.gmra.mrb[0].mxu0 %v1298
        %v1432 = vpop.f32.mrb[0].mxu0
        %v1433 = vadd.f32 %v1324, %v1432
        %v1434 = vpop.f32.mrb[0].mxu0
        %v1435 = vpop.f32.mrb[0].mxu0
        %v1436 = vadd.f32 %v1324, %v1435
        %v1437 = vpop.f32.mrb[0].mxu0
        %1438 = vmatprep.mubr.bf16.mxu0 0
        %1439 = vmatmul.mubr.bf16.gmra.mrb[0].mxu0 %v1299
        %v1440 = vpop.f32.mrb[0].mxu0
        %v1441 = vadd.f32 %v1324, %v1440
        %v1442 = vpop.f32.mrb[0].mxu0
        %v1443 = vpop.f32.mrb[0].mxu0
        %v1444 = vadd.f32 %v1324, %v1443
        %v1445 = vpop.f32.mrb[0].mxu0
        %1446 = vmatprep.mubr.bf16.mxu0 0
        %1447 = vmatmul.mubr.bf16.gmra.mrb[0].mxu0 %v1300
        %v1448 = vpop.f32.mrb[0].mxu0
        %v1449 = vadd.f32 %v1324, %v1448
        %v1450 = vpop.f32.mrb[0].mxu0
        %v1451 = vpop.f32.mrb[0].mxu0
        %v1452 = vadd.f32 %v1324, %v1451
        %v1453 = vpop.f32.mrb[0].mxu0
        %1454 = vmatprep.mubr.bf16.mxu0 0
        %1455 = vmatmul.mubr.bf16.gmra.mrb[0].mxu0 %v1301
        %v1456 = vpop.f32.mrb[0].mxu0
        %v1457 = vadd.f32 %v1324, %v1456
        %v1458 = vpop.f32.mrb[0].mxu0
        %v1459 = vpop.f32.mrb[0].mxu0
        %v1460 = vadd.f32 %v1324, %v1459
        %v1461 = vpop.f32.mrb[0].mxu0
        %1462 = vmatprep.mubr.bf16.mxu0 0
        %1463 = vmatmul.mubr.bf16.gmra.mrb[0].mxu0 %v1302
        %v1464 = vpop.f32.mrb[0].mxu0
        %v1465 = vadd.f32 %v1324, %v1464
        %v1466 = vpop.f32.mrb[0].mxu0
        %v1467 = vpop.f32.mrb[0].mxu0
        %v1468 = vadd.f32 %v1324, %v1467
        %v1469 = vpop.f32.mrb[0].mxu0
        %1470 = vdwg.mxu0
        %v1471 = vmul.f32 %v1409, 0.5
        %v1472 = vmul.f32 %v1412, 0.5
        %v1473 = vmul.f32 %v1417, 0.5
        %v1474 = vmul.f32 %v1420, 0.5
        %v1475 = vmul.f32 %v1425, 0.5
        %v1476 = vmul.f32 %v1428, 0.5
        %v1477 = vmul.f32 %v1433, 0.5
        %v1478 = vmul.f32 %v1436, 0.5
        %v1479 = vmul.f32 %v1441, 0.5
        %v1480 = vmul.f32 %v1444, 0.5
        %v1481 = vmul.f32 %v1449, 0.5
        %v1482 = vmul.f32 %v1452, 0.5
        %v1483 = vmul.f32 %v1457, 0.5
        %v1484 = vmul.f32 %v1460, 0.5
        %v1485 = vmul.f32 %v1465, 0.5
        %v1486 = vmul.f32 %v1468, 0.5
        %v1487 = vmul.f32 %v1409, 0.044715
        %v1488 = vmul.f32 %v1412, 0.044715
        %v1489 = vmul.f32 %v1417, 0.044715
        %v1490 = vmul.f32 %v1420, 0.044715
        %v1491 = vmul.f32 %v1425, 0.044715
        %v1492 = vmul.f32 %v1428, 0.044715
        %v1493 = vmul.f32 %v1433, 0.044715
        %v1494 = vmul.f32 %v1436, 0.044715
        %v1495 = vmul.f32 %v1441, 0.044715
        %v1496 = vmul.f32 %v1444, 0.044715
        %v1497 = vmul.f32 %v1449, 0.044715
        %v1498 = vmul.f32 %v1452, 0.044715
        %v1499 = vmul.f32 %v1457, 0.044715
        %v1500 = vmul.f32 %v1460, 0.044715
        %v1501 = vmul.f32 %v1465, 0.044715
        %v1502 = vmul.f32 %v1468, 0.044715
        %v1503 = vmul.f32 %v1487, %v1409
        %v1504 = vmul.f32 %v1488, %v1412
        %v1505 = vmul.f32 %v1489, %v1417
        %v1506 = vmul.f32 %v1490, %v1420
        %v1507 = vmul.f32 %v1491, %v1425
        %v1508 = vmul.f32 %v1492, %v1428
        %v1509 = vmul.f32 %v1493, %v1433
        %v1510 = vmul.f32 %v1494, %v1436
        %v1511 = vmul.f32 %v1495, %v1441
        %v1512 = vmul.f32 %v1496, %v1444
        %v1513 = vmul.f32 %v1497, %v1449
        %v1514 = vmul.f32 %v1498, %v1452
        %v1515 = vmul.f32 %v1499, %v1457
        %v1516 = vmul.f32 %v1500, %v1460
        %v1517 = vmul.f32 %v1501, %v1465
        %v1518 = vmul.f32 %v1502, %v1468
        %v1519 = vmul.f32 %v1503, %v1409
        %v1520 = vmul.f32 %v1504, %v1412
        %v1521 = vmul.f32 %v1505, %v1417
        %v1522 = vmul.f32 %v1506, %v1420
        %v1523 = vmul.f32 %v1507, %v1425
        %v1524 = vmul.f32 %v1508, %v1428
        %v1525 = vmul.f32 %v1509, %v1433
        %v1526 = vmul.f32 %v1510, %v1436
        %v1527 = vmul.f32 %v1511, %v1441
        %v1528 = vmul.f32 %v1512, %v1444
        %v1529 = vmul.f32 %v1513, %v1449
        %v1530 = vmul.f32 %v1514, %v1452
        %v1531 = vmul.f32 %v1515, %v1457
        %v1532 = vmul.f32 %v1516, %v1460
        %v1533 = vmul.f32 %v1517, %v1465
        %v1534 = vmul.f32 %v1518, %v1468
        %v1535 = vadd.f32 %v1409, %v1519
        %v1536 = vadd.f32 %v1412, %v1520
        %v1537 = vadd.f32 %v1417, %v1521
        %v1538 = vadd.f32 %v1420, %v1522
        %v1539 = vadd.f32 %v1425, %v1523
        %v1540 = vadd.f32 %v1428, %v1524
        %v1541 = vadd.f32 %v1433, %v1525
        %v1542 = vadd.f32 %v1436, %v1526
        %v1543 = vadd.f32 %v1441, %v1527
        %v1544 = vadd.f32 %v1444, %v1528
        %v1545 = vadd.f32 %v1449, %v1529
        %v1546 = vadd.f32 %v1452, %v1530
        %v1547 = vadd.f32 %v1457, %v1531
        %v1548 = vadd.f32 %v1460, %v1532
        %v1549 = vadd.f32 %v1465, %v1533
        %v1550 = vadd.f32 %v1468, %v1534
        %v1551 = vmul.f32 %v1535, 0.7978846
        %v1552 = vmul.f32 %v1536, 0.7978846
        %v1553 = vmul.f32 %v1537, 0.7978846
        %v1554 = vmul.f32 %v1538, 0.7978846
        %v1555 = vmul.f32 %v1539, 0.7978846
        %v1556 = vmul.f32 %v1540, 0.7978846
        %v1557 = vmul.f32 %v1541, 0.7978846
        %v1558 = vmul.f32 %v1542, 0.7978846
        %v1559 = vmul.f32 %v1543, 0.7978846
        %v1560 = vmul.f32 %v1544, 0.7978846
        %v1561 = vmul.f32 %v1545, 0.7978846
        %v1562 = vmul.f32 %v1546, 0.7978846
        %v1563 = vmul.f32 %v1547, 0.7978846
        %v1564 = vmul.f32 %v1548, 0.7978846
        %v1565 = vmul.f32 %v1549, 0.7978846
        %v1566 = vmul.f32 %v1550, 0.7978846
        %v1567 = vtanh.pop %v1551
        %v1568 = vtanh.pop %v1552
        %v1569 = vtanh.pop %v1553
        %v1570 = vtanh.pop %v1554
        %v1571 = vtanh.pop %v1555
        %v1572 = vtanh.pop %v1556
        %v1573 = vtanh.pop %v1557
        %v1574 = vtanh.pop %v1558
        %v1575 = vtanh.pop %v1559
        %v1576 = vtanh.pop %v1560
        %v1577 = vtanh.pop %v1561
        %v1578 = vtanh.pop %v1562
        %v1579 = vtanh.pop %v1563
        %v1580 = vtanh.pop %v1564
        %v1581 = vtanh.pop %v1565
        %v1582 = vtanh.pop %v1566
        %v1583 = vadd.f32 %v1567, 1.0
        %v1584 = vadd.f32 %v1568, 1.0
        %v1585 = vadd.f32 %v1569, 1.0
        %v1586 = vadd.f32 %v1570, 1.0
        %v1587 = vadd.f32 %v1571, 1.0
        %v1588 = vadd.f32 %v1572, 1.0
        %v1589 = vadd.f32 %v1573, 1.0
        %v1590 = vadd.f32 %v1574, 1.0
        %v1591 = vadd.f32 %v1575, 1.0
        %v1592 = vadd.f32 %v1576, 1.0
        %v1593 = vadd.f32 %v1577, 1.0
        %v1594 = vadd.f32 %v1578, 1.0
        %v1595 = vadd.f32 %v1579, 1.0
        %v1596 = vadd.f32 %v1580, 1.0
        %v1597 = vadd.f32 %v1581, 1.0
        %v1598 = vadd.f32 %v1582, 1.0
        %v1599 = vmul.f32 %v1471, %v1583
        %v1600 = vmul.f32 %v1472, %v1584
        %v1601 = vmul.f32 %v1473, %v1585
        %v1602 = vmul.f32 %v1474, %v1586
        %v1603 = vmul.f32 %v1475, %v1587
        %v1604 = vmul.f32 %v1476, %v1588
        %v1605 = vmul.f32 %v1477, %v1589
        %v1606 = vmul.f32 %v1478, %v1590
        %v1607 = vmul.f32 %v1479, %v1591
        %v1608 = vmul.f32 %v1480, %v1592
        %v1609 = vmul.f32 %v1481, %v1593
        %v1610 = vmul.f32 %v1482, %v1594
        %v1611 = vmul.f32 %v1483, %v1595
        %v1612 = vmul.f32 %v1484, %v1596
        %v1613 = vmul.f32 %v1485, %v1597
        %v1614 = vmul.f32 %v1486, %v1598
        %v1615 = vpack.c.bf16 %v1600, %v1599
        %v1616 = vpack.c.bf16 %v1602, %v1601
        %v1617 = vpack.c.bf16 %v1604, %v1603
        %v1618 = vpack.c.bf16 %v1606, %v1605
        %v1619 = vpack.c.bf16 %v1608, %v1607
        %v1620 = vpack.c.bf16 %v1610, %v1609
        %v1621 = vpack.c.bf16 %v1612, %v1611
        %v1622 = vpack.c.bf16 %v1614, %v1613
        %v1623 = vld [vmem:[%s7] sm:$0xf]
        %v1624 = vld [vmem:[%s7 + $0x4] sm:$0xf]
        %v1625 = vld [vmem:[%s7 + $0x8] sm:$0xf]
        %v1626 = vld [vmem:[%s7 + $0xc] sm:$0xf]
        %v1627 = vld [vmem:[%s7 + $0x10] sm:$0xf]
        %v1628 = vld [vmem:[%s7 + $0x14] sm:$0xf]
        %v1629 = vld [vmem:[%s7 + $0x18] sm:$0xf]
        %v1630 = vld [vmem:[%s7 + $0x1c] sm:$0xf]
        %v1631 = vld [vmem:[%s7 + $0x20] sm:$0xf]
        %v1632 = vld [vmem:[%s7 + $0x24] sm:$0xf]
        %v1633 = vld [vmem:[%s7 + $0x28] sm:$0xf]
        %v1634 = vld [vmem:[%s7 + $0x2c] sm:$0xf]
        %v1635 = vld [vmem:[%s7 + $0x30] sm:$0xf]
        %v1636 = vld [vmem:[%s7 + $0x34] sm:$0xf]
        %v1637 = vld [vmem:[%s7 + $0x38] sm:$0xf]
        %v1638 = vld [vmem:[%s7 + $0x3c] sm:$0xf]
        %v1639 = vld [vmem:[%s8] sm:$0x1]
        %v1641 = vlaneseq
        %v1642 = vshrl.u32 %v1641, 7
        %v1643 = vsub.s32 0, %v1642
        %v1644 = vrot.slane %v1639, %v1643
        %v1662 = vunpack.c.l.b16 %v1623
        %v1663 = vunpack.c.l.b16 %v1624
        %v1664 = vunpack.c.l.b16 %v1625
        %v1665 = vunpack.c.l.b16 %v1626
        %v1666 = vunpack.c.l.b16 %v1627
        %v1667 = vunpack.c.l.b16 %v1628
        %v1668 = vunpack.c.l.b16 %v1629
        %v1669 = vunpack.c.l.b16 %v1630
        %v1670 = vunpack.c.l.b16 %v1631
        %v1671 = vunpack.c.l.b16 %v1632
        %v1672 = vunpack.c.l.b16 %v1633
        %v1673 = vunpack.c.l.b16 %v1634
        %v1674 = vunpack.c.l.b16 %v1635
        %v1675 = vunpack.c.l.b16 %v1636
        %v1676 = vunpack.c.l.b16 %v1637
        %v1677 = vunpack.c.l.b16 %v1638
        %v1678 = vpack.c.b16 %v1663, %v1662
        %v1679 = vpack.c.b16 %v1665, %v1664
        %v1680 = vpack.c.b16 %v1667, %v1666
        %v1681 = vpack.c.b16 %v1669, %v1668
        %v1682 = vpack.c.b16 %v1671, %v1670
        %v1683 = vpack.c.b16 %v1673, %v1672
        %v1684 = vpack.c.b16 %v1675, %v1674
        %v1685 = vpack.c.b16 %v1677, %v1676
        %1694 = vmatprep.subr.bf16.mxu0 0
        %1695 = vmatpush1.bf16.msra.mxu0 %v1678
        %1696 = vmatprep.subr.bf16.mxu0 0
        %1697 = vmatpush1.bf16.msra.mxu0 %v1679
        %1698 = vmatprep.subr.bf16.mxu0 0
        %1699 = vmatpush1.bf16.msra.mxu0 %v1680
        %1700 = vmatprep.subr.bf16.mxu0 0
        %1701 = vmatpush1.bf16.msra.mxu0 %v1681
        %1702 = vmatprep.subr.bf16.mxu0 0
        %1703 = vmatpush1.bf16.msra.mxu0 %v1682
        %1704 = vmatprep.subr.bf16.mxu0 0
        %1705 = vmatpush1.bf16.msra.mxu0 %v1683
        %1706 = vmatprep.subr.bf16.mxu0 0
        %1707 = vmatpush1.bf16.msra.mxu0 %v1684
        %1708 = vmatprep.subr.bf16.mxu0 0
        %1709 = vmatpush1.bf16.msra.mxu0 %v1685
        %1710 = vmatprep.subr.bf16.mxu0 0
        %1711 = vmatpush1.bf16.msra.mxu0 0
        %1712 = vmatprep.subr.bf16.mxu0 0
        %1713 = vmatpush1.bf16.msra.mxu0 0
        %1714 = vmatprep.subr.bf16.mxu0 0
        %1715 = vmatpush1.bf16.msra.mxu0 0
        %1716 = vmatprep.subr.bf16.mxu0 0
        %1717 = vmatpush1.bf16.msra.mxu0 0
        %1718 = vmatprep.subr.bf16.mxu0 0
        %1719 = vmatpush1.bf16.msra.mxu0 0
        %1720 = vmatprep.subr.bf16.mxu0 0
        %1721 = vmatpush1.bf16.msra.mxu0 0
        %1722 = vmatprep.subr.bf16.mxu0 0
        %1723 = vmatpush1.bf16.msra.mxu0 0
        %1724 = vmatprep.subr.bf16.mxu0 0
        %1725 = vmatpush1.bf16.msra.mxu0 0
        %1726 = vmatprep.mubr.bf16.mxu0 0
        %1727 = vmatmul.mubr.bf16.gmra.mrb[0].mxu0 %v1615
        %v1728 = vpop.f32.mrb[0].mxu0
        %v1729 = vadd.f32 %v1644, %v1728
        %v1730 = vpop.f32.mrb[0].mxu0
        %v1731 = vpop.f32.mrb[0].mxu0
        %v1732 = vadd.f32 %v1644, %v1731
        %v1733 = vpop.f32.mrb[0].mxu0
        %1734 = vmatprep.mubr.bf16.mxu0 0
        %1735 = vmatmul.mubr.bf16.gmra.mrb[0].mxu0 %v1616
        %v1736 = vpop.f32.mrb[0].mxu0
        %v1737 = vadd.f32 %v1644, %v1736
        %v1738 = vpop.f32.mrb[0].mxu0
        %v1739 = vpop.f32.mrb[0].mxu0
        %v1740 = vadd.f32 %v1644, %v1739
        %v1741 = vpop.f32.mrb[0].mxu0
        %1742 = vmatprep.mubr.bf16.mxu0 0
        %1743 = vmatmul.mubr.bf16.gmra.mrb[0].mxu0 %v1617
        %v1744 = vpop.f32.mrb[0].mxu0
        %v1745 = vadd.f32 %v1644, %v1744
        %v1746 = vpop.f32.mrb[0].mxu0
        %v1747 = vpop.f32.mrb[0].mxu0
        %v1748 = vadd.f32 %v1644, %v1747
        %v1749 = vpop.f32.mrb[0].mxu0
        %1750 = vmatprep.mubr.bf16.mxu0 0
        %1751 = vmatmul.mubr.bf16.gmra.mrb[0].mxu0 %v1618
        %v1752 = vpop.f32.mrb[0].mxu0
        %v1753 = vadd.f32 %v1644, %v1752
        %v1754 = vpop.f32.mrb[0].mxu0
        %v1755 = vpop.f32.mrb[0].mxu0
        %v1756 = vadd.f32 %v1644, %v1755
        %v1757 = vpop.f32.mrb[0].mxu0
        %1758 = vmatprep.mubr.bf16.mxu0 0
        %1759 = vmatmul.mubr.bf16.gmra.mrb[0].mxu0 %v1619
        %v1760 = vpop.f32.mrb[0].mxu0
        %v1761 = vadd.f32 %v1644, %v1760
        %v1762 = vpop.f32.mrb[0].mxu0
        %v1763 = vpop.f32.mrb[0].mxu0
        %v1764 = vadd.f32 %v1644, %v1763
        %v1765 = vpop.f32.mrb[0].mxu0
        %1766 = vmatprep.mubr.bf16.mxu0 0
        %1767 = vmatmul.mubr.bf16.gmra.mrb[0].mxu0 %v1620
        %v1768 = vpop.f32.mrb[0].mxu0
        %v1769 = vadd.f32 %v1644, %v1768
        %v1770 = vpop.f32.mrb[0].mxu0
        %v1771 = vpop.f32.mrb[0].mxu0
        %v1772 = vadd.f32 %v1644, %v1771
        %v1773 = vpop.f32.mrb[0].mxu0
        %1774 = vmatprep.mubr.bf16.mxu0 0
        %1775 = vmatmul.mubr.bf16.gmra.mrb[0].mxu0 %v1621
        %v1776 = vpop.f32.mrb[0].mxu0
        %v1777 = vadd.f32 %v1644, %v1776
        %v1778 = vpop.f32.mrb[0].mxu0
        %v1779 = vpop.f32.mrb[0].mxu0
        %v1780 = vadd.f32 %v1644, %v1779
        %v1781 = vpop.f32.mrb[0].mxu0
        %1782 = vmatprep.mubr.bf16.mxu0 0
        %1783 = vmatmul.mubr.bf16.gmra.mrb[0].mxu0 %v1622
        %v1784 = vpop.f32.mrb[0].mxu0
        %v1785 = vadd.f32 %v1644, %v1784
        %v1786 = vpop.f32.mrb[0].mxu0
        %v1787 = vpop.f32.mrb[0].mxu0
        %v1788 = vadd.f32 %v1644, %v1787
        %v1789 = vpop.f32.mrb[0].mxu0
        %1790 = vdwg.mxu0
        %v1791 = vld [vmem:[%s9] sm:$0x1]
        %v1793 = vlaneseq
        %v1794 = vshrl.u32 %v1793, 7
        %v1795 = vsub.s32 0, %v1794
        %v1796 = vrot.slane %v1791, %v1795
        %v1798 = vmul.f32 %v1796, %v1729
        %v1799 = vmul.f32 %v1796, %v1732
        %v1800 = vmul.f32 %v1796, %v1737
        %v1801 = vmul.f32 %v1796, %v1740
        %v1802 = vmul.f32 %v1796, %v1745
        %v1803 = vmul.f32 %v1796, %v1748
        %v1804 = vmul.f32 %v1796, %v1753
        %v1805 = vmul.f32 %v1796, %v1756
        %v1806 = vmul.f32 %v1796, %v1761
        %v1807 = vmul.f32 %v1796, %v1764
        %v1808 = vmul.f32 %v1796, %v1769
        %v1809 = vmul.f32 %v1796, %v1772
        %v1810 = vmul.f32 %v1796, %v1777
        %v1811 = vmul.f32 %v1796, %v1780
        %v1812 = vmul.f32 %v1796, %v1785
        %v1813 = vmul.f32 %v1796, %v1788
        %v1814 = vadd.f32 %v965, %v1798
        %v1815 = vadd.f32 %v966, %v1799
        %v1816 = vadd.f32 %v967, %v1800
        %v1817 = vadd.f32 %v968, %v1801
        %v1818 = vadd.f32 %v969, %v1802
        %v1819 = vadd.f32 %v970, %v1803
        %v1820 = vadd.f32 %v971, %v1804
        %v1821 = vadd.f32 %v972, %v1805
        %v1822 = vadd.f32 %v973, %v1806
        %v1823 = vadd.f32 %v974, %v1807
        %v1824 = vadd.f32 %v975, %v1808
        %v1825 = vadd.f32 %v976, %v1809
        %v1826 = vadd.f32 %v977, %v1810
        %v1827 = vadd.f32 %v978, %v1811
        %v1828 = vadd.f32 %v979, %v1812
        %v1829 = vadd.f32 %v980, %v1813
        %v1830 = vpack.c.bf16 %v1815, %v1814
        %v1831 = vpack.c.bf16 %v1817, %v1816
        %v1832 = vpack.c.bf16 %v1819, %v1818
        %v1833 = vpack.c.bf16 %v1821, %v1820
        %v1834 = vpack.c.bf16 %v1823, %v1822
        %v1835 = vpack.c.bf16 %v1825, %v1824
        %v1836 = vpack.c.bf16 %v1827, %v1826
        %v1837 = vpack.c.bf16 %v1829, %v1828
        %v1838 = vld [vmem:[%s10] sm:$0xff]
        %v1839 = vld [vmem:[%s10 + $0x8] sm:$0xff]
        %v1840 = vld [vmem:[%s10 + $0x10] sm:$0xff]
        %v1841 = vld [vmem:[%s10 + $0x18] sm:$0xff]
        %v1842 = vld [vmem:[%s10 + $0x20] sm:$0xff]
        %v1843 = vld [vmem:[%s10 + $0x28] sm:$0xff]
        %v1844 = vld [vmem:[%s10 + $0x30] sm:$0xff]
        %v1845 = vld [vmem:[%s10 + $0x38] sm:$0xff]
        %v1846 = vld [vmem:[%s10 + $0x40] sm:$0xff]
        %v1847 = vld [vmem:[%s10 + $0x48] sm:$0xff]
        %v1848 = vld [vmem:[%s10 + $0x50] sm:$0xff]
        %v1849 = vld [vmem:[%s10 + $0x58] sm:$0xff]
        %v1850 = vld [vmem:[%s10 + $0x60] sm:$0xff]
        %v1851 = vld [vmem:[%s10 + $0x68] sm:$0xff]
        %v1852 = vld [vmem:[%s10 + $0x70] sm:$0xff]
        %v1853 = vld [vmem:[%s10 + $0x78] sm:$0xff]
        %v1854 = vld [vmem:[%s11] sm:$0x3]
        %v1856 = vlaneseq
        %v1857 = vshrl.u32 %v1856, 7
        %v1858 = vsub.s32 0, %v1857
        %v1859 = vrot.slane %v1854, %v1858
        %v1860 = vlaneseq
        %v1861 = vshrl.u32 %v1860, 7
        %v1862 = vsub.s32 1, %v1861
        %v1863 = vrot.slane %v1854, %v1862
        %v1882 = vunpack.c.l.b16 %v1838
        %v1883 = vunpack.c.h.b16 %v1838
        %v1884 = vunpack.c.l.b16 %v1839
        %v1885 = vunpack.c.h.b16 %v1839
        %v1886 = vunpack.c.l.b16 %v1840
        %v1887 = vunpack.c.h.b16 %v1840
        %v1888 = vunpack.c.l.b16 %v1841
        %v1889 = vunpack.c.h.b16 %v1841
        %v1890 = vunpack.c.l.b16 %v1842
        %v1891 = vunpack.c.h.b16 %v1842
        %v1892 = vunpack.c.l.b16 %v1843
        %v1893 = vunpack.c.h.b16 %v1843
        %v1894 = vunpack.c.l.b16 %v1844
        %v1895 = vunpack.c.h.b16 %v1844
        %v1896 = vunpack.c.l.b16 %v1845
        %v1897 = vunpack.c.h.b16 %v1845
        %v1898 = vunpack.c.l.b16 %v1846
        %v1899 = vunpack.c.h.b16 %v1846
        %v1900 = vunpack.c.l.b16 %v1847
        %v1901 = vunpack.c.h.b16 %v1847
        %v1902 = vunpack.c.l.b16 %v1848
        %v1903 = vunpack.c.h.b16 %v1848
        %v1904 = vunpack.c.l.b16 %v1849
        %v1905 = vunpack.c.h.b16 %v1849
        %v1906 = vunpack.c.l.b16 %v1850
        %v1907 = vunpack.c.h.b16 %v1850
        %v1908 = vunpack.c.l.b16 %v1851
        %v1909 = vunpack.c.h.b16 %v1851
        %v1910 = vunpack.c.l.b16 %v1852
        %v1911 = vunpack.c.h.b16 %v1852
        %v1912 = vunpack.c.l.b16 %v1853
        %v1913 = vunpack.c.h.b16 %v1853
        %v1914 = vpack.c.b16 %v1884, %v1882
        %v1915 = vpack.c.b16 %v1885, %v1883
        %v1916 = vpack.c.b16 %v1888, %v1886
        %v1917 = vpack.c.b16 %v1889, %v1887
        %v1918 = vpack.c.b16 %v1892, %v1890
        %v1919 = vpack.c.b16 %v1893, %v1891
        %v1920 = vpack.c.b16 %v1896, %v1894
        %v1921 = vpack.c.b16 %v1897, %v1895
        %v1922 = vpack.c.b16 %v1900, %v1898
        %v1923 = vpack.c.b16 %v1901, %v1899
        %v1924 = vpack.c.b16 %v1904, %v1902
        %v1925 = vpack.c.b16 %v1905, %v1903
        %v1926 = vpack.c.b16 %v1908, %v1906
        %v1927 = vpack.c.b16 %v1909, %v1907
        %v1928 = vpack.c.b16 %v1912, %v1910
        %v1929 = vpack.c.b16 %v1913, %v1911
        %1946 = vmatprep.subr.bf16.mxu0 %v1915
        %1947 = vmatpush1.bf16.msra.mxu0 %v1914
        %1948 = vmatprep.subr.bf16.mxu0 %v1917
        %1949 = vmatpush1.bf16.msra.mxu0 %v1916
        %1950 = vmatprep.subr.bf16.mxu0 %v1919
        %1951 = vmatpush1.bf16.msra.mxu0 %v1918
        %1952 = vmatprep.subr.bf16.mxu0 %v1921
        %1953 = vmatpush1.bf16.msra.mxu0 %v1920
        %1954 = vmatprep.subr.bf16.mxu0 %v1923
        %1955 = vmatpush1.bf16.msra.mxu0 %v1922
        %1956 = vmatprep.subr.bf16.mxu0 %v1925
        %1957 = vmatpush1.bf16.msra.mxu0 %v1924
        %1958 = vmatprep.subr.bf16.mxu0 %v1927
        %1959 = vmatpush1.bf16.msra.mxu0 %v1926
        %1960 = vmatprep.subr.bf16.mxu0 %v1929
        %1961 = vmatpush1.bf16.msra.mxu0 %v1928
        %1962 = vmatprep.subr.bf16.mxu0 0
        %1963 = vmatpush1.bf16.msra.mxu0 0
        %1964 = vmatprep.subr.bf16.mxu0 0
        %1965 = vmatpush1.bf16.msra.mxu0 0
        %1966 = vmatprep.subr.bf16.mxu0 0
        %1967 = vmatpush1.bf16.msra.mxu0 0
        %1968 = vmatprep.subr.bf16.mxu0 0
        %1969 = vmatpush1.bf16.msra.mxu0 0
        %1970 = vmatprep.subr.bf16.mxu0 0
        %1971 = vmatpush1.bf16.msra.mxu0 0
        %1972 = vmatprep.subr.bf16.mxu0 0
        %1973 = vmatpush1.bf16.msra.mxu0 0
        %1974 = vmatprep.subr.bf16.mxu0 0
        %1975 = vmatpush1.bf16.msra.mxu0 0
        %1976 = vmatprep.subr.bf16.mxu0 0
        %1977 = vmatpush1.bf16.msra.mxu0 0
        %1978 = vmatprep.mubr.bf16.mxu0 0
        %1979 = vmatmul.mubr.bf16.gmra.mrb[0].mxu0 %v1830
        %v1980 = vpop.f32.mrb[0].mxu0
        %v1981 = vadd.f32 %v1859, %v1980
        %v1982 = vpop.f32.mrb[0].mxu0
        %v1983 = vadd.f32 %v1863, %v1982
        %v1984 = vpop.f32.mrb[0].mxu0
        %v1985 = vadd.f32 %v1859, %v1984
        %v1986 = vpop.f32.mrb[0].mxu0
        %v1987 = vadd.f32 %v1863, %v1986
        %1988 = vmatprep.mubr.bf16.mxu0 0
        %1989 = vmatmul.mubr.bf16.gmra.mrb[0].mxu0 %v1831
        %v1990 = vpop.f32.mrb[0].mxu0
        %v1991 = vadd.f32 %v1859, %v1990
        %v1992 = vpop.f32.mrb[0].mxu0
        %v1993 = vadd.f32 %v1863, %v1992
        %v1994 = vpop.f32.mrb[0].mxu0
        %v1995 = vadd.f32 %v1859, %v1994
        %v1996 = vpop.f32.mrb[0].mxu0
        %v1997 = vadd.f32 %v1863, %v1996
        %1998 = vmatprep.mubr.bf16.mxu0 0
        %1999 = vmatmul.mubr.bf16.gmra.mrb[0].mxu0 %v1832
        %v2000 = vpop.f32.mrb[0].mxu0
        %v2001 = vadd.f32 %v1859, %v2000
        %v2002 = vpop.f32.mrb[0].mxu0
        %v2003 = vadd.f32 %v1863, %v2002
        %v2004 = vpop.f32.mrb[0].mxu0
        %v2005 = vadd.f32 %v1859, %v2004
        %v2006 = vpop.f32.mrb[0].mxu0
        %v2007 = vadd.f32 %v1863, %v2006
        %2008 = vmatprep.mubr.bf16.mxu0 0
        %2009 = vmatmul.mubr.bf16.gmra.mrb[0].mxu0 %v1833
        %v2010 = vpop.f32.mrb[0].mxu0
        %v2011 = vadd.f32 %v1859, %v2010
        %v2012 = vpop.f32.mrb[0].mxu0
        %v2013 = vadd.f32 %v1863, %v2012
        %v2014 = vpop.f32.mrb[0].mxu0
        %v2015 = vadd.f32 %v1859, %v2014
        %v2016 = vpop.f32.mrb[0].mxu0
        %v2017 = vadd.f32 %v1863, %v2016
        %2018 = vmatprep.mubr.bf16.mxu0 0
        %2019 = vmatmul.mubr.bf16.gmra.mrb[0].mxu0 %v1834
        %v2020 = vpop.f32.mrb[0].mxu0
        %v2021 = vadd.f32 %v1859, %v2020
        %v2022 = vpop.f32.mrb[0].mxu0
        %v2023 = vadd.f32 %v1863, %v2022
        %v2024 = vpop.f32.mrb[0].mxu0
        %v2025 = vadd.f32 %v1859, %v2024
        %v2026 = vpop.f32.mrb[0].mxu0
        %v2027 = vadd.f32 %v1863, %v2026
        %2028 = vmatprep.mubr.bf16.mxu0 0
        %2029 = vmatmul.mubr.bf16.gmra.mrb[0].mxu0 %v1835
        %v2030 = vpop.f32.mrb[0].mxu0
        %v2031 = vadd.f32 %v1859, %v2030
        %v2032 = vpop.f32.mrb[0].mxu0
        %v2033 = vadd.f32 %v1863, %v2032
        %v2034 = vpop.f32.mrb[0].mxu0
        %v2035 = vadd.f32 %v1859, %v2034
        %v2036 = vpop.f32.mrb[0].mxu0
        %v2037 = vadd.f32 %v1863, %v2036
        %2038 = vmatprep.mubr.bf16.mxu0 0
        %2039 = vmatmul.mubr.bf16.gmra.mrb[0].mxu0 %v1836
        %v2040 = vpop.f32.mrb[0].mxu0
        %v2041 = vadd.f32 %v1859, %v2040
        %v2042 = vpop.f32.mrb[0].mxu0
        %v2043 = vadd.f32 %v1863, %v2042
        %v2044 = vpop.f32.mrb[0].mxu0
        %v2045 = vadd.f32 %v1859, %v2044
        %v2046 = vpop.f32.mrb[0].mxu0
        %v2047 = vadd.f32 %v1863, %v2046
        %2048 = vmatprep.mubr.bf16.mxu0 0
        %2049 = vmatmul.mubr.bf16.gmra.mrb[0].mxu0 %v1837
        %v2050 = vpop.f32.mrb[0].mxu0
        %v2051 = vadd.f32 %v1859, %v2050
        %v2052 = vpop.f32.mrb[0].mxu0
        %v2053 = vadd.f32 %v1863, %v2052
        %v2054 = vpop.f32.mrb[0].mxu0
        %v2055 = vadd.f32 %v1859, %v2054
        %v2056 = vpop.f32.mrb[0].mxu0
        %v2057 = vadd.f32 %v1863, %v2056
        %2058 = vdwg.mxu0
        %v2059 = vmul.f32 %v1981, %v1981
        %v2060 = vmul.f32 %v1985, %v1985
        %v2061 = vmul.f32 %v1991, %v1991
        %v2062 = vmul.f32 %v1995, %v1995
        %v2063 = vmul.f32 %v2001, %v2001
        %v2064 = vmul.f32 %v2005, %v2005
        %v2065 = vmul.f32 %v2011, %v2011
        %v2066 = vmul.f32 %v2015, %v2015
        %v2067 = vmul.f32 %v2021, %v2021
        %v2068 = vmul.f32 %v2025, %v2025
        %v2069 = vmul.f32 %v2031, %v2031
        %v2070 = vmul.f32 %v2035, %v2035
        %v2071 = vmul.f32 %v2041, %v2041
        %v2072 = vmul.f32 %v2045, %v2045
        %v2073 = vmul.f32 %v2051, %v2051
        %v2074 = vmul.f32 %v2055, %v2055
        %2075 = vadd.xlane.f32.xlu0 %v2059
        %v2076 = vpop.xlane.xlu0 %2075
        %2077 = vadd.xlane.f32.xlu0 %v2060
        %v2078 = vpop.xlane.xlu0 %2077
        %2079 = vadd.xlane.f32.xlu0 %v2061
        %v2080 = vpop.xlane.xlu0 %2079
        %2081 = vadd.xlane.f32.xlu0 %v2062
        %v2082 = vpop.xlane.xlu0 %2081
        %2083 = vadd.xlane.f32.xlu0 %v2063
        %v2084 = vpop.xlane.xlu0 %2083
        %2085 = vadd.xlane.f32.xlu0 %v2064
        %v2086 = vpop.xlane.xlu0 %2085
        %2087 = vadd.xlane.f32.xlu0 %v2065
        %v2088 = vpop.xlane.xlu0 %2087
        %2089 = vadd.xlane.f32.xlu0 %v2066
        %v2090 = vpop.xlane.xlu0 %2089
        %2091 = vadd.xlane.f32.xlu0 %v2067
        %v2092 = vpop.xlane.xlu0 %2091
        %2093 = vadd.xlane.f32.xlu0 %v2068
        %v2094 = vpop.xlane.xlu0 %2093
        %2095 = vadd.xlane.f32.xlu0 %v2069
        %v2096 = vpop.xlane.xlu0 %2095
        %2097 = vadd.xlane.f32.xlu0 %v2070
        %v2098 = vpop.xlane.xlu0 %2097
        %2099 = vadd.xlane.f32.xlu0 %v2071
        %v2100 = vpop.xlane.xlu0 %2099
        %2101 = vadd.xlane.f32.xlu0 %v2072
        %v2102 = vpop.xlane.xlu0 %2101
        %2103 = vadd.xlane.f32.xlu0 %v2073
        %v2104 = vpop.xlane.xlu0 %2103
        %2105 = vadd.xlane.f32.xlu0 %v2074
        %v2106 = vpop.xlane.xlu0 %2105
        %v2107 = vrsqrt.pop %v2076
        %v2108 = vmul.f32 %v2076, %v2107
        %vm2109 = vcmp.eq.f32.partialorder %v2076, inf
        %v2110 = vsel %vm2109, %v2076, %v2108
        %vm2111 = vcmp.eq.f32.partialorder %v2076, 0.0
        %v2112 = vand.u32 %v2076, 2147483648
        %v2113 = vsel %vm2111, %v2112, %v2110
        %v2114 = vrsqrt.pop %v2078
        %v2115 = vmul.f32 %v2078, %v2114
        %vm2116 = vcmp.eq.f32.partialorder %v2078, inf
        %v2117 = vsel %vm2116, %v2078, %v2115
        %vm2118 = vcmp.eq.f32.partialorder %v2078, 0.0
        %v2119 = vand.u32 %v2078, 2147483648
        %v2120 = vsel %vm2118, %v2119, %v2117
        %v2121 = vrsqrt.pop %v2080
        %v2122 = vmul.f32 %v2080, %v2121
        %vm2123 = vcmp.eq.f32.partialorder %v2080, inf
        %v2124 = vsel %vm2123, %v2080, %v2122
        %vm2125 = vcmp.eq.f32.partialorder %v2080, 0.0
        %v2126 = vand.u32 %v2080, 2147483648
        %v2127 = vsel %vm2125, %v2126, %v2124
        %v2128 = vrsqrt.pop %v2082
        %v2129 = vmul.f32 %v2082, %v2128
        %vm2130 = vcmp.eq.f32.partialorder %v2082, inf
        %v2131 = vsel %vm2130, %v2082, %v2129
        %vm2132 = vcmp.eq.f32.partialorder %v2082, 0.0
        %v2133 = vand.u32 %v2082, 2147483648
        %v2134 = vsel %vm2132, %v2133, %v2131
        %v2135 = vrsqrt.pop %v2084
        %v2136 = vmul.f32 %v2084, %v2135
        %vm2137 = vcmp.eq.f32.partialorder %v2084, inf
        %v2138 = vsel %vm2137, %v2084, %v2136
        %vm2139 = vcmp.eq.f32.partialorder %v2084, 0.0
        %v2140 = vand.u32 %v2084, 2147483648
        %v2141 = vsel %vm2139, %v2140, %v2138
        %v2142 = vrsqrt.pop %v2086
        %v2143 = vmul.f32 %v2086, %v2142
        %vm2144 = vcmp.eq.f32.partialorder %v2086, inf
        %v2145 = vsel %vm2144, %v2086, %v2143
        %vm2146 = vcmp.eq.f32.partialorder %v2086, 0.0
        %v2147 = vand.u32 %v2086, 2147483648
        %v2148 = vsel %vm2146, %v2147, %v2145
        %v2149 = vrsqrt.pop %v2088
        %v2150 = vmul.f32 %v2088, %v2149
        %vm2151 = vcmp.eq.f32.partialorder %v2088, inf
        %v2152 = vsel %vm2151, %v2088, %v2150
        %vm2153 = vcmp.eq.f32.partialorder %v2088, 0.0
        %v2154 = vand.u32 %v2088, 2147483648
        %v2155 = vsel %vm2153, %v2154, %v2152
        %v2156 = vrsqrt.pop %v2090
        %v2157 = vmul.f32 %v2090, %v2156
        %vm2158 = vcmp.eq.f32.partialorder %v2090, inf
        %v2159 = vsel %vm2158, %v2090, %v2157
        %vm2160 = vcmp.eq.f32.partialorder %v2090, 0.0
        %v2161 = vand.u32 %v2090, 2147483648
        %v2162 = vsel %vm2160, %v2161, %v2159
        %v2163 = vrsqrt.pop %v2092
        %v2164 = vmul.f32 %v2092, %v2163
        %vm2165 = vcmp.eq.f32.partialorder %v2092, inf
        %v2166 = vsel %vm2165, %v2092, %v2164
        %vm2167 = vcmp.eq.f32.partialorder %v2092, 0.0
        %v2168 = vand.u32 %v2092, 2147483648
        %v2169 = vsel %vm2167, %v2168, %v2166
        %v2170 = vrsqrt.pop %v2094
        %v2171 = vmul.f32 %v2094, %v2170
        %vm2172 = vcmp.eq.f32.partialorder %v2094, inf
        %v2173 = vsel %vm2172, %v2094, %v2171
        %vm2174 = vcmp.eq.f32.partialorder %v2094, 0.0
        %v2175 = vand.u32 %v2094, 2147483648
        %v2176 = vsel %vm2174, %v2175, %v2173
        %v2177 = vrsqrt.pop %v2096
        %v2178 = vmul.f32 %v2096, %v2177
        %vm2179 = vcmp.eq.f32.partialorder %v2096, inf
        %v2180 = vsel %vm2179, %v2096, %v2178
        %vm2181 = vcmp.eq.f32.partialorder %v2096, 0.0
        %v2182 = vand.u32 %v2096, 2147483648
        %v2183 = vsel %vm2181, %v2182, %v2180
        %v2184 = vrsqrt.pop %v2098
        %v2185 = vmul.f32 %v2098, %v2184
        %vm2186 = vcmp.eq.f32.partialorder %v2098, inf
        %v2187 = vsel %vm2186, %v2098, %v2185
        %vm2188 = vcmp.eq.f32.partialorder %v2098, 0.0
        %v2189 = vand.u32 %v2098, 2147483648
        %v2190 = vsel %vm2188, %v2189, %v2187
        %v2191 = vrsqrt.pop %v2100
        %v2192 = vmul.f32 %v2100, %v2191
        %vm2193 = vcmp.eq.f32.partialorder %v2100, inf
        %v2194 = vsel %vm2193, %v2100, %v2192
        %vm2195 = vcmp.eq.f32.partialorder %v2100, 0.0
        %v2196 = vand.u32 %v2100, 2147483648
        %v2197 = vsel %vm2195, %v2196, %v2194
        %v2198 = vrsqrt.pop %v2102
        %v2199 = vmul.f32 %v2102, %v2198
        %vm2200 = vcmp.eq.f32.partialorder %v2102, inf
        %v2201 = vsel %vm2200, %v2102, %v2199
        %vm2202 = vcmp.eq.f32.partialorder %v2102, 0.0
        %v2203 = vand.u32 %v2102, 2147483648
        %v2204 = vsel %vm2202, %v2203, %v2201
        %v2205 = vrsqrt.pop %v2104
        %v2206 = vmul.f32 %v2104, %v2205
        %vm2207 = vcmp.eq.f32.partialorder %v2104, inf
        %v2208 = vsel %vm2207, %v2104, %v2206
        %vm2209 = vcmp.eq.f32.partialorder %v2104, 0.0
        %v2210 = vand.u32 %v2104, 2147483648
        %v2211 = vsel %vm2209, %v2210, %v2208
        %v2212 = vrsqrt.pop %v2106
        %v2213 = vmul.f32 %v2106, %v2212
        %vm2214 = vcmp.eq.f32.partialorder %v2106, inf
        %v2215 = vsel %vm2214, %v2106, %v2213
        %vm2216 = vcmp.eq.f32.partialorder %v2106, 0.0
        %v2217 = vand.u32 %v2106, 2147483648
        %v2218 = vsel %vm2216, %v2217, %v2215
        %v2219 = vmax.f32 %v2113, 1e-12
        %v2220 = vmax.f32 %v2120, 1e-12
        %v2221 = vmax.f32 %v2127, 1e-12
        %v2222 = vmax.f32 %v2134, 1e-12
        %v2223 = vmax.f32 %v2141, 1e-12
        %v2224 = vmax.f32 %v2148, 1e-12
        %v2225 = vmax.f32 %v2155, 1e-12
        %v2226 = vmax.f32 %v2162, 1e-12
        %v2227 = vmax.f32 %v2169, 1e-12
        %v2228 = vmax.f32 %v2176, 1e-12
        %v2229 = vmax.f32 %v2183, 1e-12
        %v2230 = vmax.f32 %v2190, 1e-12
        %v2231 = vmax.f32 %v2197, 1e-12
        %v2232 = vmax.f32 %v2204, 1e-12
        %v2233 = vmax.f32 %v2211, 1e-12
        %v2234 = vmax.f32 %v2218, 1e-12
        %v2235 = vrcp.pop %v2219
        %v2236 = vmul.f32 %v1981, %v2235
        %v2237 = vrcp.pop %v2220
        %v2238 = vmul.f32 %v1985, %v2237
        %v2239 = vrcp.pop %v2221
        %v2240 = vmul.f32 %v1991, %v2239
        %v2241 = vrcp.pop %v2222
        %v2242 = vmul.f32 %v1995, %v2241
        %v2243 = vrcp.pop %v2223
        %v2244 = vmul.f32 %v2001, %v2243
        %v2245 = vrcp.pop %v2224
        %v2246 = vmul.f32 %v2005, %v2245
        %v2247 = vrcp.pop %v2225
        %v2248 = vmul.f32 %v2011, %v2247
        %v2249 = vrcp.pop %v2226
        %v2250 = vmul.f32 %v2015, %v2249
        %v2251 = vrcp.pop %v2227
        %v2252 = vmul.f32 %v2021, %v2251
        %v2253 = vrcp.pop %v2228
        %v2254 = vmul.f32 %v2025, %v2253
        %v2255 = vrcp.pop %v2229
        %v2256 = vmul.f32 %v2031, %v2255
        %v2257 = vrcp.pop %v2230
        %v2258 = vmul.f32 %v2035, %v2257
        %v2259 = vrcp.pop %v2231
        %v2260 = vmul.f32 %v2041, %v2259
        %v2261 = vrcp.pop %v2232
        %v2262 = vmul.f32 %v2045, %v2261
        %v2263 = vrcp.pop %v2233
        %v2264 = vmul.f32 %v2051, %v2263
        %v2265 = vrcp.pop %v2234
        %v2266 = vmul.f32 %v2055, %v2265
        %v2267 = vmul.f32 %v1983, %v1983
        %v2268 = vmul.f32 %v1987, %v1987
        %v2269 = vmul.f32 %v1993, %v1993
        %v2270 = vmul.f32 %v1997, %v1997
        %v2271 = vmul.f32 %v2003, %v2003
        %v2272 = vmul.f32 %v2007, %v2007
        %v2273 = vmul.f32 %v2013, %v2013
        %v2274 = vmul.f32 %v2017, %v2017
        %v2275 = vmul.f32 %v2023, %v2023
        %v2276 = vmul.f32 %v2027, %v2027
        %v2277 = vmul.f32 %v2033, %v2033
        %v2278 = vmul.f32 %v2037, %v2037
        %v2279 = vmul.f32 %v2043, %v2043
        %v2280 = vmul.f32 %v2047, %v2047
        %v2281 = vmul.f32 %v2053, %v2053
        %v2282 = vmul.f32 %v2057, %v2057
        %2283 = vadd.xlane.f32.xlu0 %v2267
        %v2284 = vpop.xlane.xlu0 %2283
        %2285 = vadd.xlane.f32.xlu0 %v2268
        %v2286 = vpop.xlane.xlu0 %2285
        %2287 = vadd.xlane.f32.xlu0 %v2269
        %v2288 = vpop.xlane.xlu0 %2287
        %2289 = vadd.xlane.f32.xlu0 %v2270
        %v2290 = vpop.xlane.xlu0 %2289
        %2291 = vadd.xlane.f32.xlu0 %v2271
        %v2292 = vpop.xlane.xlu0 %2291
        %2293 = vadd.xlane.f32.xlu0 %v2272
        %v2294 = vpop.xlane.xlu0 %2293
        %2295 = vadd.xlane.f32.xlu0 %v2273
        %v2296 = vpop.xlane.xlu0 %2295
        %2297 = vadd.xlane.f32.xlu0 %v2274
        %v2298 = vpop.xlane.xlu0 %2297
        %2299 = vadd.xlane.f32.xlu0 %v2275
        %v2300 = vpop.xlane.xlu0 %2299
        %2301 = vadd.xlane.f32.xlu0 %v2276
        %v2302 = vpop.xlane.xlu0 %2301
        %2303 = vadd.xlane.f32.xlu0 %v2277
        %v2304 = vpop.xlane.xlu0 %2303
        %2305 = vadd.xlane.f32.xlu0 %v2278
        %v2306 = vpop.xlane.xlu0 %2305
        %2307 = vadd.xlane.f32.xlu0 %v2279
        %v2308 = vpop.xlane.xlu0 %2307
        %2309 = vadd.xlane.f32.xlu0 %v2280
        %v2310 = vpop.xlane.xlu0 %2309
        %2311 = vadd.xlane.f32.xlu0 %v2281
        %v2312 = vpop.xlane.xlu0 %2311
        %2313 = vadd.xlane.f32.xlu0 %v2282
        %v2314 = vpop.xlane.xlu0 %2313
        %v2315 = vrsqrt.pop %v2284
        %v2316 = vmul.f32 %v2284, %v2315
        %vm2317 = vcmp.eq.f32.partialorder %v2284, inf
        %v2318 = vsel %vm2317, %v2284, %v2316
        %vm2319 = vcmp.eq.f32.partialorder %v2284, 0.0
        %v2320 = vand.u32 %v2284, 2147483648
        %v2321 = vsel %vm2319, %v2320, %v2318
        %v2322 = vrsqrt.pop %v2286
        %v2323 = vmul.f32 %v2286, %v2322
        %vm2324 = vcmp.eq.f32.partialorder %v2286, inf
        %v2325 = vsel %vm2324, %v2286, %v2323
        %vm2326 = vcmp.eq.f32.partialorder %v2286, 0.0
        %v2327 = vand.u32 %v2286, 2147483648
        %v2328 = vsel %vm2326, %v2327, %v2325
        %v2329 = vrsqrt.pop %v2288
        %v2330 = vmul.f32 %v2288, %v2329
        %vm2331 = vcmp.eq.f32.partialorder %v2288, inf
        %v2332 = vsel %vm2331, %v2288, %v2330
        %vm2333 = vcmp.eq.f32.partialorder %v2288, 0.0
        %v2334 = vand.u32 %v2288, 2147483648
        %v2335 = vsel %vm2333, %v2334, %v2332
        %v2336 = vrsqrt.pop %v2290
        %v2337 = vmul.f32 %v2290, %v2336
        %vm2338 = vcmp.eq.f32.partialorder %v2290, inf
        %v2339 = vsel %vm2338, %v2290, %v2337
        %vm2340 = vcmp.eq.f32.partialorder %v2290, 0.0
        %v2341 = vand.u32 %v2290, 2147483648
        %v2342 = vsel %vm2340, %v2341, %v2339
        %v2343 = vrsqrt.pop %v2292
        %v2344 = vmul.f32 %v2292, %v2343
        %vm2345 = vcmp.eq.f32.partialorder %v2292, inf
        %v2346 = vsel %vm2345, %v2292, %v2344
        %vm2347 = vcmp.eq.f32.partialorder %v2292, 0.0
        %v2348 = vand.u32 %v2292, 2147483648
        %v2349 = vsel %vm2347, %v2348, %v2346
        %v2350 = vrsqrt.pop %v2294
        %v2351 = vmul.f32 %v2294, %v2350
        %vm2352 = vcmp.eq.f32.partialorder %v2294, inf
        %v2353 = vsel %vm2352, %v2294, %v2351
        %vm2354 = vcmp.eq.f32.partialorder %v2294, 0.0
        %v2355 = vand.u32 %v2294, 2147483648
        %v2356 = vsel %vm2354, %v2355, %v2353
        %v2357 = vrsqrt.pop %v2296
        %v2358 = vmul.f32 %v2296, %v2357
        %vm2359 = vcmp.eq.f32.partialorder %v2296, inf
        %v2360 = vsel %vm2359, %v2296, %v2358
        %vm2361 = vcmp.eq.f32.partialorder %v2296, 0.0
        %v2362 = vand.u32 %v2296, 2147483648
        %v2363 = vsel %vm2361, %v2362, %v2360
        %v2364 = vrsqrt.pop %v2298
        %v2365 = vmul.f32 %v2298, %v2364
        %vm2366 = vcmp.eq.f32.partialorder %v2298, inf
        %v2367 = vsel %vm2366, %v2298, %v2365
        %vm2368 = vcmp.eq.f32.partialorder %v2298, 0.0
        %v2369 = vand.u32 %v2298, 2147483648
        %v2370 = vsel %vm2368, %v2369, %v2367
        %v2371 = vrsqrt.pop %v2300
        %v2372 = vmul.f32 %v2300, %v2371
        %vm2373 = vcmp.eq.f32.partialorder %v2300, inf
        %v2374 = vsel %vm2373, %v2300, %v2372
        %vm2375 = vcmp.eq.f32.partialorder %v2300, 0.0
        %v2376 = vand.u32 %v2300, 2147483648
        %v2377 = vsel %vm2375, %v2376, %v2374
        %v2378 = vrsqrt.pop %v2302
        %v2379 = vmul.f32 %v2302, %v2378
        %vm2380 = vcmp.eq.f32.partialorder %v2302, inf
        %v2381 = vsel %vm2380, %v2302, %v2379
        %vm2382 = vcmp.eq.f32.partialorder %v2302, 0.0
        %v2383 = vand.u32 %v2302, 2147483648
        %v2384 = vsel %vm2382, %v2383, %v2381
        %v2385 = vrsqrt.pop %v2304
        %v2386 = vmul.f32 %v2304, %v2385
        %vm2387 = vcmp.eq.f32.partialorder %v2304, inf
        %v2388 = vsel %vm2387, %v2304, %v2386
        %vm2389 = vcmp.eq.f32.partialorder %v2304, 0.0
        %v2390 = vand.u32 %v2304, 2147483648
        %v2391 = vsel %vm2389, %v2390, %v2388
        %v2392 = vrsqrt.pop %v2306
        %v2393 = vmul.f32 %v2306, %v2392
        %vm2394 = vcmp.eq.f32.partialorder %v2306, inf
        %v2395 = vsel %vm2394, %v2306, %v2393
        %vm2396 = vcmp.eq.f32.partialorder %v2306, 0.0
        %v2397 = vand.u32 %v2306, 2147483648
        %v2398 = vsel %vm2396, %v2397, %v2395
        %v2399 = vrsqrt.pop %v2308
        %v2400 = vmul.f32 %v2308, %v2399
        %vm2401 = vcmp.eq.f32.partialorder %v2308, inf
        %v2402 = vsel %vm2401, %v2308, %v2400
        %vm2403 = vcmp.eq.f32.partialorder %v2308, 0.0
        %v2404 = vand.u32 %v2308, 2147483648
        %v2405 = vsel %vm2403, %v2404, %v2402
        %v2406 = vrsqrt.pop %v2310
        %v2407 = vmul.f32 %v2310, %v2406
        %vm2408 = vcmp.eq.f32.partialorder %v2310, inf
        %v2409 = vsel %vm2408, %v2310, %v2407
        %vm2410 = vcmp.eq.f32.partialorder %v2310, 0.0
        %v2411 = vand.u32 %v2310, 2147483648
        %v2412 = vsel %vm2410, %v2411, %v2409
        %v2413 = vrsqrt.pop %v2312
        %v2414 = vmul.f32 %v2312, %v2413
        %vm2415 = vcmp.eq.f32.partialorder %v2312, inf
        %v2416 = vsel %vm2415, %v2312, %v2414
        %vm2417 = vcmp.eq.f32.partialorder %v2312, 0.0
        %v2418 = vand.u32 %v2312, 2147483648
        %v2419 = vsel %vm2417, %v2418, %v2416
        %v2420 = vrsqrt.pop %v2314
        %v2421 = vmul.f32 %v2314, %v2420
        %vm2422 = vcmp.eq.f32.partialorder %v2314, inf
        %v2423 = vsel %vm2422, %v2314, %v2421
        %vm2424 = vcmp.eq.f32.partialorder %v2314, 0.0
        %v2425 = vand.u32 %v2314, 2147483648
        %v2426 = vsel %vm2424, %v2425, %v2423
        %v2427 = vmax.f32 %v2321, 1e-12
        %v2428 = vmax.f32 %v2328, 1e-12
        %v2429 = vmax.f32 %v2335, 1e-12
        %v2430 = vmax.f32 %v2342, 1e-12
        %v2431 = vmax.f32 %v2349, 1e-12
        %v2432 = vmax.f32 %v2356, 1e-12
        %v2433 = vmax.f32 %v2363, 1e-12
        %v2434 = vmax.f32 %v2370, 1e-12
        %v2435 = vmax.f32 %v2377, 1e-12
        %v2436 = vmax.f32 %v2384, 1e-12
        %v2437 = vmax.f32 %v2391, 1e-12
        %v2438 = vmax.f32 %v2398, 1e-12
        %v2439 = vmax.f32 %v2405, 1e-12
        %v2440 = vmax.f32 %v2412, 1e-12
        %v2441 = vmax.f32 %v2419, 1e-12
        %v2442 = vmax.f32 %v2426, 1e-12
        %v2443 = vrcp.pop %v2427
        %v2444 = vmul.f32 %v1983, %v2443
        %v2445 = vrcp.pop %v2428
        %v2446 = vmul.f32 %v1987, %v2445
        %v2447 = vrcp.pop %v2429
        %v2448 = vmul.f32 %v1993, %v2447
        %v2449 = vrcp.pop %v2430
        %v2450 = vmul.f32 %v1997, %v2449
        %v2451 = vrcp.pop %v2431
        %v2452 = vmul.f32 %v2003, %v2451
        %v2453 = vrcp.pop %v2432
        %v2454 = vmul.f32 %v2007, %v2453
        %v2455 = vrcp.pop %v2433
        %v2456 = vmul.f32 %v2013, %v2455
        %v2457 = vrcp.pop %v2434
        %v2458 = vmul.f32 %v2017, %v2457
        %v2459 = vrcp.pop %v2435
        %v2460 = vmul.f32 %v2023, %v2459
        %v2461 = vrcp.pop %v2436
        %v2462 = vmul.f32 %v2027, %v2461
        %v2463 = vrcp.pop %v2437
        %v2464 = vmul.f32 %v2033, %v2463
        %v2465 = vrcp.pop %v2438
        %v2466 = vmul.f32 %v2037, %v2465
        %v2467 = vrcp.pop %v2439
        %v2468 = vmul.f32 %v2043, %v2467
        %v2469 = vrcp.pop %v2440
        %v2470 = vmul.f32 %v2047, %v2469
        %v2471 = vrcp.pop %v2441
        %v2472 = vmul.f32 %v2053, %v2471
        %v2473 = vrcp.pop %v2442
        %v2474 = vmul.f32 %v2057, %v2473
        %v2475 = vld [vmem:[%s12] sm:$0x1]
        %v2477 = vlaneseq
        %v2478 = vshrl.u32 %v2477, 7
        %v2479 = vsub.s32 0, %v2478
        %v2480 = vrot.slane %v2475, %v2479
        %v2482 = vmul.f32 %v2236, %v2480
        %v2483 = vmul.f32 %v2238, %v2480
        %v2484 = vmul.f32 %v2240, %v2480
        %v2485 = vmul.f32 %v2242, %v2480
        %v2486 = vmul.f32 %v2244, %v2480
        %v2487 = vmul.f32 %v2246, %v2480
        %v2488 = vmul.f32 %v2248, %v2480
        %v2489 = vmul.f32 %v2250, %v2480
        %v2490 = vmul.f32 %v2252, %v2480
        %v2491 = vmul.f32 %v2254, %v2480
        %v2492 = vmul.f32 %v2256, %v2480
        %v2493 = vmul.f32 %v2258, %v2480
        %v2494 = vmul.f32 %v2260, %v2480
        %v2495 = vmul.f32 %v2262, %v2480
        %v2496 = vmul.f32 %v2264, %v2480
        %v2497 = vmul.f32 %v2266, %v2480
        %2498 = vadd.xlane.f32.xlu0 %v2482
        %v2499 = vpop.xlane.xlu0 %2498
        %2500 = vadd.xlane.f32.xlu0 %v2483
        %v2501 = vpop.xlane.xlu0 %2500
        %2502 = vadd.xlane.f32.xlu0 %v2484
        %v2503 = vpop.xlane.xlu0 %2502
        %2504 = vadd.xlane.f32.xlu0 %v2485
        %v2505 = vpop.xlane.xlu0 %2504
        %2506 = vadd.xlane.f32.xlu0 %v2486
        %v2507 = vpop.xlane.xlu0 %2506
        %2508 = vadd.xlane.f32.xlu0 %v2487
        %v2509 = vpop.xlane.xlu0 %2508
        %2510 = vadd.xlane.f32.xlu0 %v2488
        %v2511 = vpop.xlane.xlu0 %2510
        %2512 = vadd.xlane.f32.xlu0 %v2489
        %v2513 = vpop.xlane.xlu0 %2512
        %2514 = vadd.xlane.f32.xlu0 %v2490
        %v2515 = vpop.xlane.xlu0 %2514
        %2516 = vadd.xlane.f32.xlu0 %v2491
        %v2517 = vpop.xlane.xlu0 %2516
        %2518 = vadd.xlane.f32.xlu0 %v2492
        %v2519 = vpop.xlane.xlu0 %2518
        %2520 = vadd.xlane.f32.xlu0 %v2493
        %v2521 = vpop.xlane.xlu0 %2520
        %2522 = vadd.xlane.f32.xlu0 %v2494
        %v2523 = vpop.xlane.xlu0 %2522
        %2524 = vadd.xlane.f32.xlu0 %v2495
        %v2525 = vpop.xlane.xlu0 %2524
        %2526 = vadd.xlane.f32.xlu0 %v2496
        %v2527 = vpop.xlane.xlu0 %2526
        %2528 = vadd.xlane.f32.xlu0 %v2497
        %v2529 = vpop.xlane.xlu0 %2528
        %v2530 = vmul.f32 %v2499, 0.088388346
        %v2531 = vmul.f32 %v2501, 0.088388346
        %v2532 = vmul.f32 %v2503, 0.088388346
        %v2533 = vmul.f32 %v2505, 0.088388346
        %v2534 = vmul.f32 %v2507, 0.088388346
        %v2535 = vmul.f32 %v2509, 0.088388346
        %v2536 = vmul.f32 %v2511, 0.088388346
        %v2537 = vmul.f32 %v2513, 0.088388346
        %v2538 = vmul.f32 %v2515, 0.088388346
        %v2539 = vmul.f32 %v2517, 0.088388346
        %v2540 = vmul.f32 %v2519, 0.088388346
        %v2541 = vmul.f32 %v2521, 0.088388346
        %v2542 = vmul.f32 %v2523, 0.088388346
        %v2543 = vmul.f32 %v2525, 0.088388346
        %v2544 = vmul.f32 %v2527, 0.088388346
        %v2545 = vmul.f32 %v2529, 0.088388346
        %v2546 = vmul.f32 %v2530, %v2530
        %v2547 = vmul.f32 %v2531, %v2531
        %v2548 = vmul.f32 %v2532, %v2532
        %v2549 = vmul.f32 %v2533, %v2533
        %v2550 = vmul.f32 %v2534, %v2534
        %v2551 = vmul.f32 %v2535, %v2535
        %v2552 = vmul.f32 %v2536, %v2536
        %v2553 = vmul.f32 %v2537, %v2537
        %v2554 = vmul.f32 %v2538, %v2538
        %v2555 = vmul.f32 %v2539, %v2539
        %v2556 = vmul.f32 %v2540, %v2540
        %v2557 = vmul.f32 %v2541, %v2541
        %v2558 = vmul.f32 %v2542, %v2542
        %v2559 = vmul.f32 %v2543, %v2543
        %v2560 = vmul.f32 %v2544, %v2544
        %v2561 = vmul.f32 %v2545, %v2545
        %v2562 = vadd.f32 %v2546, %v2547
        %v2563 = vadd.f32 %v2562, %v2548
        %v2564 = vadd.f32 %v2563, %v2549
        %v2565 = vadd.f32 %v2564, %v2550
        %v2566 = vadd.f32 %v2565, %v2551
        %v2567 = vadd.f32 %v2566, %v2552
        %v2568 = vadd.f32 %v2567, %v2553
        %v2569 = vrot.slane %v2568, 4
        %v2570 = vadd.f32 %v2568, %v2569
        %v2571 = vrot.slane %v2570, 2
        %v2572 = vadd.f32 %v2570, %v2571
        %v2573 = vrot.slane %v2572, 1
        %v2574 = vadd.f32 %v2572, %v2573
        %v2575 = vadd.f32 %v2554, %v2555
        %v2576 = vadd.f32 %v2575, %v2556
        %v2577 = vadd.f32 %v2576, %v2557
        %v2578 = vadd.f32 %v2577, %v2558
        %v2579 = vadd.f32 %v2578, %v2559
        %v2580 = vadd.f32 %v2579, %v2560
        %v2581 = vadd.f32 %v2580, %v2561
        %v2582 = vrot.slane %v2581, 4
        %v2583 = vadd.f32 %v2581, %v2582
        %v2584 = vrot.slane %v2583, 2
        %v2585 = vadd.f32 %v2583, %v2584
        %v2586 = vrot.slane %v2585, 1
        %v2587 = vadd.f32 %v2585, %v2586
        %v2588 = vrsqrt.pop %v2574
        %v2589 = vmul.f32 %v2574, %v2588
        %vm2590 = vcmp.eq.f32.partialorder %v2574, inf
        %v2591 = vsel %vm2590, %v2574, %v2589
        %vm2592 = vcmp.eq.f32.partialorder %v2574, 0.0
        %v2593 = vand.u32 %v2574, 2147483648
        %v2594 = vsel %vm2592, %v2593, %v2591
        %v2595 = vrsqrt.pop %v2587
        %v2596 = vmul.f32 %v2587, %v2595
        %vm2597 = vcmp.eq.f32.partialorder %v2587, inf
        %v2598 = vsel %vm2597, %v2587, %v2596
        %vm2599 = vcmp.eq.f32.partialorder %v2587, 0.0
        %v2600 = vand.u32 %v2587, 2147483648
        %v2601 = vsel %vm2599, %v2600, %v2598
        %v2602 = vmax.f32 %v2594, 1e-12
        %v2603 = vmax.f32 %v2601, 1e-12
        %v2604 = vrcp.pop %v2602
        %v2605 = vmul.f32 %v2530, %v2604
        %v2606 = vmul.f32 %v2531, %v2604
        %v2607 = vmul.f32 %v2532, %v2604
        %v2608 = vmul.f32 %v2533, %v2604
        %v2609 = vmul.f32 %v2534, %v2604
        %v2610 = vmul.f32 %v2535, %v2604
        %v2611 = vmul.f32 %v2536, %v2604
        %v2612 = vmul.f32 %v2537, %v2604
        %v2613 = vrcp.pop %v2603
        %v2614 = vmul.f32 %v2538, %v2613
        %v2615 = vmul.f32 %v2539, %v2613
        %v2616 = vmul.f32 %v2540, %v2613
        %v2617 = vmul.f32 %v2541, %v2613
        %v2618 = vmul.f32 %v2542, %v2613
        %v2619 = vmul.f32 %v2543, %v2613
        %v2620 = vmul.f32 %v2544, %v2613
        %v2621 = vmul.f32 %v2545, %v2613
        %v2622 = vmul.f32 %v2605, %v2236
        %v2623 = vmul.f32 %v2606, %v2238
        %v2624 = vmul.f32 %v2607, %v2240
        %v2625 = vmul.f32 %v2608, %v2242
        %v2626 = vmul.f32 %v2609, %v2244
        %v2627 = vmul.f32 %v2610, %v2246
        %v2628 = vmul.f32 %v2611, %v2248
        %v2629 = vmul.f32 %v2612, %v2250
        %v2630 = vmul.f32 %v2614, %v2252
        %v2631 = vmul.f32 %v2615, %v2254
        %v2632 = vmul.f32 %v2616, %v2256
        %v2633 = vmul.f32 %v2617, %v2258
        %v2634 = vmul.f32 %v2618, %v2260
        %v2635 = vmul.f32 %v2619, %v2262
        %v2636 = vmul.f32 %v2620, %v2264
        %v2637 = vmul.f32 %v2621, %v2266
        %v2638 = vadd.f32 %v2622, %v2623
        %v2639 = vadd.f32 %v2638, %v2624
        %v2640 = vadd.f32 %v2639, %v2625
        %v2641 = vadd.f32 %v2640, %v2626
        %v2642 = vadd.f32 %v2641, %v2627
        %v2643 = vadd.f32 %v2642, %v2628
        %v2644 = vadd.f32 %v2643, %v2629
        %v2645 = vrot.slane %v2644, 4
        %v2646 = vadd.f32 %v2644, %v2645
        %v2647 = vrot.slane %v2646, 2
        %v2648 = vadd.f32 %v2646, %v2647
        %v2649 = vrot.slane %v2648, 1
        %v2650 = vadd.f32 %v2648, %v2649
        %v2651 = vadd.f32 %v2630, %v2631
        %v2652 = vadd.f32 %v2651, %v2632
        %v2653 = vadd.f32 %v2652, %v2633
        %v2654 = vadd.f32 %v2653, %v2634
        %v2655 = vadd.f32 %v2654, %v2635
        %v2656 = vadd.f32 %v2655, %v2636
        %v2657 = vadd.f32 %v2656, %v2637
        %v2658 = vrot.slane %v2657, 4
        %v2659 = vadd.f32 %v2657, %v2658
        %v2660 = vrot.slane %v2659, 2
        %v2661 = vadd.f32 %v2659, %v2660
        %v2662 = vrot.slane %v2661, 1
        %v2663 = vadd.f32 %v2661, %v2662
        %v2664 = vmul.f32 %v2650, %v2444
        %v2665 = vmul.f32 %v2650, %v2446
        %v2666 = vmul.f32 %v2650, %v2448
        %v2667 = vmul.f32 %v2650, %v2450
        %v2668 = vmul.f32 %v2650, %v2452
        %v2669 = vmul.f32 %v2650, %v2454
        %v2670 = vmul.f32 %v2650, %v2456
        %v2671 = vmul.f32 %v2650, %v2458
        %v2672 = vmul.f32 %v2663, %v2460
        %v2673 = vmul.f32 %v2663, %v2462
        %v2674 = vmul.f32 %v2663, %v2464
        %v2675 = vmul.f32 %v2663, %v2466
        %v2676 = vmul.f32 %v2663, %v2468
        %v2677 = vmul.f32 %v2663, %v2470
        %v2678 = vmul.f32 %v2663, %v2472
        %v2679 = vmul.f32 %v2663, %v2474
        %v2680 = vpack.c.bf16 %v2665, %v2664
        %v2681 = vpack.c.bf16 %v2667, %v2666
        %v2682 = vpack.c.bf16 %v2669, %v2668
        %v2683 = vpack.c.bf16 %v2671, %v2670
        %v2684 = vpack.c.bf16 %v2673, %v2672
        %v2685 = vpack.c.bf16 %v2675, %v2674
        %v2686 = vpack.c.bf16 %v2677, %v2676
        %v2687 = vpack.c.bf16 %v2679, %v2678
        %v2688 = vld [vmem:[%s13] sm:$0xf]
        %v2689 = vld [vmem:[%s13 + $0x4] sm:$0xf]
        %v2690 = vld [vmem:[%s13 + $0x8] sm:$0xf]
        %v2691 = vld [vmem:[%s13 + $0xc] sm:$0xf]
        %v2692 = vld [vmem:[%s13 + $0x10] sm:$0xf]
        %v2693 = vld [vmem:[%s13 + $0x14] sm:$0xf]
        %v2694 = vld [vmem:[%s13 + $0x18] sm:$0xf]
        %v2695 = vld [vmem:[%s13 + $0x1c] sm:$0xf]
        %v2696 = vld [vmem:[%s13 + $0x20] sm:$0xf]
        %v2697 = vld [vmem:[%s13 + $0x24] sm:$0xf]
        %v2698 = vld [vmem:[%s13 + $0x28] sm:$0xf]
        %v2699 = vld [vmem:[%s13 + $0x2c] sm:$0xf]
        %v2700 = vld [vmem:[%s13 + $0x30] sm:$0xf]
        %v2701 = vld [vmem:[%s13 + $0x34] sm:$0xf]
        %v2702 = vld [vmem:[%s13 + $0x38] sm:$0xf]
        %v2703 = vld [vmem:[%s13 + $0x3c] sm:$0xf]
        %v2704 = vld [vmem:[%s14] sm:$0x1]
        %v2706 = vlaneseq
        %v2707 = vshrl.u32 %v2706, 7
        %v2708 = vsub.s32 0, %v2707
        %v2709 = vrot.slane %v2704, %v2708
        %v2727 = vunpack.c.l.b16 %v2688
        %v2728 = vunpack.c.l.b16 %v2689
        %v2729 = vunpack.c.l.b16 %v2690
        %v2730 = vunpack.c.l.b16 %v2691
        %v2731 = vunpack.c.l.b16 %v2692
        %v2732 = vunpack.c.l.b16 %v2693
        %v2733 = vunpack.c.l.b16 %v2694
        %v2734 = vunpack.c.l.b16 %v2695
        %v2735 = vunpack.c.l.b16 %v2696
        %v2736 = vunpack.c.l.b16 %v2697
        %v2737 = vunpack.c.l.b16 %v2698
        %v2738 = vunpack.c.l.b16 %v2699
        %v2739 = vunpack.c.l.b16 %v2700
        %v2740 = vunpack.c.l.b16 %v2701
        %v2741 = vunpack.c.l.b16 %v2702
        %v2742 = vunpack.c.l.b16 %v2703
        %v2743 = vpack.c.b16 %v2728, %v2727
        %v2744 = vpack.c.b16 %v2730, %v2729
        %v2745 = vpack.c.b16 %v2732, %v2731
        %v2746 = vpack.c.b16 %v2734, %v2733
        %v2747 = vpack.c.b16 %v2736, %v2735
        %v2748 = vpack.c.b16 %v2738, %v2737
        %v2749 = vpack.c.b16 %v2740, %v2739
        %v2750 = vpack.c.b16 %v2742, %v2741
        %2759 = vmatprep.subr.bf16.mxu0 0
        %2760 = vmatpush1.bf16.msra.mxu0 %v2743
        %2761 = vmatprep.subr.bf16.mxu0 0
        %2762 = vmatpush1.bf16.msra.mxu0 %v2744
        %2763 = vmatprep.subr.bf16.mxu0 0
        %2764 = vmatpush1.bf16.msra.mxu0 %v2745
        %2765 = vmatprep.subr.bf16.mxu0 0
        %2766 = vmatpush1.bf16.msra.mxu0 %v2746
        %2767 = vmatprep.subr.bf16.mxu0 0
        %2768 = vmatpush1.bf16.msra.mxu0 %v2747
        %2769 = vmatprep.subr.bf16.mxu0 0
        %2770 = vmatpush1.bf16.msra.mxu0 %v2748
        %2771 = vmatprep.subr.bf16.mxu0 0
        %2772 = vmatpush1.bf16.msra.mxu0 %v2749
        %2773 = vmatprep.subr.bf16.mxu0 0
        %2774 = vmatpush1.bf16.msra.mxu0 %v2750
        %2775 = vmatprep.subr.bf16.mxu0 0
        %2776 = vmatpush1.bf16.msra.mxu0 0
        %2777 = vmatprep.subr.bf16.mxu0 0
        %2778 = vmatpush1.bf16.msra.mxu0 0
        %2779 = vmatprep.subr.bf16.mxu0 0
        %2780 = vmatpush1.bf16.msra.mxu0 0
        %2781 = vmatprep.subr.bf16.mxu0 0
        %2782 = vmatpush1.bf16.msra.mxu0 0
        %2783 = vmatprep.subr.bf16.mxu0 0
        %2784 = vmatpush1.bf16.msra.mxu0 0
        %2785 = vmatprep.subr.bf16.mxu0 0
        %2786 = vmatpush1.bf16.msra.mxu0 0
        %2787 = vmatprep.subr.bf16.mxu0 0
        %2788 = vmatpush1.bf16.msra.mxu0 0
        %2789 = vmatprep.subr.bf16.mxu0 0
        %2790 = vmatpush1.bf16.msra.mxu0 0
        %2791 = vmatprep.mubr.bf16.mxu0 0
        %2792 = vmatmul.mubr.bf16.gmra.mrb[0].mxu0 %v2680
        %v2793 = vpop.f32.mrb[0].mxu0
        %v2794 = vadd.f32 %v2709, %v2793
        %v2795 = vpop.f32.mrb[0].mxu0
        %v2796 = vpop.f32.mrb[0].mxu0
        %v2797 = vadd.f32 %v2709, %v2796
        %v2798 = vpop.f32.mrb[0].mxu0
        %2799 = vmatprep.mubr.bf16.mxu0 0
        %2800 = vmatmul.mubr.bf16.gmra.mrb[0].mxu0 %v2681
        %v2801 = vpop.f32.mrb[0].mxu0
        %v2802 = vadd.f32 %v2709, %v2801
        %v2803 = vpop.f32.mrb[0].mxu0
        %v2804 = vpop.f32.mrb[0].mxu0
        %v2805 = vadd.f32 %v2709, %v2804
        %v2806 = vpop.f32.mrb[0].mxu0
        %2807 = vmatprep.mubr.bf16.mxu0 0
        %2808 = vmatmul.mubr.bf16.gmra.mrb[0].mxu0 %v2682
        %v2809 = vpop.f32.mrb[0].mxu0
        %v2810 = vadd.f32 %v2709, %v2809
        %v2811 = vpop.f32.mrb[0].mxu0
        %v2812 = vpop.f32.mrb[0].mxu0
        %v2813 = vadd.f32 %v2709, %v2812
        %v2814 = vpop.f32.mrb[0].mxu0
        %2815 = vmatprep.mubr.bf16.mxu0 0
        %2816 = vmatmul.mubr.bf16.gmra.mrb[0].mxu0 %v2683
        %v2817 = vpop.f32.mrb[0].mxu0
        %v2818 = vadd.f32 %v2709, %v2817
        %v2819 = vpop.f32.mrb[0].mxu0
        %v2820 = vpop.f32.mrb[0].mxu0
        %v2821 = vadd.f32 %v2709, %v2820
        %v2822 = vpop.f32.mrb[0].mxu0
        %2823 = vmatprep.mubr.bf16.mxu0 0
        %2824 = vmatmul.mubr.bf16.gmra.mrb[0].mxu0 %v2684
        %v2825 = vpop.f32.mrb[0].mxu0
        %v2826 = vadd.f32 %v2709, %v2825
        %v2827 = vpop.f32.mrb[0].mxu0
        %v2828 = vpop.f32.mrb[0].mxu0
        %v2829 = vadd.f32 %v2709, %v2828
        %v2830 = vpop.f32.mrb[0].mxu0
        %2831 = vmatprep.mubr.bf16.mxu0 0
        %2832 = vmatmul.mubr.bf16.gmra.mrb[0].mxu0 %v2685
        %v2833 = vpop.f32.mrb[0].mxu0
        %v2834 = vadd.f32 %v2709, %v2833
        %v2835 = vpop.f32.mrb[0].mxu0
        %v2836 = vpop.f32.mrb[0].mxu0
        %v2837 = vadd.f32 %v2709, %v2836
        %v2838 = vpop.f32.mrb[0].mxu0
        %2839 = vmatprep.mubr.bf16.mxu0 0
        %2840 = vmatmul.mubr.bf16.gmra.mrb[0].mxu0 %v2686
        %v2841 = vpop.f32.mrb[0].mxu0
        %v2842 = vadd.f32 %v2709, %v2841
        %v2843 = vpop.f32.mrb[0].mxu0
        %v2844 = vpop.f32.mrb[0].mxu0
        %v2845 = vadd.f32 %v2709, %v2844
        %v2846 = vpop.f32.mrb[0].mxu0
        %2847 = vmatprep.mubr.bf16.mxu0 0
        %2848 = vmatmul.mubr.bf16.gmra.mrb[0].mxu0 %v2687
        %v2849 = vpop.f32.mrb[0].mxu0
        %v2850 = vadd.f32 %v2709, %v2849
        %v2851 = vpop.f32.mrb[0].mxu0
        %v2852 = vpop.f32.mrb[0].mxu0
        %v2853 = vadd.f32 %v2709, %v2852
        %v2854 = vpop.f32.mrb[0].mxu0
        %2855 = vdwg.mxu0
        %v2856 = vadd.f32 %v2794, %v2236
        %v2857 = vadd.f32 %v2797, %v2238
        %v2858 = vadd.f32 %v2802, %v2240
        %v2859 = vadd.f32 %v2805, %v2242
        %v2860 = vadd.f32 %v2810, %v2244
        %v2861 = vadd.f32 %v2813, %v2246
        %v2862 = vadd.f32 %v2818, %v2248
        %v2863 = vadd.f32 %v2821, %v2250
        %v2864 = vadd.f32 %v2826, %v2252
        %v2865 = vadd.f32 %v2829, %v2254
        %v2866 = vadd.f32 %v2834, %v2256
        %v2867 = vadd.f32 %v2837, %v2258
        %v2868 = vadd.f32 %v2842, %v2260
        %v2869 = vadd.f32 %v2845, %v2262
        %v2870 = vadd.f32 %v2850, %v2264
        %v2871 = vadd.f32 %v2853, %v2266
        %v2872 = vpack.c.bf16 %v2857, %v2856
        %v2873 = vpack.c.bf16 %v2859, %v2858
        %v2874 = vpack.c.bf16 %v2861, %v2860
        %v2875 = vpack.c.bf16 %v2863, %v2862
        %v2876 = vpack.c.bf16 %v2865, %v2864
        %v2877 = vpack.c.bf16 %v2867, %v2866
        %v2878 = vpack.c.bf16 %v2869, %v2868
        %v2879 = vpack.c.bf16 %v2871, %v2870
        %v2880 = vld [vmem:[%s15] sm:$0xf]
        %v2881 = vld [vmem:[%s15 + $0x4] sm:$0xf]
        %v2882 = vld [vmem:[%s15 + $0x8] sm:$0xf]
        %v2883 = vld [vmem:[%s15 + $0xc] sm:$0xf]
        %v2884 = vld [vmem:[%s15 + $0x10] sm:$0xf]
        %v2885 = vld [vmem:[%s15 + $0x14] sm:$0xf]
        %v2886 = vld [vmem:[%s15 + $0x18] sm:$0xf]
        %v2887 = vld [vmem:[%s15 + $0x1c] sm:$0xf]
        %v2888 = vld [vmem:[%s15 + $0x20] sm:$0xf]
        %v2889 = vld [vmem:[%s15 + $0x24] sm:$0xf]
        %v2890 = vld [vmem:[%s15 + $0x28] sm:$0xf]
        %v2891 = vld [vmem:[%s15 + $0x2c] sm:$0xf]
        %v2892 = vld [vmem:[%s15 + $0x30] sm:$0xf]
        %v2893 = vld [vmem:[%s15 + $0x34] sm:$0xf]
        %v2894 = vld [vmem:[%s15 + $0x38] sm:$0xf]
        %v2895 = vld [vmem:[%s15 + $0x3c] sm:$0xf]
        %v2896 = vld [vmem:[%s16] sm:$0x1]
        %v2898 = vlaneseq
        %v2899 = vshrl.u32 %v2898, 7
        %v2900 = vsub.s32 0, %v2899
        %v2901 = vrot.slane %v2896, %v2900
        %v2919 = vunpack.c.l.b16 %v2880
        %v2920 = vunpack.c.l.b16 %v2881
        %v2921 = vunpack.c.l.b16 %v2882
        %v2922 = vunpack.c.l.b16 %v2883
        %v2923 = vunpack.c.l.b16 %v2884
        %v2924 = vunpack.c.l.b16 %v2885
        %v2925 = vunpack.c.l.b16 %v2886
        %v2926 = vunpack.c.l.b16 %v2887
        %v2927 = vunpack.c.l.b16 %v2888
        %v2928 = vunpack.c.l.b16 %v2889
        %v2929 = vunpack.c.l.b16 %v2890
        %v2930 = vunpack.c.l.b16 %v2891
        %v2931 = vunpack.c.l.b16 %v2892
        %v2932 = vunpack.c.l.b16 %v2893
        %v2933 = vunpack.c.l.b16 %v2894
        %v2934 = vunpack.c.l.b16 %v2895
        %v2935 = vpack.c.b16 %v2920, %v2919
        %v2936 = vpack.c.b16 %v2922, %v2921
        %v2937 = vpack.c.b16 %v2924, %v2923
        %v2938 = vpack.c.b16 %v2926, %v2925
        %v2939 = vpack.c.b16 %v2928, %v2927
        %v2940 = vpack.c.b16 %v2930, %v2929
        %v2941 = vpack.c.b16 %v2932, %v2931
        %v2942 = vpack.c.b16 %v2934, %v2933
        %2951 = vmatprep.subr.bf16.mxu0 0
        %2952 = vmatpush1.bf16.msra.mxu0 %v2935
        %2953 = vmatprep.subr.bf16.mxu0 0
        %2954 = vmatpush1.bf16.msra.mxu0 %v2936
        %2955 = vmatprep.subr.bf16.mxu0 0
        %2956 = vmatpush1.bf16.msra.mxu0 %v2937
        %2957 = vmatprep.subr.bf16.mxu0 0
        %2958 = vmatpush1.bf16.msra.mxu0 %v2938
        %2959 = vmatprep.subr.bf16.mxu0 0
        %2960 = vmatpush1.bf16.msra.mxu0 %v2939
        %2961 = vmatprep.subr.bf16.mxu0 0
        %2962 = vmatpush1.bf16.msra.mxu0 %v2940
        %2963 = vmatprep.subr.bf16.mxu0 0
        %2964 = vmatpush1.bf16.msra.mxu0 %v2941
        %2965 = vmatprep.subr.bf16.mxu0 0
        %2966 = vmatpush1.bf16.msra.mxu0 %v2942
        %2967 = vmatprep.subr.bf16.mxu0 0
        %2968 = vmatpush1.bf16.msra.mxu0 0
        %2969 = vmatprep.subr.bf16.mxu0 0
        %2970 = vmatpush1.bf16.msra.mxu0 0
        %2971 = vmatprep.subr.bf16.mxu0 0
        %2972 = vmatpush1.bf16.msra.mxu0 0
        %2973 = vmatprep.subr.bf16.mxu0 0
        %2974 = vmatpush1.bf16.msra.mxu0 0
        %2975 = vmatprep.subr.bf16.mxu0 0
        %2976 = vmatpush1.bf16.msra.mxu0 0
        %2977 = vmatprep.subr.bf16.mxu0 0
        %2978 = vmatpush1.bf16.msra.mxu0 0
        %2979 = vmatprep.subr.bf16.mxu0 0
        %2980 = vmatpush1.bf16.msra.mxu0 0
        %2981 = vmatprep.subr.bf16.mxu0 0
        %2982 = vmatpush1.bf16.msra.mxu0 0
        %2983 = vmatprep.mubr.bf16.mxu0 0
        %2984 = vmatmul.mubr.bf16.gmra.mrb[0].mxu0 %v2872
        %v2985 = vpop.f32.mrb[0].mxu0
        %v2986 = vadd.f32 %v2901, %v2985
        %v2987 = vpop.f32.mrb[0].mxu0
        %v2988 = vpop.f32.mrb[0].mxu0
        %v2989 = vadd.f32 %v2901, %v2988
        %v2990 = vpop.f32.mrb[0].mxu0
        %2991 = vmatprep.mubr.bf16.mxu0 0
        %2992 = vmatmul.mubr.bf16.gmra.mrb[0].mxu0 %v2873
        %v2993 = vpop.f32.mrb[0].mxu0
        %v2994 = vadd.f32 %v2901, %v2993
        %v2995 = vpop.f32.mrb[0].mxu0
        %v2996 = vpop.f32.mrb[0].mxu0
        %v2997 = vadd.f32 %v2901, %v2996
        %v2998 = vpop.f32.mrb[0].mxu0
        %2999 = vmatprep.mubr.bf16.mxu0 0
        %3000 = vmatmul.mubr.bf16.gmra.mrb[0].mxu0 %v2874
        %v3001 = vpop.f32.mrb[0].mxu0
        %v3002 = vadd.f32 %v2901, %v3001
        %v3003 = vpop.f32.mrb[0].mxu0
        %v3004 = vpop.f32.mrb[0].mxu0
        %v3005 = vadd.f32 %v2901, %v3004
        %v3006 = vpop.f32.mrb[0].mxu0
        %3007 = vmatprep.mubr.bf16.mxu0 0
        %3008 = vmatmul.mubr.bf16.gmra.mrb[0].mxu0 %v2875
        %v3009 = vpop.f32.mrb[0].mxu0
        %v3010 = vadd.f32 %v2901, %v3009
        %v3011 = vpop.f32.mrb[0].mxu0
        %v3012 = vpop.f32.mrb[0].mxu0
        %v3013 = vadd.f32 %v2901, %v3012
        %v3014 = vpop.f32.mrb[0].mxu0
        %3015 = vmatprep.mubr.bf16.mxu0 0
        %3016 = vmatmul.mubr.bf16.gmra.mrb[0].mxu0 %v2876
        %v3017 = vpop.f32.mrb[0].mxu0
        %v3018 = vadd.f32 %v2901, %v3017
        %v3019 = vpop.f32.mrb[0].mxu0
        %v3020 = vpop.f32.mrb[0].mxu0
        %v3021 = vadd.f32 %v2901, %v3020
        %v3022 = vpop.f32.mrb[0].mxu0
        %3023 = vmatprep.mubr.bf16.mxu0 0
        %3024 = vmatmul.mubr.bf16.gmra.mrb[0].mxu0 %v2877
        %v3025 = vpop.f32.mrb[0].mxu0
        %v3026 = vadd.f32 %v2901, %v3025
        %v3027 = vpop.f32.mrb[0].mxu0
        %v3028 = vpop.f32.mrb[0].mxu0
        %v3029 = vadd.f32 %v2901, %v3028
        %v3030 = vpop.f32.mrb[0].mxu0
        %3031 = vmatprep.mubr.bf16.mxu0 0
        %3032 = vmatmul.mubr.bf16.gmra.mrb[0].mxu0 %v2878
        %v3033 = vpop.f32.mrb[0].mxu0
        %v3034 = vadd.f32 %v2901, %v3033
        %v3035 = vpop.f32.mrb[0].mxu0
        %v3036 = vpop.f32.mrb[0].mxu0
        %v3037 = vadd.f32 %v2901, %v3036
        %v3038 = vpop.f32.mrb[0].mxu0
        %3039 = vmatprep.mubr.bf16.mxu0 0
        %3040 = vmatmul.mubr.bf16.gmra.mrb[0].mxu0 %v2879
        %v3041 = vpop.f32.mrb[0].mxu0
        %v3042 = vadd.f32 %v2901, %v3041
        %v3043 = vpop.f32.mrb[0].mxu0
        %v3044 = vpop.f32.mrb[0].mxu0
        %v3045 = vadd.f32 %v2901, %v3044
        %v3046 = vpop.f32.mrb[0].mxu0
        %3047 = vdwg.mxu0
        %v3048 = vld [vmem:[%s17] sm:$0x1]
        %v3050 = vlaneseq
        %v3051 = vshrl.u32 %v3050, 7
        %v3052 = vsub.s32 0, %v3051
        %v3053 = vrot.slane %v3048, %v3052
        %v3055 = vmul.f32 %v3053, %v2986
        %v3056 = vmul.f32 %v3053, %v2989
        %v3057 = vmul.f32 %v3053, %v2994
        %v3058 = vmul.f32 %v3053, %v2997
        %v3059 = vmul.f32 %v3053, %v3002
        %v3060 = vmul.f32 %v3053, %v3005
        %v3061 = vmul.f32 %v3053, %v3010
        %v3062 = vmul.f32 %v3053, %v3013
        %v3063 = vmul.f32 %v3053, %v3018
        %v3064 = vmul.f32 %v3053, %v3021
        %v3065 = vmul.f32 %v3053, %v3026
        %v3066 = vmul.f32 %v3053, %v3029
        %v3067 = vmul.f32 %v3053, %v3034
        %v3068 = vmul.f32 %v3053, %v3037
        %v3069 = vmul.f32 %v3053, %v3042
        %v3070 = vmul.f32 %v3053, %v3045
        %v3071 = vadd.f32 %v1814, %v3055
        %v3072 = vadd.f32 %v1815, %v3056
        %v3073 = vadd.f32 %v1816, %v3057
        %v3074 = vadd.f32 %v1817, %v3058
        %v3075 = vadd.f32 %v1818, %v3059
        %v3076 = vadd.f32 %v1819, %v3060
        %v3077 = vadd.f32 %v1820, %v3061
        %v3078 = vadd.f32 %v1821, %v3062
        %v3079 = vadd.f32 %v1822, %v3063
        %v3080 = vadd.f32 %v1823, %v3064
        %v3081 = vadd.f32 %v1824, %v3065
        %v3082 = vadd.f32 %v1825, %v3066
        %v3083 = vadd.f32 %v1826, %v3067
        %v3084 = vadd.f32 %v1827, %v3068
        %v3085 = vadd.f32 %v1828, %v3069
        %v3086 = vadd.f32 %v1829, %v3070
        %v3087 = vld [vmem:[%s18] sm:$0x1]
        %v3089 = vlaneseq
        %v3090 = vshrl.u32 %v3089, 7
        %v3091 = vsub.s32 0, %v3090
        %v3092 = vrot.slane %v3087, %v3091
        %v3094 = vmul.f32 %v3071, %v3092
        %v3095 = vmul.f32 %v3072, %v3092
        %v3096 = vmul.f32 %v3073, %v3092
        %v3097 = vmul.f32 %v3074, %v3092
        %v3098 = vmul.f32 %v3075, %v3092
        %v3099 = vmul.f32 %v3076, %v3092
        %v3100 = vmul.f32 %v3077, %v3092
        %v3101 = vmul.f32 %v3078, %v3092
        %v3102 = vmul.f32 %v3079, %v3092
        %v3103 = vmul.f32 %v3080, %v3092
        %v3104 = vmul.f32 %v3081, %v3092
        %v3105 = vmul.f32 %v3082, %v3092
        %v3106 = vmul.f32 %v3083, %v3092
        %v3107 = vmul.f32 %v3084, %v3092
        %v3108 = vmul.f32 %v3085, %v3092
        %v3109 = vmul.f32 %v3086, %v3092
        %v3110 = vld [vmem:[%s19] sm:$0x1]
        %v3112 = vlaneseq
        %v3113 = vshrl.u32 %v3112, 7
        %v3114 = vsub.s32 0, %v3113
        %v3115 = vrot.slane %v3110, %v3114
        %v3117 = vadd.f32 %v3094, %v3115
        %v3118 = vadd.f32 %v3095, %v3115
        %v3119 = vadd.f32 %v3096, %v3115
        %v3120 = vadd.f32 %v3097, %v3115
        %v3121 = vadd.f32 %v3098, %v3115
        %v3122 = vadd.f32 %v3099, %v3115
        %v3123 = vadd.f32 %v3100, %v3115
        %v3124 = vadd.f32 %v3101, %v3115
        %v3125 = vadd.f32 %v3102, %v3115
        %v3126 = vadd.f32 %v3103, %v3115
        %v3127 = vadd.f32 %v3104, %v3115
        %v3128 = vadd.f32 %v3105, %v3115
        %v3129 = vadd.f32 %v3106, %v3115
        %v3130 = vadd.f32 %v3107, %v3115
        %v3131 = vadd.f32 %v3108, %v3115
        %v3132 = vadd.f32 %v3109, %v3115
        %v3133 = vpack.c.bf16 %v3118, %v3117
        %v3134 = vpack.c.bf16 %v3120, %v3119
        %v3135 = vpack.c.bf16 %v3122, %v3121
        %v3136 = vpack.c.bf16 %v3124, %v3123
        %v3137 = vpack.c.bf16 %v3126, %v3125
        %v3138 = vpack.c.bf16 %v3128, %v3127
        %v3139 = vpack.c.bf16 %v3130, %v3129
        %v3140 = vpack.c.bf16 %v3132, %v3131
        %v3141 = vld [vmem:[%s20] sm:$0xff]
        %v3142 = vld [vmem:[%s20 + $0x8] sm:$0xff]
        %v3143 = vld [vmem:[%s20 + $0x10] sm:$0xff]
        %v3144 = vld [vmem:[%s20 + $0x18] sm:$0xff]
        %v3145 = vld [vmem:[%s20 + $0x20] sm:$0xff]
        %v3146 = vld [vmem:[%s20 + $0x28] sm:$0xff]
        %v3147 = vld [vmem:[%s20 + $0x30] sm:$0xff]
        %v3148 = vld [vmem:[%s20 + $0x38] sm:$0xff]
        %v3149 = vld [vmem:[%s20 + $0x40] sm:$0xff]
        %v3150 = vld [vmem:[%s20 + $0x48] sm:$0xff]
        %v3151 = vld [vmem:[%s20 + $0x50] sm:$0xff]
        %v3152 = vld [vmem:[%s20 + $0x58] sm:$0xff]
        %v3153 = vld [vmem:[%s20 + $0x60] sm:$0xff]
        %v3154 = vld [vmem:[%s20 + $0x68] sm:$0xff]
        %v3155 = vld [vmem:[%s20 + $0x70] sm:$0xff]
        %v3156 = vld [vmem:[%s20 + $0x78] sm:$0xff]
        %v3157 = vld [vmem:[%s20 + $0x80] sm:$0xff]
        %v3158 = vld [vmem:[%s20 + $0x88] sm:$0xff]
        %v3159 = vld [vmem:[%s20 + $0x90] sm:$0xff]
        %v3160 = vld [vmem:[%s20 + $0x98] sm:$0xff]
        %v3161 = vld [vmem:[%s20 + $0xa0] sm:$0xff]
        %v3162 = vld [vmem:[%s20 + $0xa8] sm:$0xff]
        %v3163 = vld [vmem:[%s20 + $0xb0] sm:$0xff]
        %v3164 = vld [vmem:[%s20 + $0xb8] sm:$0xff]
        %v3165 = vld [vmem:[%s20 + $0xc0] sm:$0xff]
        %v3166 = vld [vmem:[%s20 + $0xc8] sm:$0xff]
        %v3167 = vld [vmem:[%s20 + $0xd0] sm:$0xff]
        %v3168 = vld [vmem:[%s20 + $0xd8] sm:$0xff]
        %v3169 = vld [vmem:[%s20 + $0xe0] sm:$0xff]
        %v3170 = vld [vmem:[%s20 + $0xe8] sm:$0xff]
        %v3171 = vld [vmem:[%s20 + $0xf0] sm:$0xff]
        %v3172 = vld [vmem:[%s20 + $0xf8] sm:$0xff]
        %v3173 = vld [vmem:[%s21] sm:$0xf]
        %v3175 = vlaneseq
        %v3176 = vshrl.u32 %v3175, 7
        %v3177 = vsub.s32 0, %v3176
        %v3178 = vrot.slane %v3173, %v3177
        %v3179 = vlaneseq
        %v3180 = vshrl.u32 %v3179, 7
        %v3181 = vsub.s32 1, %v3180
        %v3182 = vrot.slane %v3173, %v3181
        %v3183 = vlaneseq
        %v3184 = vshrl.u32 %v3183, 7
        %v3185 = vsub.s32 2, %v3184
        %v3186 = vrot.slane %v3173, %v3185
        %v3187 = vlaneseq
        %v3188 = vshrl.u32 %v3187, 7
        %v3189 = vsub.s32 3, %v3188
        %v3190 = vrot.slane %v3173, %v3189
        %v3227 = vunpack.c.l.b16 %v3141
        %v3228 = vunpack.c.h.b16 %v3141
        %v3229 = vunpack.c.l.b16 %v3142
        %v3230 = vunpack.c.h.b16 %v3142
        %v3231 = vunpack.c.l.b16 %v3143
        %v3232 = vunpack.c.h.b16 %v3143
        %v3233 = vunpack.c.l.b16 %v3144
        %v3234 = vunpack.c.h.b16 %v3144
        %v3235 = vunpack.c.l.b16 %v3145
        %v3236 = vunpack.c.h.b16 %v3145
        %v3237 = vunpack.c.l.b16 %v3146
        %v3238 = vunpack.c.h.b16 %v3146
        %v3239 = vunpack.c.l.b16 %v3147
        %v3240 = vunpack.c.h.b16 %v3147
        %v3241 = vunpack.c.l.b16 %v3148
        %v3242 = vunpack.c.h.b16 %v3148
        %v3243 = vunpack.c.l.b16 %v3149
        %v3244 = vunpack.c.h.b16 %v3149
        %v3245 = vunpack.c.l.b16 %v3150
        %v3246 = vunpack.c.h.b16 %v3150
        %v3247 = vunpack.c.l.b16 %v3151
        %v3248 = vunpack.c.h.b16 %v3151
        %v3249 = vunpack.c.l.b16 %v3152
        %v3250 = vunpack.c.h.b16 %v3152
        %v3251 = vunpack.c.l.b16 %v3153
        %v3252 = vunpack.c.h.b16 %v3153
        %v3253 = vunpack.c.l.b16 %v3154
        %v3254 = vunpack.c.h.b16 %v3154
        %v3255 = vunpack.c.l.b16 %v3155
        %v3256 = vunpack.c.h.b16 %v3155
        %v3257 = vunpack.c.l.b16 %v3156
        %v3258 = vunpack.c.h.b16 %v3156
        %v3259 = vunpack.c.l.b16 %v3157
        %v3260 = vunpack.c.h.b16 %v3157
        %v3261 = vunpack.c.l.b16 %v3158
        %v3262 = vunpack.c.h.b16 %v3158
        %v3263 = vunpack.c.l.b16 %v3159
        %v3264 = vunpack.c.h.b16 %v3159
        %v3265 = vunpack.c.l.b16 %v3160
        %v3266 = vunpack.c.h.b16 %v3160
        %v3267 = vunpack.c.l.b16 %v3161
        %v3268 = vunpack.c.h.b16 %v3161
        %v3269 = vunpack.c.l.b16 %v3162
        %v3270 = vunpack.c.h.b16 %v3162
        %v3271 = vunpack.c.l.b16 %v3163
        %v3272 = vunpack.c.h.b16 %v3163
        %v3273 = vunpack.c.l.b16 %v3164
        %v3274 = vunpack.c.h.b16 %v3164
        %v3275 = vunpack.c.l.b16 %v3165
        %v3276 = vunpack.c.h.b16 %v3165
        %v3277 = vunpack.c.l.b16 %v3166
        %v3278 = vunpack.c.h.b16 %v3166
        %v3279 = vunpack.c.l.b16 %v3167
        %v3280 = vunpack.c.h.b16 %v3167
        %v3281 = vunpack.c.l.b16 %v3168
        %v3282 = vunpack.c.h.b16 %v3168
        %v3283 = vunpack.c.l.b16 %v3169
        %v3284 = vunpack.c.h.b16 %v3169
        %v3285 = vunpack.c.l.b16 %v3170
        %v3286 = vunpack.c.h.b16 %v3170
        %v3287 = vunpack.c.l.b16 %v3171
        %v3288 = vunpack.c.h.b16 %v3171
        %v3289 = vunpack.c.l.b16 %v3172
        %v3290 = vunpack.c.h.b16 %v3172
        %v3291 = vpack.c.b16 %v3231, %v3227
        %v3292 = vpack.c.b16 %v3232, %v3228
        %v3293 = vpack.c.b16 %v3233, %v3229
        %v3294 = vpack.c.b16 %v3234, %v3230
        %v3295 = vpack.c.b16 %v3239, %v3235
        %v3296 = vpack.c.b16 %v3240, %v3236
        %v3297 = vpack.c.b16 %v3241, %v3237
        %v3298 = vpack.c.b16 %v3242, %v3238
        %v3299 = vpack.c.b16 %v3247, %v3243
        %v3300 = vpack.c.b16 %v3248, %v3244
        %v3301 = vpack.c.b16 %v3249, %v3245
        %v3302 = vpack.c.b16 %v3250, %v3246
        %v3303 = vpack.c.b16 %v3255, %v3251
        %v3304 = vpack.c.b16 %v3256, %v3252
        %v3305 = vpack.c.b16 %v3257, %v3253
        %v3306 = vpack.c.b16 %v3258, %v3254
        %v3307 = vpack.c.b16 %v3263, %v3259
        %v3308 = vpack.c.b16 %v3264, %v3260
        %v3309 = vpack.c.b16 %v3265, %v3261
        %v3310 = vpack.c.b16 %v3266, %v3262
        %v3311 = vpack.c.b16 %v3271, %v3267
        %v3312 = vpack.c.b16 %v3272, %v3268
        %v3313 = vpack.c.b16 %v3273, %v3269
        %v3314 = vpack.c.b16 %v3274, %v3270
        %v3315 = vpack.c.b16 %v3279, %v3275
        %v3316 = vpack.c.b16 %v3280, %v3276
        %v3317 = vpack.c.b16 %v3281, %v3277
        %v3318 = vpack.c.b16 %v3282, %v3278
        %v3319 = vpack.c.b16 %v3287, %v3283
        %v3320 = vpack.c.b16 %v3288, %v3284
        %v3321 = vpack.c.b16 %v3289, %v3285
        %v3322 = vpack.c.b16 %v3290, %v3286
        %3355 = vmatprep.subr.bf16.mxu0 %v3292
        %3356 = vmatpush1.bf16.msra.mxu0 %v3291
        %3357 = vmatprep.subr.bf16.mxu0 %v3296
        %3358 = vmatpush1.bf16.msra.mxu0 %v3295
        %3359 = vmatprep.subr.bf16.mxu0 %v3300
        %3360 = vmatpush1.bf16.msra.mxu0 %v3299
        %3361 = vmatprep.subr.bf16.mxu0 %v3304
        %3362 = vmatpush1.bf16.msra.mxu0 %v3303
        %3363 = vmatprep.subr.bf16.mxu0 %v3308
        %3364 = vmatpush1.bf16.msra.mxu0 %v3307
        %3365 = vmatprep.subr.bf16.mxu0 %v3312
        %3366 = vmatpush1.bf16.msra.mxu0 %v3311
        %3367 = vmatprep.subr.bf16.mxu0 %v3316
        %3368 = vmatpush1.bf16.msra.mxu0 %v3315
        %3369 = vmatprep.subr.bf16.mxu0 %v3320
        %3370 = vmatpush1.bf16.msra.mxu0 %v3319
        %3371 = vmatprep.subr.bf16.mxu0 0
        %3372 = vmatpush1.bf16.msra.mxu0 0
        %3373 = vmatprep.subr.bf16.mxu0 0
        %3374 = vmatpush1.bf16.msra.mxu0 0
        %3375 = vmatprep.subr.bf16.mxu0 0
        %3376 = vmatpush1.bf16.msra.mxu0 0
        %3377 = vmatprep.subr.bf16.mxu0 0
        %3378 = vmatpush1.bf16.msra.mxu0 0
        %3379 = vmatprep.subr.bf16.mxu0 0
        %3380 = vmatpush1.bf16.msra.mxu0 0
        %3381 = vmatprep.subr.bf16.mxu0 0
        %3382 = vmatpush1.bf16.msra.mxu0 0
        %3383 = vmatprep.subr.bf16.mxu0 0
        %3384 = vmatpush1.bf16.msra.mxu0 0
        %3385 = vmatprep.subr.bf16.mxu0 0
        %3386 = vmatpush1.bf16.msra.mxu0 0
        %3387 = vmatprep.mubr.bf16.mxu0 0
        %3388 = vmatmul.mubr.bf16.gmra.mrb[0].mxu0 %v3133
        %v3389 = vpop.f32.mrb[0].mxu0
        %v3390 = vadd.f32 %v3178, %v3389
        %v3391 = vpop.f32.mrb[0].mxu0
        %v3392 = vadd.f32 %v3182, %v3391
        %v3393 = vpop.f32.mrb[0].mxu0
        %v3394 = vadd.f32 %v3178, %v3393
        %v3395 = vpop.f32.mrb[0].mxu0
        %v3396 = vadd.f32 %v3182, %v3395
        %3397 = vmatprep.mubr.bf16.mxu0 0
        %3398 = vmatmul.mubr.bf16.gmra.mrb[0].mxu0 %v3134
        %v3399 = vpop.f32.mrb[0].mxu0
        %v3400 = vadd.f32 %v3178, %v3399
        %v3401 = vpop.f32.mrb[0].mxu0
        %v3402 = vadd.f32 %v3182, %v3401
        %v3403 = vpop.f32.mrb[0].mxu0
        %v3404 = vadd.f32 %v3178, %v3403
        %v3405 = vpop.f32.mrb[0].mxu0
        %v3406 = vadd.f32 %v3182, %v3405
        %3407 = vmatprep.mubr.bf16.mxu0 0
        %3408 = vmatmul.mubr.bf16.gmra.mrb[0].mxu0 %v3135
        %v3409 = vpop.f32.mrb[0].mxu0
        %v3410 = vadd.f32 %v3178, %v3409
        %v3411 = vpop.f32.mrb[0].mxu0
        %v3412 = vadd.f32 %v3182, %v3411
        %v3413 = vpop.f32.mrb[0].mxu0
        %v3414 = vadd.f32 %v3178, %v3413
        %v3415 = vpop.f32.mrb[0].mxu0
        %v3416 = vadd.f32 %v3182, %v3415
        %3417 = vmatprep.mubr.bf16.mxu0 0
        %3418 = vmatmul.mubr.bf16.gmra.mrb[0].mxu0 %v3136
        %v3419 = vpop.f32.mrb[0].mxu0
        %v3420 = vadd.f32 %v3178, %v3419
        %v3421 = vpop.f32.mrb[0].mxu0
        %v3422 = vadd.f32 %v3182, %v3421
        %v3423 = vpop.f32.mrb[0].mxu0
        %v3424 = vadd.f32 %v3178, %v3423
        %v3425 = vpop.f32.mrb[0].mxu0
        %v3426 = vadd.f32 %v3182, %v3425
        %3427 = vmatprep.mubr.bf16.mxu0 0
        %3428 = vmatmul.mubr.bf16.gmra.mrb[0].mxu0 %v3137
        %v3429 = vpop.f32.mrb[0].mxu0
        %v3430 = vadd.f32 %v3178, %v3429
        %v3431 = vpop.f32.mrb[0].mxu0
        %v3432 = vadd.f32 %v3182, %v3431
        %v3433 = vpop.f32.mrb[0].mxu0
        %v3434 = vadd.f32 %v3178, %v3433
        %v3435 = vpop.f32.mrb[0].mxu0
        %v3436 = vadd.f32 %v3182, %v3435
        %3437 = vmatprep.mubr.bf16.mxu0 0
        %3438 = vmatmul.mubr.bf16.gmra.mrb[0].mxu0 %v3138
        %v3439 = vpop.f32.mrb[0].mxu0
        %v3440 = vadd.f32 %v3178, %v3439
        %v3441 = vpop.f32.mrb[0].mxu0
        %v3442 = vadd.f32 %v3182, %v3441
        %v3443 = vpop.f32.mrb[0].mxu0
        %v3444 = vadd.f32 %v3178, %v3443
        %v3445 = vpop.f32.mrb[0].mxu0
        %v3446 = vadd.f32 %v3182, %v3445
        %3447 = vmatprep.mubr.bf16.mxu0 0
        %3448 = vmatmul.mubr.bf16.gmra.mrb[0].mxu0 %v3139
        %v3449 = vpop.f32.mrb[0].mxu0
        %v3450 = vadd.f32 %v3178, %v3449
        %v3451 = vpop.f32.mrb[0].mxu0
        %v3452 = vadd.f32 %v3182, %v3451
        %v3453 = vpop.f32.mrb[0].mxu0
        %v3454 = vadd.f32 %v3178, %v3453
        %v3455 = vpop.f32.mrb[0].mxu0
        %v3456 = vadd.f32 %v3182, %v3455
        %3457 = vmatprep.mubr.bf16.mxu0 0
        %3458 = vmatmul.mubr.bf16.gmra.mrb[0].mxu0 %v3140
        %v3459 = vpop.f32.mrb[0].mxu0
        %v3460 = vadd.f32 %v3178, %v3459
        %v3461 = vpop.f32.mrb[0].mxu0
        %v3462 = vadd.f32 %v3182, %v3461
        %v3463 = vpop.f32.mrb[0].mxu0
        %v3464 = vadd.f32 %v3178, %v3463
        %v3465 = vpop.f32.mrb[0].mxu0
        %v3466 = vadd.f32 %v3182, %v3465
        %3467 = vdwg.mxu0
        %3468 = vmatprep.subr.bf16.mxu0 %v3294
        %3469 = vmatpush1.bf16.msra.mxu0 %v3293
        %3470 = vmatprep.subr.bf16.mxu0 %v3298
        %3471 = vmatpush1.bf16.msra.mxu0 %v3297
        %3472 = vmatprep.subr.bf16.mxu0 %v3302
        %3473 = vmatpush1.bf16.msra.mxu0 %v3301
        %3474 = vmatprep.subr.bf16.mxu0 %v3306
        %3475 = vmatpush1.bf16.msra.mxu0 %v3305
        %3476 = vmatprep.subr.bf16.mxu0 %v3310
        %3477 = vmatpush1.bf16.msra.mxu0 %v3309
        %3478 = vmatprep.subr.bf16.mxu0 %v3314
        %3479 = vmatpush1.bf16.msra.mxu0 %v3313
        %3480 = vmatprep.subr.bf16.mxu0 %v3318
        %3481 = vmatpush1.bf16.msra.mxu0 %v3317
        %3482 = vmatprep.subr.bf16.mxu0 %v3322
        %3483 = vmatpush1.bf16.msra.mxu0 %v3321
        %3484 = vmatprep.subr.bf16.mxu0 0
        %3485 = vmatpush1.bf16.msra.mxu0 0
        %3486 = vmatprep.subr.bf16.mxu0 0
        %3487 = vmatpush1.bf16.msra.mxu0 0
        %3488 = vmatprep.subr.bf16.mxu0 0
        %3489 = vmatpush1.bf16.msra.mxu0 0
        %3490 = vmatprep.subr.bf16.mxu0 0
        %3491 = vmatpush1.bf16.msra.mxu0 0
        %3492 = vmatprep.subr.bf16.mxu0 0
        %3493 = vmatpush1.bf16.msra.mxu0 0
        %3494 = vmatprep.subr.bf16.mxu0 0
        %3495 = vmatpush1.bf16.msra.mxu0 0
        %3496 = vmatprep.subr.bf16.mxu0 0
        %3497 = vmatpush1.bf16.msra.mxu0 0
        %3498 = vmatprep.subr.bf16.mxu0 0
        %3499 = vmatpush1.bf16.msra.mxu0 0
        %3500 = vmatprep.mubr.bf16.mxu0 0
        %3501 = vmatmul.mubr.bf16.gmra.mrb[0].mxu0 %v3133
        %v3502 = vpop.f32.mrb[0].mxu0
        %v3503 = vadd.f32 %v3186, %v3502
        %v3504 = vpop.f32.mrb[0].mxu0
        %v3505 = vadd.f32 %v3190, %v3504
        %v3506 = vpop.f32.mrb[0].mxu0
        %v3507 = vadd.f32 %v3186, %v3506
        %v3508 = vpop.f32.mrb[0].mxu0
        %v3509 = vadd.f32 %v3190, %v3508
        %3510 = vmatprep.mubr.bf16.mxu0 0
        %3511 = vmatmul.mubr.bf16.gmra.mrb[0].mxu0 %v3134
        %v3512 = vpop.f32.mrb[0].mxu0
        %v3513 = vadd.f32 %v3186, %v3512
        %v3514 = vpop.f32.mrb[0].mxu0
        %v3515 = vadd.f32 %v3190, %v3514
        %v3516 = vpop.f32.mrb[0].mxu0
        %v3517 = vadd.f32 %v3186, %v3516
        %v3518 = vpop.f32.mrb[0].mxu0
        %v3519 = vadd.f32 %v3190, %v3518
        %3520 = vmatprep.mubr.bf16.mxu0 0
        %3521 = vmatmul.mubr.bf16.gmra.mrb[0].mxu0 %v3135
        %v3522 = vpop.f32.mrb[0].mxu0
        %v3523 = vadd.f32 %v3186, %v3522
        %v3524 = vpop.f32.mrb[0].mxu0
        %v3525 = vadd.f32 %v3190, %v3524
        %v3526 = vpop.f32.mrb[0].mxu0
        %v3527 = vadd.f32 %v3186, %v3526
        %v3528 = vpop.f32.mrb[0].mxu0
        %v3529 = vadd.f32 %v3190, %v3528
        %3530 = vmatprep.mubr.bf16.mxu0 0
        %3531 = vmatmul.mubr.bf16.gmra.mrb[0].mxu0 %v3136
        %v3532 = vpop.f32.mrb[0].mxu0
        %v3533 = vadd.f32 %v3186, %v3532
        %v3534 = vpop.f32.mrb[0].mxu0
        %v3535 = vadd.f32 %v3190, %v3534
        %v3536 = vpop.f32.mrb[0].mxu0
        %v3537 = vadd.f32 %v3186, %v3536
        %v3538 = vpop.f32.mrb[0].mxu0
        %v3539 = vadd.f32 %v3190, %v3538
        %3540 = vmatprep.mubr.bf16.mxu0 0
        %3541 = vmatmul.mubr.bf16.gmra.mrb[0].mxu0 %v3137
        %v3542 = vpop.f32.mrb[0].mxu0
        %v3543 = vadd.f32 %v3186, %v3542
        %v3544 = vpop.f32.mrb[0].mxu0
        %v3545 = vadd.f32 %v3190, %v3544
        %v3546 = vpop.f32.mrb[0].mxu0
        %v3547 = vadd.f32 %v3186, %v3546
        %v3548 = vpop.f32.mrb[0].mxu0
        %v3549 = vadd.f32 %v3190, %v3548
        %3550 = vmatprep.mubr.bf16.mxu0 0
        %3551 = vmatmul.mubr.bf16.gmra.mrb[0].mxu0 %v3138
        %v3552 = vpop.f32.mrb[0].mxu0
        %v3553 = vadd.f32 %v3186, %v3552
        %v3554 = vpop.f32.mrb[0].mxu0
        %v3555 = vadd.f32 %v3190, %v3554
        %v3556 = vpop.f32.mrb[0].mxu0
        %v3557 = vadd.f32 %v3186, %v3556
        %v3558 = vpop.f32.mrb[0].mxu0
        %v3559 = vadd.f32 %v3190, %v3558
        %3560 = vmatprep.mubr.bf16.mxu0 0
        %3561 = vmatmul.mubr.bf16.gmra.mrb[0].mxu0 %v3139
        %v3562 = vpop.f32.mrb[0].mxu0
        %v3563 = vadd.f32 %v3186, %v3562
        %v3564 = vpop.f32.mrb[0].mxu0
        %v3565 = vadd.f32 %v3190, %v3564
        %v3566 = vpop.f32.mrb[0].mxu0
        %v3567 = vadd.f32 %v3186, %v3566
        %v3568 = vpop.f32.mrb[0].mxu0
        %v3569 = vadd.f32 %v3190, %v3568
        %3570 = vmatprep.mubr.bf16.mxu0 0
        %3571 = vmatmul.mubr.bf16.gmra.mrb[0].mxu0 %v3140
        %v3572 = vpop.f32.mrb[0].mxu0
        %v3573 = vadd.f32 %v3186, %v3572
        %v3574 = vpop.f32.mrb[0].mxu0
        %v3575 = vadd.f32 %v3190, %v3574
        %v3576 = vpop.f32.mrb[0].mxu0
        %v3577 = vadd.f32 %v3186, %v3576
        %v3578 = vpop.f32.mrb[0].mxu0
        %v3579 = vadd.f32 %v3190, %v3578
        %3580 = vdwg.mxu0
        %v3581 = vmul.f32 %v3390, 0.5
        %v3582 = vmul.f32 %v3392, 0.5
        %v3583 = vmul.f32 %v3503, 0.5
        %v3584 = vmul.f32 %v3505, 0.5
        %v3585 = vmul.f32 %v3394, 0.5
        %v3586 = vmul.f32 %v3396, 0.5
        %v3587 = vmul.f32 %v3507, 0.5
        %v3588 = vmul.f32 %v3509, 0.5
        %v3589 = vmul.f32 %v3400, 0.5
        %v3590 = vmul.f32 %v3402, 0.5
        %v3591 = vmul.f32 %v3513, 0.5
        %v3592 = vmul.f32 %v3515, 0.5
        %v3593 = vmul.f32 %v3404, 0.5
        %v3594 = vmul.f32 %v3406, 0.5
        %v3595 = vmul.f32 %v3517, 0.5
        %v3596 = vmul.f32 %v3519, 0.5
        %v3597 = vmul.f32 %v3410, 0.5
        %v3598 = vmul.f32 %v3412, 0.5
        %v3599 = vmul.f32 %v3523, 0.5
        %v3600 = vmul.f32 %v3525, 0.5
        %v3601 = vmul.f32 %v3414, 0.5
        %v3602 = vmul.f32 %v3416, 0.5
        %v3603 = vmul.f32 %v3527, 0.5
        %v3604 = vmul.f32 %v3529, 0.5
        %v3605 = vmul.f32 %v3420, 0.5
        %v3606 = vmul.f32 %v3422, 0.5
        %v3607 = vmul.f32 %v3533, 0.5
        %v3608 = vmul.f32 %v3535, 0.5
        %v3609 = vmul.f32 %v3424, 0.5
        %v3610 = vmul.f32 %v3426, 0.5
        %v3611 = vmul.f32 %v3537, 0.5
        %v3612 = vmul.f32 %v3539, 0.5
        %v3613 = vmul.f32 %v3430, 0.5
        %v3614 = vmul.f32 %v3432, 0.5
        %v3615 = vmul.f32 %v3543, 0.5
        %v3616 = vmul.f32 %v3545, 0.5
        %v3617 = vmul.f32 %v3434, 0.5
        %v3618 = vmul.f32 %v3436, 0.5
        %v3619 = vmul.f32 %v3547, 0.5
        %v3620 = vmul.f32 %v3549, 0.5
        %v3621 = vmul.f32 %v3440, 0.5
        %v3622 = vmul.f32 %v3442, 0.5
        %v3623 = vmul.f32 %v3553, 0.5
        %v3624 = vmul.f32 %v3555, 0.5
        %v3625 = vmul.f32 %v3444, 0.5
        %v3626 = vmul.f32 %v3446, 0.5
        %v3627 = vmul.f32 %v3557, 0.5
        %v3628 = vmul.f32 %v3559, 0.5
        %v3629 = vmul.f32 %v3450, 0.5
        %v3630 = vmul.f32 %v3452, 0.5
        %v3631 = vmul.f32 %v3563, 0.5
        %v3632 = vmul.f32 %v3565, 0.5
        %v3633 = vmul.f32 %v3454, 0.5
        %v3634 = vmul.f32 %v3456, 0.5
        %v3635 = vmul.f32 %v3567, 0.5
        %v3636 = vmul.f32 %v3569, 0.5
        %v3637 = vmul.f32 %v3460, 0.5
        %v3638 = vmul.f32 %v3462, 0.5
        %v3639 = vmul.f32 %v3573, 0.5
        %v3640 = vmul.f32 %v3575, 0.5
        %v3641 = vmul.f32 %v3464, 0.5
        %v3642 = vmul.f32 %v3466, 0.5
        %v3643 = vmul.f32 %v3577, 0.5
        %v3644 = vmul.f32 %v3579, 0.5
        %v3645 = vmul.f32 %v3390, 0.044715
        %v3646 = vmul.f32 %v3392, 0.044715
        %v3647 = vmul.f32 %v3503, 0.044715
        %v3648 = vmul.f32 %v3505, 0.044715
        %v3649 = vmul.f32 %v3394, 0.044715
        %v3650 = vmul.f32 %v3396, 0.044715
        %v3651 = vmul.f32 %v3507, 0.044715
        %v3652 = vmul.f32 %v3509, 0.044715
        %v3653 = vmul.f32 %v3400, 0.044715
        %v3654 = vmul.f32 %v3402, 0.044715
        %v3655 = vmul.f32 %v3513, 0.044715
        %v3656 = vmul.f32 %v3515, 0.044715
        %v3657 = vmul.f32 %v3404, 0.044715
        %v3658 = vmul.f32 %v3406, 0.044715
        %v3659 = vmul.f32 %v3517, 0.044715
        %v3660 = vmul.f32 %v3519, 0.044715
        %v3661 = vmul.f32 %v3410, 0.044715
        %v3662 = vmul.f32 %v3412, 0.044715
        %v3663 = vmul.f32 %v3523, 0.044715
        %v3664 = vmul.f32 %v3525, 0.044715
        %v3665 = vmul.f32 %v3414, 0.044715
        %v3666 = vmul.f32 %v3416, 0.044715
        %v3667 = vmul.f32 %v3527, 0.044715
        %v3668 = vmul.f32 %v3529, 0.044715
        %v3669 = vmul.f32 %v3420, 0.044715
        %v3670 = vmul.f32 %v3422, 0.044715
        %v3671 = vmul.f32 %v3533, 0.044715
        %v3672 = vmul.f32 %v3535, 0.044715
        %v3673 = vmul.f32 %v3424, 0.044715
        %v3674 = vmul.f32 %v3426, 0.044715
        %v3675 = vmul.f32 %v3537, 0.044715
        %v3676 = vmul.f32 %v3539, 0.044715
        %v3677 = vmul.f32 %v3430, 0.044715
        %v3678 = vmul.f32 %v3432, 0.044715
        %v3679 = vmul.f32 %v3543, 0.044715
        %v3680 = vmul.f32 %v3545, 0.044715
        %v3681 = vmul.f32 %v3434, 0.044715
        %v3682 = vmul.f32 %v3436, 0.044715
        %v3683 = vmul.f32 %v3547, 0.044715
        %v3684 = vmul.f32 %v3549, 0.044715
        %v3685 = vmul.f32 %v3440, 0.044715
        %v3686 = vmul.f32 %v3442, 0.044715
        %v3687 = vmul.f32 %v3553, 0.044715
        %v3688 = vmul.f32 %v3555, 0.044715
        %v3689 = vmul.f32 %v3444, 0.044715
        %v3690 = vmul.f32 %v3446, 0.044715
        %v3691 = vmul.f32 %v3557, 0.044715
        %v3692 = vmul.f32 %v3559, 0.044715
        %v3693 = vmul.f32 %v3450, 0.044715
        %v3694 = vmul.f32 %v3452, 0.044715
        %v3695 = vmul.f32 %v3563, 0.044715
        %v3696 = vmul.f32 %v3565, 0.044715
        %v3697 = vmul.f32 %v3454, 0.044715
        %v3698 = vmul.f32 %v3456, 0.044715
        %v3699 = vmul.f32 %v3567, 0.044715
        %v3700 = vmul.f32 %v3569, 0.044715
        %v3701 = vmul.f32 %v3460, 0.044715
        %v3702 = vmul.f32 %v3462, 0.044715
        %v3703 = vmul.f32 %v3573, 0.044715
        %v3704 = vmul.f32 %v3575, 0.044715
        %v3705 = vmul.f32 %v3464, 0.044715
        %v3706 = vmul.f32 %v3466, 0.044715
        %v3707 = vmul.f32 %v3577, 0.044715
        %v3708 = vmul.f32 %v3579, 0.044715
        %v3709 = vmul.f32 %v3645, %v3390
        %v3710 = vmul.f32 %v3646, %v3392
        %v3711 = vmul.f32 %v3647, %v3503
        %v3712 = vmul.f32 %v3648, %v3505
        %v3713 = vmul.f32 %v3649, %v3394
        %v3714 = vmul.f32 %v3650, %v3396
        %v3715 = vmul.f32 %v3651, %v3507
        %v3716 = vmul.f32 %v3652, %v3509
        %v3717 = vmul.f32 %v3653, %v3400
        %v3718 = vmul.f32 %v3654, %v3402
        %v3719 = vmul.f32 %v3655, %v3513
        %v3720 = vmul.f32 %v3656, %v3515
        %v3721 = vmul.f32 %v3657, %v3404
        %v3722 = vmul.f32 %v3658, %v3406
        %v3723 = vmul.f32 %v3659, %v3517
        %v3724 = vmul.f32 %v3660, %v3519
        %v3725 = vmul.f32 %v3661, %v3410
        %v3726 = vmul.f32 %v3662, %v3412
        %v3727 = vmul.f32 %v3663, %v3523
        %v3728 = vmul.f32 %v3664, %v3525
        %v3729 = vmul.f32 %v3665, %v3414
        %v3730 = vmul.f32 %v3666, %v3416
        %v3731 = vmul.f32 %v3667, %v3527
        %v3732 = vmul.f32 %v3668, %v3529
        %v3733 = vmul.f32 %v3669, %v3420
        %v3734 = vmul.f32 %v3670, %v3422
        %v3735 = vmul.f32 %v3671, %v3533
        %v3736 = vmul.f32 %v3672, %v3535
        %v3737 = vmul.f32 %v3673, %v3424
        %v3738 = vmul.f32 %v3674, %v3426
        %v3739 = vmul.f32 %v3675, %v3537
        %v3740 = vmul.f32 %v3676, %v3539
        %v3741 = vmul.f32 %v3677, %v3430
        %v3742 = vmul.f32 %v3678, %v3432
        %v3743 = vmul.f32 %v3679, %v3543
        %v3744 = vmul.f32 %v3680, %v3545
        %v3745 = vmul.f32 %v3681, %v3434
        %v3746 = vmul.f32 %v3682, %v3436
        %v3747 = vmul.f32 %v3683, %v3547
        %v3748 = vmul.f32 %v3684, %v3549
        %v3749 = vmul.f32 %v3685, %v3440
        %v3750 = vmul.f32 %v3686, %v3442
        %v3751 = vmul.f32 %v3687, %v3553
        %v3752 = vmul.f32 %v3688, %v3555
        %v3753 = vmul.f32 %v3689, %v3444
        %v3754 = vmul.f32 %v3690, %v3446
        %v3755 = vmul.f32 %v3691, %v3557
        %v3756 = vmul.f32 %v3692, %v3559
        %v3757 = vmul.f32 %v3693, %v3450
        %v3758 = vmul.f32 %v3694, %v3452
        %v3759 = vmul.f32 %v3695, %v3563
        %v3760 = vmul.f32 %v3696, %v3565
        %v3761 = vmul.f32 %v3697, %v3454
        %v3762 = vmul.f32 %v3698, %v3456
        %v3763 = vmul.f32 %v3699, %v3567
        %v3764 = vmul.f32 %v3700, %v3569
        %v3765 = vmul.f32 %v3701, %v3460
        %v3766 = vmul.f32 %v3702, %v3462
        %v3767 = vmul.f32 %v3703, %v3573
        %v3768 = vmul.f32 %v3704, %v3575
        %v3769 = vmul.f32 %v3705, %v3464
        %v3770 = vmul.f32 %v3706, %v3466
        %v3771 = vmul.f32 %v3707, %v3577
        %v3772 = vmul.f32 %v3708, %v3579
        %v3773 = vmul.f32 %v3709, %v3390
        %v3774 = vmul.f32 %v3710, %v3392
        %v3775 = vmul.f32 %v3711, %v3503
        %v3776 = vmul.f32 %v3712, %v3505
        %v3777 = vmul.f32 %v3713, %v3394
        %v3778 = vmul.f32 %v3714, %v3396
        %v3779 = vmul.f32 %v3715, %v3507
        %v3780 = vmul.f32 %v3716, %v3509
        %v3781 = vmul.f32 %v3717, %v3400
        %v3782 = vmul.f32 %v3718, %v3402
        %v3783 = vmul.f32 %v3719, %v3513
        %v3784 = vmul.f32 %v3720, %v3515
        %v3785 = vmul.f32 %v3721, %v3404
        %v3786 = vmul.f32 %v3722, %v3406
        %v3787 = vmul.f32 %v3723, %v3517
        %v3788 = vmul.f32 %v3724, %v3519
        %v3789 = vmul.f32 %v3725, %v3410
        %v3790 = vmul.f32 %v3726, %v3412
        %v3791 = vmul.f32 %v3727, %v3523
        %v3792 = vmul.f32 %v3728, %v3525
        %v3793 = vmul.f32 %v3729, %v3414
        %v3794 = vmul.f32 %v3730, %v3416
        %v3795 = vmul.f32 %v3731, %v3527
        %v3796 = vmul.f32 %v3732, %v3529
        %v3797 = vmul.f32 %v3733, %v3420
        %v3798 = vmul.f32 %v3734, %v3422
        %v3799 = vmul.f32 %v3735, %v3533
        %v3800 = vmul.f32 %v3736, %v3535
        %v3801 = vmul.f32 %v3737, %v3424
        %v3802 = vmul.f32 %v3738, %v3426
        %v3803 = vmul.f32 %v3739, %v3537
        %v3804 = vmul.f32 %v3740, %v3539
        %v3805 = vmul.f32 %v3741, %v3430
        %v3806 = vmul.f32 %v3742, %v3432
        %v3807 = vmul.f32 %v3743, %v3543
        %v3808 = vmul.f32 %v3744, %v3545
        %v3809 = vmul.f32 %v3745, %v3434
        %v3810 = vmul.f32 %v3746, %v3436
        %v3811 = vmul.f32 %v3747, %v3547
        %v3812 = vmul.f32 %v3748, %v3549
        %v3813 = vmul.f32 %v3749, %v3440
        %v3814 = vmul.f32 %v3750, %v3442
        %v3815 = vmul.f32 %v3751, %v3553
        %v3816 = vmul.f32 %v3752, %v3555
        %v3817 = vmul.f32 %v3753, %v3444
        %v3818 = vmul.f32 %v3754, %v3446
        %v3819 = vmul.f32 %v3755, %v3557
        %v3820 = vmul.f32 %v3756, %v3559
        %v3821 = vmul.f32 %v3757, %v3450
        %v3822 = vmul.f32 %v3758, %v3452
        %v3823 = vmul.f32 %v3759, %v3563
        %v3824 = vmul.f32 %v3760, %v3565
        %v3825 = vmul.f32 %v3761, %v3454
        %v3826 = vmul.f32 %v3762, %v3456
        %v3827 = vmul.f32 %v3763, %v3567
        %v3828 = vmul.f32 %v3764, %v3569
        %v3829 = vmul.f32 %v3765, %v3460
        %v3830 = vmul.f32 %v3766, %v3462
        %v3831 = vmul.f32 %v3767, %v3573
        %v3832 = vmul.f32 %v3768, %v3575
        %v3833 = vmul.f32 %v3769, %v3464
        %v3834 = vmul.f32 %v3770, %v3466
        %v3835 = vmul.f32 %v3771, %v3577
        %v3836 = vmul.f32 %v3772, %v3579
        %v3837 = vadd.f32 %v3390, %v3773
        %v3838 = vadd.f32 %v3392, %v3774
        %v3839 = vadd.f32 %v3503, %v3775
        %v3840 = vadd.f32 %v3505, %v3776
        %v3841 = vadd.f32 %v3394, %v3777
        %v3842 = vadd.f32 %v3396, %v3778
        %v3843 = vadd.f32 %v3507, %v3779
        %v3844 = vadd.f32 %v3509, %v3780
        %v3845 = vadd.f32 %v3400, %v3781
        %v3846 = vadd.f32 %v3402, %v3782
        %v3847 = vadd.f32 %v3513, %v3783
        %v3848 = vadd.f32 %v3515, %v3784
        %v3849 = vadd.f32 %v3404, %v3785
        %v3850 = vadd.f32 %v3406, %v3786
        %v3851 = vadd.f32 %v3517, %v3787
        %v3852 = vadd.f32 %v3519, %v3788
        %v3853 = vadd.f32 %v3410, %v3789
        %v3854 = vadd.f32 %v3412, %v3790
        %v3855 = vadd.f32 %v3523, %v3791
        %v3856 = vadd.f32 %v3525, %v3792
        %v3857 = vadd.f32 %v3414, %v3793
        %v3858 = vadd.f32 %v3416, %v3794
        %v3859 = vadd.f32 %v3527, %v3795
        %v3860 = vadd.f32 %v3529, %v3796
        %v3861 = vadd.f32 %v3420, %v3797
        %v3862 = vadd.f32 %v3422, %v3798
        %v3863 = vadd.f32 %v3533, %v3799
        %v3864 = vadd.f32 %v3535, %v3800
        %v3865 = vadd.f32 %v3424, %v3801
        %v3866 = vadd.f32 %v3426, %v3802
        %v3867 = vadd.f32 %v3537, %v3803
        %v3868 = vadd.f32 %v3539, %v3804
        %v3869 = vadd.f32 %v3430, %v3805
        %v3870 = vadd.f32 %v3432, %v3806
        %v3871 = vadd.f32 %v3543, %v3807
        %v3872 = vadd.f32 %v3545, %v3808
        %v3873 = vadd.f32 %v3434, %v3809
        %v3874 = vadd.f32 %v3436, %v3810
        %v3875 = vadd.f32 %v3547, %v3811
        %v3876 = vadd.f32 %v3549, %v3812
        %v3877 = vadd.f32 %v3440, %v3813
        %v3878 = vadd.f32 %v3442, %v3814
        %v3879 = vadd.f32 %v3553, %v3815
        %v3880 = vadd.f32 %v3555, %v3816
        %v3881 = vadd.f32 %v3444, %v3817
        %v3882 = vadd.f32 %v3446, %v3818
        %v3883 = vadd.f32 %v3557, %v3819
        %v3884 = vadd.f32 %v3559, %v3820
        %v3885 = vadd.f32 %v3450, %v3821
        %v3886 = vadd.f32 %v3452, %v3822
        %v3887 = vadd.f32 %v3563, %v3823
        %v3888 = vadd.f32 %v3565, %v3824
        %v3889 = vadd.f32 %v3454, %v3825
        %v3890 = vadd.f32 %v3456, %v3826
        %v3891 = vadd.f32 %v3567, %v3827
        %v3892 = vadd.f32 %v3569, %v3828
        %v3893 = vadd.f32 %v3460, %v3829
        %v3894 = vadd.f32 %v3462, %v3830
        %v3895 = vadd.f32 %v3573, %v3831
        %v3896 = vadd.f32 %v3575, %v3832
        %v3897 = vadd.f32 %v3464, %v3833
        %v3898 = vadd.f32 %v3466, %v3834
        %v3899 = vadd.f32 %v3577, %v3835
        %v3900 = vadd.f32 %v3579, %v3836
        %v3901 = vmul.f32 %v3837, 0.7978846
        %v3902 = vmul.f32 %v3838, 0.7978846
        %v3903 = vmul.f32 %v3839, 0.7978846
        %v3904 = vmul.f32 %v3840, 0.7978846
        %v3905 = vmul.f32 %v3841, 0.7978846
        %v3906 = vmul.f32 %v3842, 0.7978846
        %v3907 = vmul.f32 %v3843, 0.7978846
        %v3908 = vmul.f32 %v3844, 0.7978846
        %v3909 = vmul.f32 %v3845, 0.7978846
        %v3910 = vmul.f32 %v3846, 0.7978846
        %v3911 = vmul.f32 %v3847, 0.7978846
        %v3912 = vmul.f32 %v3848, 0.7978846
        %v3913 = vmul.f32 %v3849, 0.7978846
        %v3914 = vmul.f32 %v3850, 0.7978846
        %v3915 = vmul.f32 %v3851, 0.7978846
        %v3916 = vmul.f32 %v3852, 0.7978846
        %v3917 = vmul.f32 %v3853, 0.7978846
        %v3918 = vmul.f32 %v3854, 0.7978846
        %v3919 = vmul.f32 %v3855, 0.7978846
        %v3920 = vmul.f32 %v3856, 0.7978846
        %v3921 = vmul.f32 %v3857, 0.7978846
        %v3922 = vmul.f32 %v3858, 0.7978846
        %v3923 = vmul.f32 %v3859, 0.7978846
        %v3924 = vmul.f32 %v3860, 0.7978846
        %v3925 = vmul.f32 %v3861, 0.7978846
        %v3926 = vmul.f32 %v3862, 0.7978846
        %v3927 = vmul.f32 %v3863, 0.7978846
        %v3928 = vmul.f32 %v3864, 0.7978846
        %v3929 = vmul.f32 %v3865, 0.7978846
        %v3930 = vmul.f32 %v3866, 0.7978846
        %v3931 = vmul.f32 %v3867, 0.7978846
        %v3932 = vmul.f32 %v3868, 0.7978846
        %v3933 = vmul.f32 %v3869, 0.7978846
        %v3934 = vmul.f32 %v3870, 0.7978846
        %v3935 = vmul.f32 %v3871, 0.7978846
        %v3936 = vmul.f32 %v3872, 0.7978846
        %v3937 = vmul.f32 %v3873, 0.7978846
        %v3938 = vmul.f32 %v3874, 0.7978846
        %v3939 = vmul.f32 %v3875, 0.7978846
        %v3940 = vmul.f32 %v3876, 0.7978846
        %v3941 = vmul.f32 %v3877, 0.7978846
        %v3942 = vmul.f32 %v3878, 0.7978846
        %v3943 = vmul.f32 %v3879, 0.7978846
        %v3944 = vmul.f32 %v3880, 0.7978846
        %v3945 = vmul.f32 %v3881, 0.7978846
        %v3946 = vmul.f32 %v3882, 0.7978846
        %v3947 = vmul.f32 %v3883, 0.7978846
        %v3948 = vmul.f32 %v3884, 0.7978846
        %v3949 = vmul.f32 %v3885, 0.7978846
        %v3950 = vmul.f32 %v3886, 0.7978846
        %v3951 = vmul.f32 %v3887, 0.7978846
        %v3952 = vmul.f32 %v3888, 0.7978846
        %v3953 = vmul.f32 %v3889, 0.7978846
        %v3954 = vmul.f32 %v3890, 0.7978846
        %v3955 = vmul.f32 %v3891, 0.7978846
        %v3956 = vmul.f32 %v3892, 0.7978846
        %v3957 = vmul.f32 %v3893, 0.7978846
        %v3958 = vmul.f32 %v3894, 0.7978846
        %v3959 = vmul.f32 %v3895, 0.7978846
        %v3960 = vmul.f32 %v3896, 0.7978846
        %v3961 = vmul.f32 %v3897, 0.7978846
        %v3962 = vmul.f32 %v3898, 0.7978846
        %v3963 = vmul.f32 %v3899, 0.7978846
        %v3964 = vmul.f32 %v3900, 0.7978846
        %v3965 = vtanh.pop %v3901
        %v3966 = vtanh.pop %v3902
        %v3967 = vtanh.pop %v3903
        %v3968 = vtanh.pop %v3904
        %v3969 = vtanh.pop %v3905
        %v3970 = vtanh.pop %v3906
        %v3971 = vtanh.pop %v3907
        %v3972 = vtanh.pop %v3908
        %v3973 = vtanh.pop %v3909
        %v3974 = vtanh.pop %v3910
        %v3975 = vtanh.pop %v3911
        %v3976 = vtanh.pop %v3912
        %v3977 = vtanh.pop %v3913
        %v3978 = vtanh.pop %v3914
        %v3979 = vtanh.pop %v3915
        %v3980 = vtanh.pop %v3916
        %v3981 = vtanh.pop %v3917
        %v3982 = vtanh.pop %v3918
        %v3983 = vtanh.pop %v3919
        %v3984 = vtanh.pop %v3920
        %v3985 = vtanh.pop %v3921
        %v3986 = vtanh.pop %v3922
        %v3987 = vtanh.pop %v3923
        %v3988 = vtanh.pop %v3924
        %v3989 = vtanh.pop %v3925
        %v3990 = vtanh.pop %v3926
        %v3991 = vtanh.pop %v3927
        %v3992 = vtanh.pop %v3928
        %v3993 = vtanh.pop %v3929
        %v3994 = vtanh.pop %v3930
        %v3995 = vtanh.pop %v3931
        %v3996 = vtanh.pop %v3932
        %v3997 = vtanh.pop %v3933
        %v3998 = vtanh.pop %v3934
        %v3999 = vtanh.pop %v3935
        %v4000 = vtanh.pop %v3936
        %v4001 = vtanh.pop %v3937
        %v4002 = vtanh.pop %v3938
        %v4003 = vtanh.pop %v3939
        %v4004 = vtanh.pop %v3940
        %v4005 = vtanh.pop %v3941
        %v4006 = vtanh.pop %v3942
        %v4007 = vtanh.pop %v3943
        %v4008 = vtanh.pop %v3944
        %v4009 = vtanh.pop %v3945
        %v4010 = vtanh.pop %v3946
        %v4011 = vtanh.pop %v3947
        %v4012 = vtanh.pop %v3948
        %v4013 = vtanh.pop %v3949
        %v4014 = vtanh.pop %v3950
        %v4015 = vtanh.pop %v3951
        %v4016 = vtanh.pop %v3952
        %v4017 = vtanh.pop %v3953
        %v4018 = vtanh.pop %v3954
        %v4019 = vtanh.pop %v3955
        %v4020 = vtanh.pop %v3956
        %v4021 = vtanh.pop %v3957
        %v4022 = vtanh.pop %v3958
        %v4023 = vtanh.pop %v3959
        %v4024 = vtanh.pop %v3960
        %v4025 = vtanh.pop %v3961
        %v4026 = vtanh.pop %v3962
        %v4027 = vtanh.pop %v3963
        %v4028 = vtanh.pop %v3964
        %v4029 = vadd.f32 %v3965, 1.0
        %v4030 = vadd.f32 %v3966, 1.0
        %v4031 = vadd.f32 %v3967, 1.0
        %v4032 = vadd.f32 %v3968, 1.0
        %v4033 = vadd.f32 %v3969, 1.0
        %v4034 = vadd.f32 %v3970, 1.0
        %v4035 = vadd.f32 %v3971, 1.0
        %v4036 = vadd.f32 %v3972, 1.0
        %v4037 = vadd.f32 %v3973, 1.0
        %v4038 = vadd.f32 %v3974, 1.0
        %v4039 = vadd.f32 %v3975, 1.0
        %v4040 = vadd.f32 %v3976, 1.0
        %v4041 = vadd.f32 %v3977, 1.0
        %v4042 = vadd.f32 %v3978, 1.0
        %v4043 = vadd.f32 %v3979, 1.0
        %v4044 = vadd.f32 %v3980, 1.0
        %v4045 = vadd.f32 %v3981, 1.0
        %v4046 = vadd.f32 %v3982, 1.0
        %v4047 = vadd.f32 %v3983, 1.0
        %v4048 = vadd.f32 %v3984, 1.0
        %v4049 = vadd.f32 %v3985, 1.0
        %v4050 = vadd.f32 %v3986, 1.0
        %v4051 = vadd.f32 %v3987, 1.0
        %v4052 = vadd.f32 %v3988, 1.0
        %v4053 = vadd.f32 %v3989, 1.0
        %v4054 = vadd.f32 %v3990, 1.0
        %v4055 = vadd.f32 %v3991, 1.0
        %v4056 = vadd.f32 %v3992, 1.0
        %v4057 = vadd.f32 %v3993, 1.0
        %v4058 = vadd.f32 %v3994, 1.0
        %v4059 = vadd.f32 %v3995, 1.0
        %v4060 = vadd.f32 %v3996, 1.0
        %v4061 = vadd.f32 %v3997, 1.0
        %v4062 = vadd.f32 %v3998, 1.0
        %v4063 = vadd.f32 %v3999, 1.0
        %v4064 = vadd.f32 %v4000, 1.0
        %v4065 = vadd.f32 %v4001, 1.0
        %v4066 = vadd.f32 %v4002, 1.0
        %v4067 = vadd.f32 %v4003, 1.0
        %v4068 = vadd.f32 %v4004, 1.0
        %v4069 = vadd.f32 %v4005, 1.0
        %v4070 = vadd.f32 %v4006, 1.0
        %v4071 = vadd.f32 %v4007, 1.0
        %v4072 = vadd.f32 %v4008, 1.0
        %v4073 = vadd.f32 %v4009, 1.0
        %v4074 = vadd.f32 %v4010, 1.0
        %v4075 = vadd.f32 %v4011, 1.0
        %v4076 = vadd.f32 %v4012, 1.0
        %v4077 = vadd.f32 %v4013, 1.0
        %v4078 = vadd.f32 %v4014, 1.0
        %v4079 = vadd.f32 %v4015, 1.0
        %v4080 = vadd.f32 %v4016, 1.0
        %v4081 = vadd.f32 %v4017, 1.0
        %v4082 = vadd.f32 %v4018, 1.0
        %v4083 = vadd.f32 %v4019, 1.0
        %v4084 = vadd.f32 %v4020, 1.0
        %v4085 = vadd.f32 %v4021, 1.0
        %v4086 = vadd.f32 %v4022, 1.0
        %v4087 = vadd.f32 %v4023, 1.0
        %v4088 = vadd.f32 %v4024, 1.0
        %v4089 = vadd.f32 %v4025, 1.0
        %v4090 = vadd.f32 %v4026, 1.0
        %v4091 = vadd.f32 %v4027, 1.0
        %v4092 = vadd.f32 %v4028, 1.0
        %v4093 = vmul.f32 %v3581, %v4029
        %v4094 = vmul.f32 %v3582, %v4030
        %v4095 = vmul.f32 %v3583, %v4031
        %v4096 = vmul.f32 %v3584, %v4032
        %v4097 = vmul.f32 %v3585, %v4033
        %v4098 = vmul.f32 %v3586, %v4034
        %v4099 = vmul.f32 %v3587, %v4035
        %v4100 = vmul.f32 %v3588, %v4036
        %v4101 = vmul.f32 %v3589, %v4037
        %v4102 = vmul.f32 %v3590, %v4038
        %v4103 = vmul.f32 %v3591, %v4039
        %v4104 = vmul.f32 %v3592, %v4040
        %v4105 = vmul.f32 %v3593, %v4041
        %v4106 = vmul.f32 %v3594, %v4042
        %v4107 = vmul.f32 %v3595, %v4043
        %v4108 = vmul.f32 %v3596, %v4044
        %v4109 = vmul.f32 %v3597, %v4045
        %v4110 = vmul.f32 %v3598, %v4046
        %v4111 = vmul.f32 %v3599, %v4047
        %v4112 = vmul.f32 %v3600, %v4048
        %v4113 = vmul.f32 %v3601, %v4049
        %v4114 = vmul.f32 %v3602, %v4050
        %v4115 = vmul.f32 %v3603, %v4051
        %v4116 = vmul.f32 %v3604, %v4052
        %v4117 = vmul.f32 %v3605, %v4053
        %v4118 = vmul.f32 %v3606, %v4054
        %v4119 = vmul.f32 %v3607, %v4055
        %v4120 = vmul.f32 %v3608, %v4056
        %v4121 = vmul.f32 %v3609, %v4057
        %v4122 = vmul.f32 %v3610, %v4058
        %v4123 = vmul.f32 %v3611, %v4059
        %v4124 = vmul.f32 %v3612, %v4060
        %v4125 = vmul.f32 %v3613, %v4061
        %v4126 = vmul.f32 %v3614, %v4062
        %v4127 = vmul.f32 %v3615, %v4063
        %v4128 = vmul.f32 %v3616, %v4064
        %v4129 = vmul.f32 %v3617, %v4065
        %v4130 = vmul.f32 %v3618, %v4066
        %v4131 = vmul.f32 %v3619, %v4067
        %v4132 = vmul.f32 %v3620, %v4068
        %v4133 = vmul.f32 %v3621, %v4069
        %v4134 = vmul.f32 %v3622, %v4070
        %v4135 = vmul.f32 %v3623, %v4071
        %v4136 = vmul.f32 %v3624, %v4072
        %v4137 = vmul.f32 %v3625, %v4073
        %v4138 = vmul.f32 %v3626, %v4074
        %v4139 = vmul.f32 %v3627, %v4075
        %v4140 = vmul.f32 %v3628, %v4076
        %v4141 = vmul.f32 %v3629, %v4077
        %v4142 = vmul.f32 %v3630, %v4078
        %v4143 = vmul.f32 %v3631, %v4079
        %v4144 = vmul.f32 %v3632, %v4080
        %v4145 = vmul.f32 %v3633, %v4081
        %v4146 = vmul.f32 %v3634, %v4082
        %v4147 = vmul.f32 %v3635, %v4083
        %v4148 = vmul.f32 %v3636, %v4084
        %v4149 = vmul.f32 %v3637, %v4085
        %v4150 = vmul.f32 %v3638, %v4086
        %v4151 = vmul.f32 %v3639, %v4087
        %v4152 = vmul.f32 %v3640, %v4088
        %v4153 = vmul.f32 %v3641, %v4089
        %v4154 = vmul.f32 %v3642, %v4090
        %v4155 = vmul.f32 %v3643, %v4091
        %v4156 = vmul.f32 %v3644, %v4092
        %v4157 = vpack.c.bf16 %v4097, %v4093
        %v4158 = vpack.c.bf16 %v4098, %v4094
        %v4159 = vpack.c.bf16 %v4099, %v4095
        %v4160 = vpack.c.bf16 %v4100, %v4096
        %v4161 = vpack.c.bf16 %v4105, %v4101
        %v4162 = vpack.c.bf16 %v4106, %v4102
        %v4163 = vpack.c.bf16 %v4107, %v4103
        %v4164 = vpack.c.bf16 %v4108, %v4104
        %v4165 = vpack.c.bf16 %v4113, %v4109
        %v4166 = vpack.c.bf16 %v4114, %v4110
        %v4167 = vpack.c.bf16 %v4115, %v4111
        %v4168 = vpack.c.bf16 %v4116, %v4112
        %v4169 = vpack.c.bf16 %v4121, %v4117
        %v4170 = vpack.c.bf16 %v4122, %v4118
        %v4171 = vpack.c.bf16 %v4123, %v4119
        %v4172 = vpack.c.bf16 %v4124, %v4120
        %v4173 = vpack.c.bf16 %v4129, %v4125
        %v4174 = vpack.c.bf16 %v4130, %v4126
        %v4175 = vpack.c.bf16 %v4131, %v4127
        %v4176 = vpack.c.bf16 %v4132, %v4128
        %v4177 = vpack.c.bf16 %v4137, %v4133
        %v4178 = vpack.c.bf16 %v4138, %v4134
        %v4179 = vpack.c.bf16 %v4139, %v4135
        %v4180 = vpack.c.bf16 %v4140, %v4136
        %v4181 = vpack.c.bf16 %v4145, %v4141
        %v4182 = vpack.c.bf16 %v4146, %v4142
        %v4183 = vpack.c.bf16 %v4147, %v4143
        %v4184 = vpack.c.bf16 %v4148, %v4144
        %v4185 = vpack.c.bf16 %v4153, %v4149
        %v4186 = vpack.c.bf16 %v4154, %v4150
        %v4187 = vpack.c.bf16 %v4155, %v4151
        %v4188 = vpack.c.bf16 %v4156, %v4152
        %v4189 = vld [vmem:[%s22] sm:$0xf]
        %v4190 = vld [vmem:[%s22 + $0x4] sm:$0xf]
        %v4191 = vld [vmem:[%s22 + $0x8] sm:$0xf]
        %v4192 = vld [vmem:[%s22 + $0xc] sm:$0xf]
        %v4193 = vld [vmem:[%s22 + $0x10] sm:$0xf]
        %v4194 = vld [vmem:[%s22 + $0x14] sm:$0xf]
        %v4195 = vld [vmem:[%s22 + $0x18] sm:$0xf]
        %v4196 = vld [vmem:[%s22 + $0x1c] sm:$0xf]
        %v4197 = vld [vmem:[%s22 + $0x20] sm:$0xf]
        %v4198 = vld [vmem:[%s22 + $0x24] sm:$0xf]
        %v4199 = vld [vmem:[%s22 + $0x28] sm:$0xf]
        %v4200 = vld [vmem:[%s22 + $0x2c] sm:$0xf]
        %v4201 = vld [vmem:[%s22 + $0x30] sm:$0xf]
        %v4202 = vld [vmem:[%s22 + $0x34] sm:$0xf]
        %v4203 = vld [vmem:[%s22 + $0x38] sm:$0xf]
        %v4204 = vld [vmem:[%s22 + $0x3c] sm:$0xf]
        %v4205 = vld [vmem:[%s22 + $0x40] sm:$0xf]
        %v4206 = vld [vmem:[%s22 + $0x44] sm:$0xf]
        %v4207 = vld [vmem:[%s22 + $0x48] sm:$0xf]
        %v4208 = vld [vmem:[%s22 + $0x4c] sm:$0xf]
        %v4209 = vld [vmem:[%s22 + $0x50] sm:$0xf]
        %v4210 = vld [vmem:[%s22 + $0x54] sm:$0xf]
        %v4211 = vld [vmem:[%s22 + $0x58] sm:$0xf]
        %v4212 = vld [vmem:[%s22 + $0x5c] sm:$0xf]
        %v4213 = vld [vmem:[%s22 + $0x60] sm:$0xf]
        %v4214 = vld [vmem:[%s22 + $0x64] sm:$0xf]
        %v4215 = vld [vmem:[%s22 + $0x68] sm:$0xf]
        %v4216 = vld [vmem:[%s22 + $0x6c] sm:$0xf]
        %v4217 = vld [vmem:[%s22 + $0x70] sm:$0xf]
        %v4218 = vld [vmem:[%s22 + $0x74] sm:$0xf]
        %v4219 = vld [vmem:[%s22 + $0x78] sm:$0xf]
        %v4220 = vld [vmem:[%s22 + $0x7c] sm:$0xf]
        %v4221 = vld [vmem:[%s22 + $0x80] sm:$0xf]
        %v4222 = vld [vmem:[%s22 + $0x84] sm:$0xf]
        %v4223 = vld [vmem:[%s22 + $0x88] sm:$0xf]
        %v4224 = vld [vmem:[%s22 + $0x8c] sm:$0xf]
        %v4225 = vld [vmem:[%s22 + $0x90] sm:$0xf]
        %v4226 = vld [vmem:[%s22 + $0x94] sm:$0xf]
        %v4227 = vld [vmem:[%s22 + $0x98] sm:$0xf]
        %v4228 = vld [vmem:[%s22 + $0x9c] sm:$0xf]
        %v4229 = vld [vmem:[%s22 + $0xa0] sm:$0xf]
        %v4230 = vld [vmem:[%s22 + $0xa4] sm:$0xf]
        %v4231 = vld [vmem:[%s22 + $0xa8] sm:$0xf]
        %v4232 = vld [vmem:[%s22 + $0xac] sm:$0xf]
        %v4233 = vld [vmem:[%s22 + $0xb0] sm:$0xf]
        %v4234 = vld [vmem:[%s22 + $0xb4] sm:$0xf]
        %v4235 = vld [vmem:[%s22 + $0xb8] sm:$0xf]
        %v4236 = vld [vmem:[%s22 + $0xbc] sm:$0xf]
        %v4237 = vld [vmem:[%s22 + $0xc0] sm:$0xf]
        %v4238 = vld [vmem:[%s22 + $0xc4] sm:$0xf]
        %v4239 = vld [vmem:[%s22 + $0xc8] sm:$0xf]
        %v4240 = vld [vmem:[%s22 + $0xcc] sm:$0xf]
        %v4241 = vld [vmem:[%s22 + $0xd0] sm:$0xf]
        %v4242 = vld [vmem:[%s22 + $0xd4] sm:$0xf]
        %v4243 = vld [vmem:[%s22 + $0xd8] sm:$0xf]
        %v4244 = vld [vmem:[%s22 + $0xdc] sm:$0xf]
        %v4245 = vld [vmem:[%s22 + $0xe0] sm:$0xf]
        %v4246 = vld [vmem:[%s22 + $0xe4] sm:$0xf]
        %v4247 = vld [vmem:[%s22 + $0xe8] sm:$0xf]
        %v4248 = vld [vmem:[%s22 + $0xec] sm:$0xf]
        %v4249 = vld [vmem:[%s22 + $0xf0] sm:$0xf]
        %v4250 = vld [vmem:[%s22 + $0xf4] sm:$0xf]
        %v4251 = vld [vmem:[%s22 + $0xf8] sm:$0xf]
        %v4252 = vld [vmem:[%s22 + $0xfc] sm:$0xf]
        %v4253 = vld [vmem:[%s23] sm:$0x1]
        %v4255 = vlaneseq
        %v4256 = vshrl.u32 %v4255, 7
        %v4257 = vsub.s32 0, %v4256
        %v4258 = vrot.slane %v4253, %v4257
        %v4324 = vunpack.c.l.b16 %v4189
        %v4325 = vunpack.c.l.b16 %v4190
        %v4326 = vunpack.c.l.b16 %v4191
        %v4327 = vunpack.c.l.b16 %v4192
        %v4328 = vunpack.c.l.b16 %v4193
        %v4329 = vunpack.c.l.b16 %v4194
        %v4330 = vunpack.c.l.b16 %v4195
        %v4331 = vunpack.c.l.b16 %v4196
        %v4332 = vunpack.c.l.b16 %v4197
        %v4333 = vunpack.c.l.b16 %v4198
        %v4334 = vunpack.c.l.b16 %v4199
        %v4335 = vunpack.c.l.b16 %v4200
        %v4336 = vunpack.c.l.b16 %v4201
        %v4337 = vunpack.c.l.b16 %v4202
        %v4338 = vunpack.c.l.b16 %v4203
        %v4339 = vunpack.c.l.b16 %v4204
        %v4340 = vunpack.c.l.b16 %v4205
        %v4341 = vunpack.c.l.b16 %v4206
        %v4342 = vunpack.c.l.b16 %v4207
        %v4343 = vunpack.c.l.b16 %v4208
        %v4344 = vunpack.c.l.b16 %v4209
        %v4345 = vunpack.c.l.b16 %v4210
        %v4346 = vunpack.c.l.b16 %v4211
        %v4347 = vunpack.c.l.b16 %v4212
        %v4348 = vunpack.c.l.b16 %v4213
        %v4349 = vunpack.c.l.b16 %v4214
        %v4350 = vunpack.c.l.b16 %v4215
        %v4351 = vunpack.c.l.b16 %v4216
        %v4352 = vunpack.c.l.b16 %v4217
        %v4353 = vunpack.c.l.b16 %v4218
        %v4354 = vunpack.c.l.b16 %v4219
        %v4355 = vunpack.c.l.b16 %v4220
        %v4356 = vunpack.c.l.b16 %v4221
        %v4357 = vunpack.c.l.b16 %v4222
        %v4358 = vunpack.c.l.b16 %v4223
        %v4359 = vunpack.c.l.b16 %v4224
        %v4360 = vunpack.c.l.b16 %v4225
        %v4361 = vunpack.c.l.b16 %v4226
        %v4362 = vunpack.c.l.b16 %v4227
        %v4363 = vunpack.c.l.b16 %v4228
        %v4364 = vunpack.c.l.b16 %v4229
        %v4365 = vunpack.c.l.b16 %v4230
        %v4366 = vunpack.c.l.b16 %v4231
        %v4367 = vunpack.c.l.b16 %v4232
        %v4368 = vunpack.c.l.b16 %v4233
        %v4369 = vunpack.c.l.b16 %v4234
        %v4370 = vunpack.c.l.b16 %v4235
        %v4371 = vunpack.c.l.b16 %v4236
        %v4372 = vunpack.c.l.b16 %v4237
        %v4373 = vunpack.c.l.b16 %v4238
        %v4374 = vunpack.c.l.b16 %v4239
        %v4375 = vunpack.c.l.b16 %v4240
        %v4376 = vunpack.c.l.b16 %v4241
        %v4377 = vunpack.c.l.b16 %v4242
        %v4378 = vunpack.c.l.b16 %v4243
        %v4379 = vunpack.c.l.b16 %v4244
        %v4380 = vunpack.c.l.b16 %v4245
        %v4381 = vunpack.c.l.b16 %v4246
        %v4382 = vunpack.c.l.b16 %v4247
        %v4383 = vunpack.c.l.b16 %v4248
        %v4384 = vunpack.c.l.b16 %v4249
        %v4385 = vunpack.c.l.b16 %v4250
        %v4386 = vunpack.c.l.b16 %v4251
        %v4387 = vunpack.c.l.b16 %v4252
        %v4388 = vpack.c.b16 %v4325, %v4324
        %v4389 = vpack.c.b16 %v4327, %v4326
        %v4390 = vpack.c.b16 %v4329, %v4328
        %v4391 = vpack.c.b16 %v4331, %v4330
        %v4392 = vpack.c.b16 %v4333, %v4332
        %v4393 = vpack.c.b16 %v4335, %v4334
        %v4394 = vpack.c.b16 %v4337, %v4336
        %v4395 = vpack.c.b16 %v4339, %v4338
        %v4396 = vpack.c.b16 %v4341, %v4340
        %v4397 = vpack.c.b16 %v4343, %v4342
        %v4398 = vpack.c.b16 %v4345, %v4344
        %v4399 = vpack.c.b16 %v4347, %v4346
        %v4400 = vpack.c.b16 %v4349, %v4348
        %v4401 = vpack.c.b16 %v4351, %v4350
        %v4402 = vpack.c.b16 %v4353, %v4352
        %v4403 = vpack.c.b16 %v4355, %v4354
        %v4404 = vpack.c.b16 %v4357, %v4356
        %v4405 = vpack.c.b16 %v4359, %v4358
        %v4406 = vpack.c.b16 %v4361, %v4360
        %v4407 = vpack.c.b16 %v4363, %v4362
        %v4408 = vpack.c.b16 %v4365, %v4364
        %v4409 = vpack.c.b16 %v4367, %v4366
        %v4410 = vpack.c.b16 %v4369, %v4368
        %v4411 = vpack.c.b16 %v4371, %v4370
        %v4412 = vpack.c.b16 %v4373, %v4372
        %v4413 = vpack.c.b16 %v4375, %v4374
        %v4414 = vpack.c.b16 %v4377, %v4376
        %v4415 = vpack.c.b16 %v4379, %v4378
        %v4416 = vpack.c.b16 %v4381, %v4380
        %v4417 = vpack.c.b16 %v4383, %v4382
        %v4418 = vpack.c.b16 %v4385, %v4384
        %v4419 = vpack.c.b16 %v4387, %v4386
        %4452 = vmatprep.subr.bf16.mxu0 0
        %4453 = vmatpush1.bf16.msra.mxu0 %v4388
        %4454 = vmatprep.subr.bf16.mxu0 0
        %4455 = vmatpush1.bf16.msra.mxu0 %v4389
        %4456 = vmatprep.subr.bf16.mxu0 0
        %4457 = vmatpush1.bf16.msra.mxu0 %v4390
        %4458 = vmatprep.subr.bf16.mxu0 0
        %4459 = vmatpush1.bf16.msra.mxu0 %v4391
        %4460 = vmatprep.subr.bf16.mxu0 0
        %4461 = vmatpush1.bf16.msra.mxu0 %v4392
        %4462 = vmatprep.subr.bf16.mxu0 0
        %4463 = vmatpush1.bf16.msra.mxu0 %v4393
        %4464 = vmatprep.subr.bf16.mxu0 0
        %4465 = vmatpush1.bf16.msra.mxu0 %v4394
        %4466 = vmatprep.subr.bf16.mxu0 0
        %4467 = vmatpush1.bf16.msra.mxu0 %v4395
        %4468 = vmatprep.subr.bf16.mxu0 0
        %4469 = vmatpush1.bf16.msra.mxu0 %v4396
        %4470 = vmatprep.subr.bf16.mxu0 0
        %4471 = vmatpush1.bf16.msra.mxu0 %v4397
        %4472 = vmatprep.subr.bf16.mxu0 0
        %4473 = vmatpush1.bf16.msra.mxu0 %v4398
        %4474 = vmatprep.subr.bf16.mxu0 0
        %4475 = vmatpush1.bf16.msra.mxu0 %v4399
        %4476 = vmatprep.subr.bf16.mxu0 0
        %4477 = vmatpush1.bf16.msra.mxu0 %v4400
        %4478 = vmatprep.subr.bf16.mxu0 0
        %4479 = vmatpush1.bf16.msra.mxu0 %v4401
        %4480 = vmatprep.subr.bf16.mxu0 0
        %4481 = vmatpush1.bf16.msra.mxu0 %v4402
        %4482 = vmatprep.subr.bf16.mxu0 0
        %4483 = vmatpush1.bf16.msra.mxu0 %v4403
        %4484 = vmatprep.mubr.bf16.mxu0 %v4158
        %4485 = vmatmul.mubr.bf16.gmra.mrb[0].mxu0 %v4157
        %v4486 = vpop.f32.mrb[0].mxu0
        %v4487 = vadd.f32 %v4258, %v4486
        %v4488 = vpop.f32.mrb[0].mxu0
        %v4489 = vpop.f32.mrb[0].mxu0
        %v4490 = vadd.f32 %v4258, %v4489
        %v4491 = vpop.f32.mrb[0].mxu0
        %4492 = vmatprep.mubr.bf16.mxu0 %v4162
        %4493 = vmatmul.mubr.bf16.gmra.mrb[0].mxu0 %v4161
        %v4494 = vpop.f32.mrb[0].mxu0
        %v4495 = vadd.f32 %v4258, %v4494
        %v4496 = vpop.f32.mrb[0].mxu0
        %v4497 = vpop.f32.mrb[0].mxu0
        %v4498 = vadd.f32 %v4258, %v4497
        %v4499 = vpop.f32.mrb[0].mxu0
        %4500 = vmatprep.mubr.bf16.mxu0 %v4166
        %4501 = vmatmul.mubr.bf16.gmra.mrb[0].mxu0 %v4165
        %v4502 = vpop.f32.mrb[0].mxu0
        %v4503 = vadd.f32 %v4258, %v4502
        %v4504 = vpop.f32.mrb[0].mxu0
        %v4505 = vpop.f32.mrb[0].mxu0
        %v4506 = vadd.f32 %v4258, %v4505
        %v4507 = vpop.f32.mrb[0].mxu0
        %4508 = vmatprep.mubr.bf16.mxu0 %v4170
        %4509 = vmatmul.mubr.bf16.gmra.mrb[0].mxu0 %v4169
        %v4510 = vpop.f32.mrb[0].mxu0
        %v4511 = vadd.f32 %v4258, %v4510
        %v4512 = vpop.f32.mrb[0].mxu0
        %v4513 = vpop.f32.mrb[0].mxu0
        %v4514 = vadd.f32 %v4258, %v4513
        %v4515 = vpop.f32.mrb[0].mxu0
        %4516 = vmatprep.mubr.bf16.mxu0 %v4174
        %4517 = vmatmul.mubr.bf16.gmra.mrb[0].mxu0 %v4173
        %v4518 = vpop.f32.mrb[0].mxu0
        %v4519 = vadd.f32 %v4258, %v4518
        %v4520 = vpop.f32.mrb[0].mxu0
        %v4521 = vpop.f32.mrb[0].mxu0
        %v4522 = vadd.f32 %v4258, %v4521
        %v4523 = vpop.f32.mrb[0].mxu0
        %4524 = vmatprep.mubr.bf16.mxu0 %v4178
        %4525 = vmatmul.mubr.bf16.gmra.mrb[0].mxu0 %v4177
        %v4526 = vpop.f32.mrb[0].mxu0
        %v4527 = vadd.f32 %v4258, %v4526
        %v4528 = vpop.f32.mrb[0].mxu0
        %v4529 = vpop.f32.mrb[0].mxu0
        %v4530 = vadd.f32 %v4258, %v4529
        %v4531 = vpop.f32.mrb[0].mxu0
        %4532 = vmatprep.mubr.bf16.mxu0 %v4182
        %4533 = vmatmul.mubr.bf16.gmra.mrb[0].mxu0 %v4181
        %v4534 = vpop.f32.mrb[0].mxu0
        %v4535 = vadd.f32 %v4258, %v4534
        %v4536 = vpop.f32.mrb[0].mxu0
        %v4537 = vpop.f32.mrb[0].mxu0
        %v4538 = vadd.f32 %v4258, %v4537
        %v4539 = vpop.f32.mrb[0].mxu0
        %4540 = vmatprep.mubr.bf16.mxu0 %v4186
        %4541 = vmatmul.mubr.bf16.gmra.mrb[0].mxu0 %v4185
        %v4542 = vpop.f32.mrb[0].mxu0
        %v4543 = vadd.f32 %v4258, %v4542
        %v4544 = vpop.f32.mrb[0].mxu0
        %v4545 = vpop.f32.mrb[0].mxu0
        %v4546 = vadd.f32 %v4258, %v4545
        %v4547 = vpop.f32.mrb[0].mxu0
        %4548 = vdwg.mxu0
        %4549 = vmatprep.subr.bf16.mxu0 0
        %4550 = vmatpush1.bf16.msra.mxu0 %v4404
        %4551 = vmatprep.subr.bf16.mxu0 0
        %4552 = vmatpush1.bf16.msra.mxu0 %v4405
        %4553 = vmatprep.subr.bf16.mxu0 0
        %4554 = vmatpush1.bf16.msra.mxu0 %v4406
        %4555 = vmatprep.subr.bf16.mxu0 0
        %4556 = vmatpush1.bf16.msra.mxu0 %v4407
        %4557 = vmatprep.subr.bf16.mxu0 0
        %4558 = vmatpush1.bf16.msra.mxu0 %v4408
        %4559 = vmatprep.subr.bf16.mxu0 0
        %4560 = vmatpush1.bf16.msra.mxu0 %v4409
        %4561 = vmatprep.subr.bf16.mxu0 0
        %4562 = vmatpush1.bf16.msra.mxu0 %v4410
        %4563 = vmatprep.subr.bf16.mxu0 0
        %4564 = vmatpush1.bf16.msra.mxu0 %v4411
        %4565 = vmatprep.subr.bf16.mxu0 0
        %4566 = vmatpush1.bf16.msra.mxu0 %v4412
        %4567 = vmatprep.subr.bf16.mxu0 0
        %4568 = vmatpush1.bf16.msra.mxu0 %v4413
        %4569 = vmatprep.subr.bf16.mxu0 0
        %4570 = vmatpush1.bf16.msra.mxu0 %v4414
        %4571 = vmatprep.subr.bf16.mxu0 0
        %4572 = vmatpush1.bf16.msra.mxu0 %v4415
        %4573 = vmatprep.subr.bf16.mxu0 0
        %4574 = vmatpush1.bf16.msra.mxu0 %v4416
        %4575 = vmatprep.subr.bf16.mxu0 0
        %4576 = vmatpush1.bf16.msra.mxu0 %v4417
        %4577 = vmatprep.subr.bf16.mxu0 0
        %4578 = vmatpush1.bf16.msra.mxu0 %v4418
        %4579 = vmatprep.subr.bf16.mxu0 0
        %4580 = vmatpush1.bf16.msra.mxu0 %v4419
        %4581 = vmatprep.mubr.bf16.mxu0 %v4160
        %4582 = vmatmul.mubr.bf16.gmra.mrb[0].mxu0 %v4159
        %v4583 = vpop.f32.mrb[0].mxu0
        %v4584 = vadd.f32 %v4487, %v4583
        %v4585 = vpop.f32.mrb[0].mxu0
        %v4586 = vpop.f32.mrb[0].mxu0
        %v4587 = vadd.f32 %v4490, %v4586
        %v4588 = vpop.f32.mrb[0].mxu0
        %4589 = vmatprep.mubr.bf16.mxu0 %v4164
        %4590 = vmatmul.mubr.bf16.gmra.mrb[0].mxu0 %v4163
        %v4591 = vpop.f32.mrb[0].mxu0
        %v4592 = vadd.f32 %v4495, %v4591
        %v4593 = vpop.f32.mrb[0].mxu0
        %v4594 = vpop.f32.mrb[0].mxu0
        %v4595 = vadd.f32 %v4498, %v4594
        %v4596 = vpop.f32.mrb[0].mxu0
        %4597 = vmatprep.mubr.bf16.mxu0 %v4168
        %4598 = vmatmul.mubr.bf16.gmra.mrb[0].mxu0 %v4167
        %v4599 = vpop.f32.mrb[0].mxu0
        %v4600 = vadd.f32 %v4503, %v4599
        %v4601 = vpop.f32.mrb[0].mxu0
        %v4602 = vpop.f32.mrb[0].mxu0
        %v4603 = vadd.f32 %v4506, %v4602
        %v4604 = vpop.f32.mrb[0].mxu0
        %4605 = vmatprep.mubr.bf16.mxu0 %v4172
        %4606 = vmatmul.mubr.bf16.gmra.mrb[0].mxu0 %v4171
        %v4607 = vpop.f32.mrb[0].mxu0
        %v4608 = vadd.f32 %v4511, %v4607
        %v4609 = vpop.f32.mrb[0].mxu0
        %v4610 = vpop.f32.mrb[0].mxu0
        %v4611 = vadd.f32 %v4514, %v4610
        %v4612 = vpop.f32.mrb[0].mxu0
        %4613 = vmatprep.mubr.bf16.mxu0 %v4176
        %4614 = vmatmul.mubr.bf16.gmra.mrb[0].mxu0 %v4175
        %v4615 = vpop.f32.mrb[0].mxu0
        %v4616 = vadd.f32 %v4519, %v4615
        %v4617 = vpop.f32.mrb[0].mxu0
        %v4618 = vpop.f32.mrb[0].mxu0
        %v4619 = vadd.f32 %v4522, %v4618
        %v4620 = vpop.f32.mrb[0].mxu0
        %4621 = vmatprep.mubr.bf16.mxu0 %v4180
        %4622 = vmatmul.mubr.bf16.gmra.mrb[0].mxu0 %v4179
        %v4623 = vpop.f32.mrb[0].mxu0
        %v4624 = vadd.f32 %v4527, %v4623
        %v4625 = vpop.f32.mrb[0].mxu0
        %v4626 = vpop.f32.mrb[0].mxu0
        %v4627 = vadd.f32 %v4530, %v4626
        %v4628 = vpop.f32.mrb[0].mxu0
        %4629 = vmatprep.mubr.bf16.mxu0 %v4184
        %4630 = vmatmul.mubr.bf16.gmra.mrb[0].mxu0 %v4183
        %v4631 = vpop.f32.mrb[0].mxu0
        %v4632 = vadd.f32 %v4535, %v4631
        %v4633 = vpop.f32.mrb[0].mxu0
        %v4634 = vpop.f32.mrb[0].mxu0
        %v4635 = vadd.f32 %v4538, %v4634
        %v4636 = vpop.f32.mrb[0].mxu0
        %4637 = vmatprep.mubr.bf16.mxu0 %v4188
        %4638 = vmatmul.mubr.bf16.gmra.mrb[0].mxu0 %v4187
        %v4639 = vpop.f32.mrb[0].mxu0
        %v4640 = vadd.f32 %v4543, %v4639
        %v4641 = vpop.f32.mrb[0].mxu0
        %v4642 = vpop.f32.mrb[0].mxu0
        %v4643 = vadd.f32 %v4546, %v4642
        %v4644 = vpop.f32.mrb[0].mxu0
        %4645 = vdwg.mxu0
        %v4646 = vld [vmem:[%s24] sm:$0x1]
        %v4648 = vlaneseq
        %v4649 = vshrl.u32 %v4648, 7
        %v4650 = vsub.s32 0, %v4649
        %v4651 = vrot.slane %v4646, %v4650
        %v4653 = vmul.f32 %v4651, %v4584
        %v4654 = vmul.f32 %v4651, %v4587
        %v4655 = vmul.f32 %v4651, %v4592
        %v4656 = vmul.f32 %v4651, %v4595
        %v4657 = vmul.f32 %v4651, %v4600
        %v4658 = vmul.f32 %v4651, %v4603
        %v4659 = vmul.f32 %v4651, %v4608
        %v4660 = vmul.f32 %v4651, %v4611
        %v4661 = vmul.f32 %v4651, %v4616
        %v4662 = vmul.f32 %v4651, %v4619
        %v4663 = vmul.f32 %v4651, %v4624
        %v4664 = vmul.f32 %v4651, %v4627
        %v4665 = vmul.f32 %v4651, %v4632
        %v4666 = vmul.f32 %v4651, %v4635
        %v4667 = vmul.f32 %v4651, %v4640
        %v4668 = vmul.f32 %v4651, %v4643
        %v4669 = vadd.f32 %v3071, %v4653
        %v4670 = vadd.f32 %v3072, %v4654
        %v4671 = vadd.f32 %v3073, %v4655
        %v4672 = vadd.f32 %v3074, %v4656
        %v4673 = vadd.f32 %v3075, %v4657
        %v4674 = vadd.f32 %v3076, %v4658
        %v4675 = vadd.f32 %v3077, %v4659
        %v4676 = vadd.f32 %v3078, %v4660
        %v4677 = vadd.f32 %v3079, %v4661
        %v4678 = vadd.f32 %v3080, %v4662
        %v4679 = vadd.f32 %v3081, %v4663
        %v4680 = vadd.f32 %v3082, %v4664
        %v4681 = vadd.f32 %v3083, %v4665
        %v4682 = vadd.f32 %v3084, %v4666
        %v4683 = vadd.f32 %v3085, %v4667
        %v4684 = vadd.f32 %v3086, %v4668
        %4685 = vst [vmem:[%s760] sm:$0xff] %v4669
        %4686 = vst [vmem:[%s760 + $0x8] sm:$0xff] %v4670
        %4687 = vst [vmem:[%s760 + $0x10] sm:$0xff] %v4671
        %4688 = vst [vmem:[%s760 + $0x18] sm:$0xff] %v4672
        %4689 = vst [vmem:[%s760 + $0x20] sm:$0xff] %v4673
        %4690 = vst [vmem:[%s760 + $0x28] sm:$0xff] %v4674
        %4691 = vst [vmem:[%s760 + $0x30] sm:$0xff] %v4675
        %4692 = vst [vmem:[%s760 + $0x38] sm:$0xff] %v4676
        %4693 = vst [vmem:[%s760 + $0x40] sm:$0xff] %v4677
        %4694 = vst [vmem:[%s760 + $0x48] sm:$0xff] %v4678
        %4695 = vst [vmem:[%s760 + $0x50] sm:$0xff] %v4679
        %4696 = vst [vmem:[%s760 + $0x58] sm:$0xff] %v4680
        %4697 = vst [vmem:[%s760 + $0x60] sm:$0xff] %v4681
        %4698 = vst [vmem:[%s760 + $0x68] sm:$0xff] %v4682
        %4699 = vst [vmem:[%s760 + $0x70] sm:$0xff] %v4683
        %4700 = vst [vmem:[%s760 + $0x78] sm:$0xff] %v4684
        %s4701 = sand.u32 %s577, 1
        %s4702 = scalar_lea.sflag [#allocation3], %s4701
        %s4703 = sand.u32 %s577, 1
        %s4704 = smul.addr %s4703, 128
        %s4705 = scalar_lea.vmem [#allocation2], %s4704
        // Predicated region
        $region121: #{tpu_custom_call.1} parent=119 // pred_check
          %p4706 = pneg %p587
        $region122: #{tpu_custom_call.1} parent=119 // pred_check_branch
          %4708 = sbr.rel (%p4706) target = $region124
        $region123: #{tpu_custom_call.1} parent=119 // pred_region
          %s4709 = smul.u32 2, %s39
          %s4711 = ssub.s32 2048, 2048
          %4712 = vsyncadd %s4702, %s4711
          %s4713 = smul.addr %s4709, 8
          %s4714 = smul.addr %s4713, 128
          %s4715 = scalar_lea.hbm %s25, %s4714
          %s4716 = sshll.u32 %s4705, 4
          %s4717 = int_to_ptr.vmem [resolvable:$true] %s4716
          %4722 = dma.vmem_to_hbm [thread:$0]  %s4717, 2048, %s4715, %s4702, 128, 128, 8
        $region124: #{tpu_custom_call.1} parent=119 // pred_fallthru
          _
      $region120: #{tpu_custom_call.1} parent=5 // pred_fallthru
        _
      %p4723 = scmp.le.s32.totalorder 2, %s34
      // Predicated region
      $region125: #{tpu_custom_call.1} parent=5 // pred_check
        %p4724 = pneg %p4723
      $region126: #{tpu_custom_call.1} parent=5 // pred_check_branch
        %4726 = sbr.rel (%p4724) target = $region128
      $region127: #{tpu_custom_call.1} parent=5 // pred_region
        %s4727 = ssub.s32 %s34, 2
        // Predicated region
        $region129: #{tpu_custom_call.1} parent=127 // pred_check
          %p4728 = pneg %p593
        $region130: #{tpu_custom_call.1} parent=127 // pred_check_branch
          %4730 = sbr.rel (%p4728) target = $region132
        $region131: #{tpu_custom_call.1} parent=127 // pred_region
          %s4731 = sand.u32 %s578, 1
          %s4732 = scalar_lea.sflag [#allocation3], %s4731
          %s4733 = sand.u32 %s578, 1
          %s4734 = smul.addr %s4733, 128
          %s4735 = scalar_lea.vmem [#allocation2], %s4734
          %4736 = dma.done %s4732, 2048
        $region132: #{tpu_custom_call.1} parent=127 // pred_fallthru
          _
      $region128: #{tpu_custom_call.1} parent=5 // pred_fallthru
        _
    $region6: #{tpu_custom_call.1} parent=1 // loop_footer
      %s38 = sadd.s32 1, %s34
    $region7: #{tpu_custom_call.1} parent=1 // loop_footer_branch
      %33 = sbr.rel target = $region3
    $region8: #{tpu_custom_call.1} parent=1 // loop_exit
      _
    %4737 = vsyncpa [#allocation3], 1
    %s4738 = scalar_lea.sflag [#allocation3], 1
    %4739 = vsyncpa %s4738, 1

</llo_original>
